<compile_context>
chip_gen: v5e
topology: v5e:2x2
jax: 0.10.0
libtpu: 0.0.40
codegen_flags: <defaults>
</compile_context>

<pallas_src>
import functools

import jax
import jax.numpy as jnp
import numpy as np
from jax.experimental import pallas as pl
from jax.experimental.pallas import tpu as pltpu


# --------------------------------------------------------------------------- kernel
def _fused_critic_kernel(s_ref, pos_ref, x_ref, p_ref, o_ref, *, layout, cfg):
    """One critic per grid step.

    s_ref   : (9, B*P, B*P)  block-diagonal 3x3 shift+mask matrices (shared)
    pos_ref : (B*P, 2)       batch-tiled positional encoding (shared)
    x_ref   : (B*P, Cin)     batch-folded NHWC input slab (shared)
    p_ref   : (R, 128)       this critic's packed parameters (leading axis squeezed)
    o_ref   : (B, 1)         this critic's value output (leading axis squeezed)
    """
    P, F, K = cfg["P"], cfg["F"], cfg["K"]
    L1, L2 = cfg["L1"], cfg["L2"]
    BP = x_ref.shape[0]
    B = BP // P

    def gp(name):
        off, r, c = layout[name]                      # static Python ints
        return p_ref[off:off + r, 0:c]

    def conv3x3_relu(a, w_name, b_name):
        # a: (B*P, cin) -> (B*P, K).
        # One wide dot (x @ [W_0|...|W_8]) + 9 accumulating block-diag shift dots.
        w = gp(w_name)                                # (cin, 9K)
        bias = gp(b_name)                             # (1, K)
        y = jnp.dot(a, w, preferred_element_type=jnp.float32)      # (B*P, 9K)
        out = jnp.zeros((BP, K), jnp.float32) + bias
        for k in range(9):
            out = out + jnp.dot(s_ref[k], y[:, k * K:(k + 1) * K],
                                preferred_element_type=jnp.float32)
        return jnp.maximum(out, 0.0)

    def residual(x, pre):
        # x + W2 @ relu(W1 @ LayerNorm(x)); LN over last axis, eps = 1e-5.
        gamma, beta = gp(pre + "_g"), gp(pre + "_be")
        w1, b1 = gp(pre + "_w1"), gp(pre + "_b1")
        w2, b2 = gp(pre + "_w2"), gp(pre + "_b2")
        mu = jnp.mean(x, axis=-1, keepdims=True)
        var = jnp.mean((x - mu) ** 2, axis=-1, keepdims=True)
        xn = (x - mu) * jax.lax.rsqrt(var + 1e-5) * gamma + beta
        h = jnp.maximum(jnp.dot(xn, w1, preferred_element_type=jnp.float32) + b1, 0.0)
        return x + jnp.dot(h, w2, preferred_element_type=jnp.float32) + b2

    # ---- conv stack (whole batch at once) -----------------------------------
    x = x_ref[...].astype(jnp.float32)                 # (B*P, Cin)
    a = conv3x3_relu(x, "c1w", "c1b")                  # (B*P, K)
    a = conv3x3_relu(a, "c2w", "c2b")                  # (B*P, K)

    # ---- positional-encoding projection (no relu) ---------------------------
    h = (jnp.dot(a, gp("pwf"), preferred_element_type=jnp.float32)
         + jnp.dot(pos_ref[...], gp("pwp"), preferred_element_type=jnp.float32)
         + gp("pb"))                                   # (B*P, F)

    # ---- single layout change to pixel-wise layout (B*F, P) -----------------
    xt = jnp.concatenate(
        [jnp.transpose(h[b * P:(b + 1) * P, :]) for b in range(B)], axis=0)

    # ---- pixel-wise residual blocks (batch-folded) --------------------------
    for l in range(L1):
        xt = residual(xt, f"pr{l}")                    # (B*F, P)

    # ---- feature-wise max pool over pixels (no transpose back needed) -------
    z = jnp.max(xt.reshape(B, F, P), axis=-1)          # (B, F)

    # ---- feature-wise residual blocks ----------------------------------------
    for l in range(L2):
        z = residual(z, f"fr{l}")                      # (B, F)

    # ---- value head -----------------------------------------------------------
    v = jnp.sum(z * gp("lw"), axis=-1, keepdims=True) + gp("lb")   # (B, 1)
    o_ref[...] = v.astype(o_ref.dtype)


# --------------------------------------------------------------------------- constants
def _build_shift_matrices(H, W, B):
    """S[k] is the block-diagonal (B*P, B*P) 0/1 matrix realizing the k-th
    3x3 'same'-conv gather  (S_k @ x)[p] = x[shift_k(p)]  for every image in the batch."""
    P = H * W
    s = np.zeros((9, B * P, B * P), np.float32)
    k = 0
    for dy in (-1, 0, 1):
        for dx in (-1, 0, 1):
            for h in range(H):
                hh = h + dy
                if 0 <= hh < H:
                    for w in range(W):
                        ww = w + dx
                        if 0 <= ww < W:
                            for b in range(B):
                                s[k, b * P + h * W + w, b * P + hh * W + ww] = 1.0
            k += 1
    return jnp.asarray(s)


def _build_pos_encoding(H, W):
    xs = np.linspace(-1.0, 1.0, H, dtype=np.float32)
    ys = np.linspace(-1.0, 1.0, W, dtype=np.float32)
    xx = np.broadcast_to(xs[:, None], (H, W))
    yy = np.broadcast_to(ys[None, :], (H, W))
    return jnp.asarray(np.stack([xx, yy], axis=-1).reshape(H * W, 2))


# --------------------------------------------------------------------------- params
def _init_linear(key, fan_in, fan_out):
    kw, kb = jax.random.split(key)
    bound = 1.0 / np.sqrt(fan_in)
    w = jax.random.uniform(kw, (fan_in, fan_out), jnp.float32, -bound, bound)
    b = jax.random.uniform(kb, (1, fan_out), jnp.float32, -bound, bound)
    return w, b


def _init_residual(key, n_features, n_hidden):
    k1, k2 = jax.random.split(key)
    w1, b1 = _init_linear(k1, n_features, n_hidden)
    w2, b2 = _init_linear(k2, n_hidden, n_features)
    return {"gamma": jnp.ones((1, n_features), jnp.float32),
            "beta": jnp.zeros((1, n_features), jnp.float32),
            "w1": w1, "b1": b1, "w2": w2, "b2": b2}


def init_ohe_basic_critic(key, map_size, in_channels, n_kernels, n_features,
                          hidden_dim, n_control_modules, n_linears):
    P = map_size * map_size
    keys = jax.random.split(key, 4 + n_control_modules + n_linears)
    conv1_w, conv1_b = _init_linear(keys[0], 9 * in_channels, n_kernels)
    conv2_w, conv2_b = _init_linear(keys[1], 9 * n_kernels, n_kernels)
    proj_w, proj_b = _init_linear(keys[2], n_kernels + 2, n_features)
    lin_w, lin_b = _init_linear(keys[3], n_features, 1)
    pixel_res = [_init_residual(keys[4 + i], P, hidden_dim)
                 for i in range(n_control_modules)]
    feature_res = [_init_residual(keys[4 + n_control_modules + i], n_features, hidden_dim)
                   for i in range(n_linears)]
    return {"conv1_w": conv1_w, "conv1_b": conv1_b,
            "conv2_w": conv2_w, "conv2_b": conv2_b,
            "proj_w": proj_w, "proj_b": proj_b,
            "lin_w": lin_w, "lin_b": lin_b,
            "pixel_res": pixel_res, "feature_res": feature_res}


def _pack_critic_params(p, in_channels, n_kernels):
    """Pack one critic's params into a single (R, 128) f32 buffer + static layout dict.

    Row offsets are 8-aligned so every in-kernel slice is sublane-aligned.
    Conv weights are re-laid out as W_hcat = [W_0 | ... | W_8] (Cin, 9K).
    """
    K = n_kernels

    def hcat(w):                      # (9*cin, K) -> (cin, 9*K)
        cin = w.shape[0] // 9
        return jnp.reshape(jnp.transpose(jnp.reshape(w, (9, cin, K)), (1, 0, 2)),
                           (cin, 9 * K))

    entries = [
        ("c1w", hcat(p["conv1_w"])), ("c1b", p["conv1_b"]),
        ("c2w", hcat(p["conv2_w"])), ("c2b", p["conv2_b"]),
        ("pwf", p["proj_w"][:K]), ("pwp", p["proj_w"][K:]), ("pb", p["proj_b"]),
    ]
    for l, r in enumerate(p["pixel_res"]):
        entries += [(f"pr{l}_g", r["gamma"]), (f"pr{l}_be", r["beta"]),
                    (f"pr{l}_w1", r["w1"]), (f"pr{l}_b1", r["b1"]),
                    (f"pr{l}_w2", r["w2"]), (f"pr{l}_b2", r["b2"])]
    for l, r in enumerate(p["feature_res"]):
        entries += [(f"fr{l}_g", r["gamma"]), (f"fr{l}_be", r["beta"]),
                    (f"fr{l}_w1", r["w1"]), (f"fr{l}_b1", r["b1"]),
                    (f"fr{l}_w2", r["w2"]), (f"fr{l}_b2", r["b2"])]
    entries += [("lw", jnp.transpose(p["lin_w"])), ("lb", p["lin_b"])]

    layout, blocks, off = {}, [], 0
    for name, arr in entries:
        arr = jnp.asarray(arr, jnp.float32)
        r, c = arr.shape
        assert c <= 128, f"{name} too wide for the packed buffer"
        ra = -(-r // 8) * 8                            # 8-row alignment
        layout[name] = (off, r, c)
        blocks.append(jnp.zeros((ra, 128), jnp.float32).at[:r, :c].set(arr))
        off += ra
    packed = jnp.concatenate(blocks, axis=0)           # (R, 128), R multiple of 8
    return packed, layout


# --------------------------------------------------------------------------- module
class OheCritic:
    def __init__(self, key, map_size, twin=True, target=False, *, in_channels=4,
                 n_kernels=8, n_features=32, hidden_dim=16,
                 n_control_modules=2, n_linears=2):
        self.twin = twin
        self.target = target
        args = (map_size, in_channels, n_kernels, n_features,
                hidden_dim, n_control_modules, n_linears)
        if twin:
            k1, k2 = jax.random.split(key)
            plist = [init_ohe_basic_critic(k1, *args), init_ohe_basic_critic(k2, *args)]
        else:
            plist = [init_ohe_basic_critic(key, *args)]

        packs = [_pack_critic_params(p, in_channels, n_kernels) for p in plist]
        layout = packs[0][1]
        self.packed = jnp.stack([pk for pk, _ in packs], axis=0)   # (n_nets, R, 128)

        cfg = dict(P=map_size * map_size, F=n_features, K=n_kernels,
                   L1=n_control_modules, L2=n_linears)
        kernel = functools.partial(_fused_critic_kernel, layout=layout, cfg=cfg)

        def fwd(packed, state):
            B, C, H, W = state.shape
            x = jnp.transpose(state, (0, 2, 3, 1)).astype(jnp.float32).reshape(B * H * W, C)
            shift = _build_shift_matrices(H, W, B)                 # (9, B*P, B*P) const
            pos_t = jnp.tile(_build_pos_encoding(H, W), (B, 1))    # (B*P, 2) const
            n_nets, R, _ = packed.shape
            return pl.pallas_call(
                kernel,
                out_shape=jax.ShapeDtypeStruct((n_nets, B, 1), jnp.float32),
                grid=(n_nets,),
                in_specs=[
                    pl.BlockSpec(shift.shape, lambda t: (0, 0, 0)),   # shared, not re-DMA'd
                    pl.BlockSpec(pos_t.shape, lambda t: (0, 0)),
                    pl.BlockSpec(x.shape, lambda t: (0, 0)),
                    pl.BlockSpec((None, R, 128), lambda t: (t, 0, 0)),  # per-critic params
                ],
                out_specs=pl.BlockSpec((None, B, 1), lambda t: (t, 0, 0)),
                compiler_params=pltpu.CompilerParams(
                    dimension_semantics=("parallel",)),            # twin -> 2 TCs on v7x
            )(shift, pos_t, x, packed)

        self._fwd = jax.jit(fwd)

    def __call__(self, state):
        out = self._fwd(self.packed, state)            # (n_nets, B, 1)
        if self.twin:
            v1, v2 = out[0], out[1]
            if self.target:
                return jnp.minimum(v1, v2)
            return (v1, v2)
        return out[0]


# --------------------------------------------------------------------------- main
if __name__ == "__main__":
    key = jax.random.PRNGKey(0)
    k_state, k_net1, k_net2 = jax.random.split(key, 3)

    B, C, S = 2, 4, 8   # batch, one-hot channels, map_size
    idx = jax.random.randint(k_state, (B, S, S), 0, C)
    state = jnp.transpose(jax.nn.one_hot(idx, C, dtype=jnp.float32), (0, 3, 1, 2))  # (B,C,S,S)

    # twin critic returning the tuple (v1, v2)
    critic = OheCritic(k_net1, map_size=S, twin=True, target=False, in_channels=C)
    v1, v2 = critic(state)

    # twin target critic returning min(v1, v2)
    target_critic = OheCritic(k_net2, map_size=S, twin=True, target=True, in_channels=C)
    v_min = target_critic(state)

    jax.block_until_ready((v1, v2, v_min))
    assert v1.shape == (B, 1) and v2.shape == (B, 1) and v_min.shape == (B, 1)
    print("KERNEL_OK")
</pallas_src>

<mosaic_0001>
module attributes {stable_mosaic.version = 11 : i64} {
  func.func @_fused_critic_kernel(%arg0: i32, %arg1: memref<9x128x128xf32, #tpu.memory_space<vmem>>, %arg2: memref<128x2xf32, #tpu.memory_space<vmem>>, %arg3: memref<128x4xf32, #tpu.memory_space<vmem>>, %arg4: memref<1x456x128xf32, #tpu.memory_space<vmem>>, %arg5: memref<1x2x1xf32, #tpu.memory_space<vmem>>) attributes {dimension_semantics = [#tpu.dimension_semantics<parallel>], iteration_bounds = array<i64: 2>, scalar_prefetch = 0 : i64, scratch_operands = 0 : i64, tpu.core_type = #tpu.core_type<tc>, window_params = [{pipeline_mode = #tpu.pipeline_mode<synchronous>, transform_indices = @transform_0, window_bounds = array<i64: 9, 128, 128>}, {pipeline_mode = #tpu.pipeline_mode<synchronous>, transform_indices = @transform_1, window_bounds = array<i64: 128, 2>}, {pipeline_mode = #tpu.pipeline_mode<synchronous>, transform_indices = @transform_2, window_bounds = array<i64: 128, 4>}, {transform_indices = @transform_3, window_bounds = array<i64: 1, 456, 128>}, {transform_indices = @transform_4, window_bounds = array<i64: 1, 2, 1>}]} {
    %c0 = arith.constant 0 : index
    %c0_0 = arith.constant 0 : index
    %0 = vector.load %arg3[%c0, %c0_0] : memref<128x4xf32, #tpu.memory_space<vmem>>, vector<128x4xf32>
    %c0_1 = arith.constant 0 : index
    %c0_2 = arith.constant 0 : index
    %c0_3 = arith.constant 0 : index
    %1 = vector.load %arg4[%c0_1, %c0_2, %c0_3] : memref<1x456x128xf32, #tpu.memory_space<vmem>>, vector<1x4x72xf32>
    %2 = vector.shape_cast %1 : vector<1x4x72xf32> to vector<4x72xf32>
    %c0_4 = arith.constant 0 : index
    %c8 = arith.constant 8 : index
    %c0_5 = arith.constant 0 : index
    %3 = vector.load %arg4[%c0_4, %c8, %c0_5] : memref<1x456x128xf32, #tpu.memory_space<vmem>>, vector<1x1x8xf32>
    %4 = vector.shape_cast %3 : vector<1x1x8xf32> to vector<1x8xf32>
    %cst = arith.constant dense<0.000000e+00> : vector<128x72xf32>
    %5 = tpu.matmul %0, %2, %cst {dimension_numbers = #tpu.dot_dimension_numbers<[1], [0], [0], [1], [0, 0, 1, 1], [], []>} : vector<128x4xf32>, vector<4x72xf32>, vector<128x72xf32> -> vector<128x72xf32>
    %cst_6 = arith.constant 0.000000e+00 : f32
    %6 = vector.broadcast %cst_6 : f32 to vector<128x8xf32>
    %7 = vector.broadcast %4 : vector<1x8xf32> to vector<128x8xf32>
    %8 = arith.addf %6, %7 : vector<128x8xf32>
    %c0_7 = arith.constant 0 : index
    %c0_8 = arith.constant 0 : index
    %c0_9 = arith.constant 0 : index
    %9 = vector.load %arg1[%c0_7, %c0_8, %c0_9] : memref<9x128x128xf32, #tpu.memory_space<vmem>>, vector<1x128x128xf32>
    %10 = vector.shape_cast %9 : vector<1x128x128xf32> to vector<128x128xf32>
    %11 = vector.extract_strided_slice %5 {offsets = [0, 0], sizes = [128, 8], strides = [1, 1]} : vector<128x72xf32> to vector<128x8xf32>
    %cst_10 = arith.constant dense<0.000000e+00> : vector<128x8xf32>
    %12 = tpu.matmul %10, %11, %cst_10 {dimension_numbers = #tpu.dot_dimension_numbers<[1], [0], [0], [1], [0, 0, 1, 1], [], []>} : vector<128x128xf32>, vector<128x8xf32>, vector<128x8xf32> -> vector<128x8xf32>
    %13 = arith.addf %8, %12 : vector<128x8xf32>
    %c1 = arith.constant 1 : index
    %c0_11 = arith.constant 0 : index
    %c0_12 = arith.constant 0 : index
    %14 = vector.load %arg1[%c1, %c0_11, %c0_12] : memref<9x128x128xf32, #tpu.memory_space<vmem>>, vector<1x128x128xf32>
    %15 = vector.shape_cast %14 : vector<1x128x128xf32> to vector<128x128xf32>
    %16 = vector.extract_strided_slice %5 {offsets = [0, 8], sizes = [128, 8], strides = [1, 1]} : vector<128x72xf32> to vector<128x8xf32>
    %cst_13 = arith.constant dense<0.000000e+00> : vector<128x8xf32>
    %17 = tpu.matmul %15, %16, %cst_13 {dimension_numbers = #tpu.dot_dimension_numbers<[1], [0], [0], [1], [0, 0, 1, 1], [], []>} : vector<128x128xf32>, vector<128x8xf32>, vector<128x8xf32> -> vector<128x8xf32>
    %18 = arith.addf %13, %17 : vector<128x8xf32>
    %c2 = arith.constant 2 : index
    %c0_14 = arith.constant 0 : index
    %c0_15 = arith.constant 0 : index
    %19 = vector.load %arg1[%c2, %c0_14, %c0_15] : memref<9x128x128xf32, #tpu.memory_space<vmem>>, vector<1x128x128xf32>
    %20 = vector.shape_cast %19 : vector<1x128x128xf32> to vector<128x128xf32>
    %21 = vector.extract_strided_slice %5 {offsets = [0, 16], sizes = [128, 8], strides = [1, 1]} : vector<128x72xf32> to vector<128x8xf32>
    %cst_16 = arith.constant dense<0.000000e+00> : vector<128x8xf32>
    %22 = tpu.matmul %20, %21, %cst_16 {dimension_numbers = #tpu.dot_dimension_numbers<[1], [0], [0], [1], [0, 0, 1, 1], [], []>} : vector<128x128xf32>, vector<128x8xf32>, vector<128x8xf32> -> vector<128x8xf32>
    %23 = arith.addf %18, %22 : vector<128x8xf32>
    %c3 = arith.constant 3 : index
    %c0_17 = arith.constant 0 : index
    %c0_18 = arith.constant 0 : index
    %24 = vector.load %arg1[%c3, %c0_17, %c0_18] : memref<9x128x128xf32, #tpu.memory_space<vmem>>, vector<1x128x128xf32>
    %25 = vector.shape_cast %24 : vector<1x128x128xf32> to vector<128x128xf32>
    %26 = vector.extract_strided_slice %5 {offsets = [0, 24], sizes = [128, 8], strides = [1, 1]} : vector<128x72xf32> to vector<128x8xf32>
    %cst_19 = arith.constant dense<0.000000e+00> : vector<128x8xf32>
    %27 = tpu.matmul %25, %26, %cst_19 {dimension_numbers = #tpu.dot_dimension_numbers<[1], [0], [0], [1], [0, 0, 1, 1], [], []>} : vector<128x128xf32>, vector<128x8xf32>, vector<128x8xf32> -> vector<128x8xf32>
    %28 = arith.addf %23, %27 : vector<128x8xf32>
    %c4 = arith.constant 4 : index
    %c0_20 = arith.constant 0 : index
    %c0_21 = arith.constant 0 : index
    %29 = vector.load %arg1[%c4, %c0_20, %c0_21] : memref<9x128x128xf32, #tpu.memory_space<vmem>>, vector<1x128x128xf32>
    %30 = vector.shape_cast %29 : vector<1x128x128xf32> to vector<128x128xf32>
    %31 = vector.extract_strided_slice %5 {offsets = [0, 32], sizes = [128, 8], strides = [1, 1]} : vector<128x72xf32> to vector<128x8xf32>
    %cst_22 = arith.constant dense<0.000000e+00> : vector<128x8xf32>
    %32 = tpu.matmul %30, %31, %cst_22 {dimension_numbers = #tpu.dot_dimension_numbers<[1], [0], [0], [1], [0, 0, 1, 1], [], []>} : vector<128x128xf32>, vector<128x8xf32>, vector<128x8xf32> -> vector<128x8xf32>
    %33 = arith.addf %28, %32 : vector<128x8xf32>
    %c5 = arith.constant 5 : index
    %c0_23 = arith.constant 0 : index
    %c0_24 = arith.constant 0 : index
    %34 = vector.load %arg1[%c5, %c0_23, %c0_24] : memref<9x128x128xf32, #tpu.memory_space<vmem>>, vector<1x128x128xf32>
    %35 = vector.shape_cast %34 : vector<1x128x128xf32> to vector<128x128xf32>
    %36 = vector.extract_strided_slice %5 {offsets = [0, 40], sizes = [128, 8], strides = [1, 1]} : vector<128x72xf32> to vector<128x8xf32>
    %cst_25 = arith.constant dense<0.000000e+00> : vector<128x8xf32>
    %37 = tpu.matmul %35, %36, %cst_25 {dimension_numbers = #tpu.dot_dimension_numbers<[1], [0], [0], [1], [0, 0, 1, 1], [], []>} : vector<128x128xf32>, vector<128x8xf32>, vector<128x8xf32> -> vector<128x8xf32>
    %38 = arith.addf %33, %37 : vector<128x8xf32>
    %c6 = arith.constant 6 : index
    %c0_26 = arith.constant 0 : index
    %c0_27 = arith.constant 0 : index
    %39 = vector.load %arg1[%c6, %c0_26, %c0_27] : memref<9x128x128xf32, #tpu.memory_space<vmem>>, vector<1x128x128xf32>
    %40 = vector.shape_cast %39 : vector<1x128x128xf32> to vector<128x128xf32>
    %41 = vector.extract_strided_slice %5 {offsets = [0, 48], sizes = [128, 8], strides = [1, 1]} : vector<128x72xf32> to vector<128x8xf32>
    %cst_28 = arith.constant dense<0.000000e+00> : vector<128x8xf32>
    %42 = tpu.matmul %40, %41, %cst_28 {dimension_numbers = #tpu.dot_dimension_numbers<[1], [0], [0], [1], [0, 0, 1, 1], [], []>} : vector<128x128xf32>, vector<128x8xf32>, vector<128x8xf32> -> vector<128x8xf32>
    %43 = arith.addf %38, %42 : vector<128x8xf32>
    %c7 = arith.constant 7 : index
    %c0_29 = arith.constant 0 : index
    %c0_30 = arith.constant 0 : index
    %44 = vector.load %arg1[%c7, %c0_29, %c0_30] : memref<9x128x128xf32, #tpu.memory_space<vmem>>, vector<1x128x128xf32>
    %45 = vector.shape_cast %44 : vector<1x128x128xf32> to vector<128x128xf32>
    %46 = vector.extract_strided_slice %5 {offsets = [0, 56], sizes = [128, 8], strides = [1, 1]} : vector<128x72xf32> to vector<128x8xf32>
    %cst_31 = arith.constant dense<0.000000e+00> : vector<128x8xf32>
    %47 = tpu.matmul %45, %46, %cst_31 {dimension_numbers = #tpu.dot_dimension_numbers<[1], [0], [0], [1], [0, 0, 1, 1], [], []>} : vector<128x128xf32>, vector<128x8xf32>, vector<128x8xf32> -> vector<128x8xf32>
    %48 = arith.addf %43, %47 : vector<128x8xf32>
    %c8_32 = arith.constant 8 : index
    %c0_33 = arith.constant 0 : index
    %c0_34 = arith.constant 0 : index
    %49 = vector.load %arg1[%c8_32, %c0_33, %c0_34] : memref<9x128x128xf32, #tpu.memory_space<vmem>>, vector<1x128x128xf32>
    %50 = vector.shape_cast %49 : vector<1x128x128xf32> to vector<128x128xf32>
    %51 = vector.extract_strided_slice %5 {offsets = [0, 64], sizes = [128, 8], strides = [1, 1]} : vector<128x72xf32> to vector<128x8xf32>
    %cst_35 = arith.constant dense<0.000000e+00> : vector<128x8xf32>
    %52 = tpu.matmul %50, %51, %cst_35 {dimension_numbers = #tpu.dot_dimension_numbers<[1], [0], [0], [1], [0, 0, 1, 1], [], []>} : vector<128x128xf32>, vector<128x8xf32>, vector<128x8xf32> -> vector<128x8xf32>
    %53 = arith.addf %48, %52 : vector<128x8xf32>
    %cst_36 = arith.constant 0.000000e+00 : f32
    %54 = vector.broadcast %cst_36 : f32 to vector<128x8xf32>
    %55 = arith.maximumf %53, %54 : vector<128x8xf32>
    %c0_37 = arith.constant 0 : index
    %c16 = arith.constant 16 : index
    %c0_38 = arith.constant 0 : index
    %56 = vector.load %arg4[%c0_37, %c16, %c0_38] : memref<1x456x128xf32, #tpu.memory_space<vmem>>, vector<1x8x72xf32>
    %57 = vector.shape_cast %56 : vector<1x8x72xf32> to vector<8x72xf32>
    %c0_39 = arith.constant 0 : index
    %c24 = arith.constant 24 : index
    %c0_40 = arith.constant 0 : index
    %58 = vector.load %arg4[%c0_39, %c24, %c0_40] : memref<1x456x128xf32, #tpu.memory_space<vmem>>, vector<1x1x8xf32>
    %59 = vector.shape_cast %58 : vector<1x1x8xf32> to vector<1x8xf32>
    %cst_41 = arith.constant dense<0.000000e+00> : vector<128x72xf32>
    %60 = tpu.matmul %55, %57, %cst_41 {dimension_numbers = #tpu.dot_dimension_numbers<[1], [0], [0], [1], [0, 0, 1, 1], [], []>} : vector<128x8xf32>, vector<8x72xf32>, vector<128x72xf32> -> vector<128x72xf32>
    %cst_42 = arith.constant 0.000000e+00 : f32
    %61 = vector.broadcast %cst_42 : f32 to vector<128x8xf32>
    %62 = vector.broadcast %59 : vector<1x8xf32> to vector<128x8xf32>
    %63 = arith.addf %61, %62 : vector<128x8xf32>
    %c0_43 = arith.constant 0 : index
    %c0_44 = arith.constant 0 : index
    %c0_45 = arith.constant 0 : index
    %64 = vector.load %arg1[%c0_43, %c0_44, %c0_45] : memref<9x128x128xf32, #tpu.memory_space<vmem>>, vector<1x128x128xf32>
    %65 = vector.shape_cast %64 : vector<1x128x128xf32> to vector<128x128xf32>
    %66 = vector.extract_strided_slice %60 {offsets = [0, 0], sizes = [128, 8], strides = [1, 1]} : vector<128x72xf32> to vector<128x8xf32>
    %cst_46 = arith.constant dense<0.000000e+00> : vector<128x8xf32>
    %67 = tpu.matmul %65, %66, %cst_46 {dimension_numbers = #tpu.dot_dimension_numbers<[1], [0], [0], [1], [0, 0, 1, 1], [], []>} : vector<128x128xf32>, vector<128x8xf32>, vector<128x8xf32> -> vector<128x8xf32>
    %68 = arith.addf %63, %67 : vector<128x8xf32>
    %c1_47 = arith.constant 1 : index
    %c0_48 = arith.constant 0 : index
    %c0_49 = arith.constant 0 : index
    %69 = vector.load %arg1[%c1_47, %c0_48, %c0_49] : memref<9x128x128xf32, #tpu.memory_space<vmem>>, vector<1x128x128xf32>
    %70 = vector.shape_cast %69 : vector<1x128x128xf32> to vector<128x128xf32>
    %71 = vector.extract_strided_slice %60 {offsets = [0, 8], sizes = [128, 8], strides = [1, 1]} : vector<128x72xf32> to vector<128x8xf32>
    %cst_50 = arith.constant dense<0.000000e+00> : vector<128x8xf32>
    %72 = tpu.matmul %70, %71, %cst_50 {dimension_numbers = #tpu.dot_dimension_numbers<[1], [0], [0], [1], [0, 0, 1, 1], [], []>} : vector<128x128xf32>, vector<128x8xf32>, vector<128x8xf32> -> vector<128x8xf32>
    %73 = arith.addf %68, %72 : vector<128x8xf32>
    %c2_51 = arith.constant 2 : index
    %c0_52 = arith.constant 0 : index
    %c0_53 = arith.constant 0 : index
    %74 = vector.load %arg1[%c2_51, %c0_52, %c0_53] : memref<9x128x128xf32, #tpu.memory_space<vmem>>, vector<1x128x128xf32>
    %75 = vector.shape_cast %74 : vector<1x128x128xf32> to vector<128x128xf32>
    %76 = vector.extract_strided_slice %60 {offsets = [0, 16], sizes = [128, 8], strides = [1, 1]} : vector<128x72xf32> to vector<128x8xf32>
    %cst_54 = arith.constant dense<0.000000e+00> : vector<128x8xf32>
    %77 = tpu.matmul %75, %76, %cst_54 {dimension_numbers = #tpu.dot_dimension_numbers<[1], [0], [0], [1], [0, 0, 1, 1], [], []>} : vector<128x128xf32>, vector<128x8xf32>, vector<128x8xf32> -> vector<128x8xf32>
    %78 = arith.addf %73, %77 : vector<128x8xf32>
    %c3_55 = arith.constant 3 : index
    %c0_56 = arith.constant 0 : index
    %c0_57 = arith.constant 0 : index
    %79 = vector.load %arg1[%c3_55, %c0_56, %c0_57] : memref<9x128x128xf32, #tpu.memory_space<vmem>>, vector<1x128x128xf32>
    %80 = vector.shape_cast %79 : vector<1x128x128xf32> to vector<128x128xf32>
    %81 = vector.extract_strided_slice %60 {offsets = [0, 24], sizes = [128, 8], strides = [1, 1]} : vector<128x72xf32> to vector<128x8xf32>
    %cst_58 = arith.constant dense<0.000000e+00> : vector<128x8xf32>
    %82 = tpu.matmul %80, %81, %cst_58 {dimension_numbers = #tpu.dot_dimension_numbers<[1], [0], [0], [1], [0, 0, 1, 1], [], []>} : vector<128x128xf32>, vector<128x8xf32>, vector<128x8xf32> -> vector<128x8xf32>
    %83 = arith.addf %78, %82 : vector<128x8xf32>
    %c4_59 = arith.constant 4 : index
    %c0_60 = arith.constant 0 : index
    %c0_61 = arith.constant 0 : index
    %84 = vector.load %arg1[%c4_59, %c0_60, %c0_61] : memref<9x128x128xf32, #tpu.memory_space<vmem>>, vector<1x128x128xf32>
    %85 = vector.shape_cast %84 : vector<1x128x128xf32> to vector<128x128xf32>
    %86 = vector.extract_strided_slice %60 {offsets = [0, 32], sizes = [128, 8], strides = [1, 1]} : vector<128x72xf32> to vector<128x8xf32>
    %cst_62 = arith.constant dense<0.000000e+00> : vector<128x8xf32>
    %87 = tpu.matmul %85, %86, %cst_62 {dimension_numbers = #tpu.dot_dimension_numbers<[1], [0], [0], [1], [0, 0, 1, 1], [], []>} : vector<128x128xf32>, vector<128x8xf32>, vector<128x8xf32> -> vector<128x8xf32>
    %88 = arith.addf %83, %87 : vector<128x8xf32>
    %c5_63 = arith.constant 5 : index
    %c0_64 = arith.constant 0 : index
    %c0_65 = arith.constant 0 : index
    %89 = vector.load %arg1[%c5_63, %c0_64, %c0_65] : memref<9x128x128xf32, #tpu.memory_space<vmem>>, vector<1x128x128xf32>
    %90 = vector.shape_cast %89 : vector<1x128x128xf32> to vector<128x128xf32>
    %91 = vector.extract_strided_slice %60 {offsets = [0, 40], sizes = [128, 8], strides = [1, 1]} : vector<128x72xf32> to vector<128x8xf32>
    %cst_66 = arith.constant dense<0.000000e+00> : vector<128x8xf32>
    %92 = tpu.matmul %90, %91, %cst_66 {dimension_numbers = #tpu.dot_dimension_numbers<[1], [0], [0], [1], [0, 0, 1, 1], [], []>} : vector<128x128xf32>, vector<128x8xf32>, vector<128x8xf32> -> vector<128x8xf32>
    %93 = arith.addf %88, %92 : vector<128x8xf32>
    %c6_67 = arith.constant 6 : index
    %c0_68 = arith.constant 0 : index
    %c0_69 = arith.constant 0 : index
    %94 = vector.load %arg1[%c6_67, %c0_68, %c0_69] : memref<9x128x128xf32, #tpu.memory_space<vmem>>, vector<1x128x128xf32>
    %95 = vector.shape_cast %94 : vector<1x128x128xf32> to vector<128x128xf32>
    %96 = vector.extract_strided_slice %60 {offsets = [0, 48], sizes = [128, 8], strides = [1, 1]} : vector<128x72xf32> to vector<128x8xf32>
    %cst_70 = arith.constant dense<0.000000e+00> : vector<128x8xf32>
    %97 = tpu.matmul %95, %96, %cst_70 {dimension_numbers = #tpu.dot_dimension_numbers<[1], [0], [0], [1], [0, 0, 1, 1], [], []>} : vector<128x128xf32>, vector<128x8xf32>, vector<128x8xf32> -> vector<128x8xf32>
    %98 = arith.addf %93, %97 : vector<128x8xf32>
    %c7_71 = arith.constant 7 : index
    %c0_72 = arith.constant 0 : index
    %c0_73 = arith.constant 0 : index
    %99 = vector.load %arg1[%c7_71, %c0_72, %c0_73] : memref<9x128x128xf32, #tpu.memory_space<vmem>>, vector<1x128x128xf32>
    %100 = vector.shape_cast %99 : vector<1x128x128xf32> to vector<128x128xf32>
    %101 = vector.extract_strided_slice %60 {offsets = [0, 56], sizes = [128, 8], strides = [1, 1]} : vector<128x72xf32> to vector<128x8xf32>
    %cst_74 = arith.constant dense<0.000000e+00> : vector<128x8xf32>
    %102 = tpu.matmul %100, %101, %cst_74 {dimension_numbers = #tpu.dot_dimension_numbers<[1], [0], [0], [1], [0, 0, 1, 1], [], []>} : vector<128x128xf32>, vector<128x8xf32>, vector<128x8xf32> -> vector<128x8xf32>
    %103 = arith.addf %98, %102 : vector<128x8xf32>
    %c8_75 = arith.constant 8 : index
    %c0_76 = arith.constant 0 : index
    %c0_77 = arith.constant 0 : index
    %104 = vector.load %arg1[%c8_75, %c0_76, %c0_77] : memref<9x128x128xf32, #tpu.memory_space<vmem>>, vector<1x128x128xf32>
    %105 = vector.shape_cast %104 : vector<1x128x128xf32> to vector<128x128xf32>
    %106 = vector.extract_strided_slice %60 {offsets = [0, 64], sizes = [128, 8], strides = [1, 1]} : vector<128x72xf32> to vector<128x8xf32>
    %cst_78 = arith.constant dense<0.000000e+00> : vector<128x8xf32>
    %107 = tpu.matmul %105, %106, %cst_78 {dimension_numbers = #tpu.dot_dimension_numbers<[1], [0], [0], [1], [0, 0, 1, 1], [], []>} : vector<128x128xf32>, vector<128x8xf32>, vector<128x8xf32> -> vector<128x8xf32>
    %108 = arith.addf %103, %107 : vector<128x8xf32>
    %cst_79 = arith.constant 0.000000e+00 : f32
    %109 = vector.broadcast %cst_79 : f32 to vector<128x8xf32>
    %110 = arith.maximumf %108, %109 : vector<128x8xf32>
    %c0_80 = arith.constant 0 : index
    %c32 = arith.constant 32 : index
    %c0_81 = arith.constant 0 : index
    %111 = vector.load %arg4[%c0_80, %c32, %c0_81] : memref<1x456x128xf32, #tpu.memory_space<vmem>>, vector<1x8x32xf32>
    %112 = vector.shape_cast %111 : vector<1x8x32xf32> to vector<8x32xf32>
    %cst_82 = arith.constant dense<0.000000e+00> : vector<128x32xf32>
    %113 = tpu.matmul %110, %112, %cst_82 {dimension_numbers = #tpu.dot_dimension_numbers<[1], [0], [0], [1], [0, 0, 1, 1], [], []>} : vector<128x8xf32>, vector<8x32xf32>, vector<128x32xf32> -> vector<128x32xf32>
    %c0_83 = arith.constant 0 : index
    %c0_84 = arith.constant 0 : index
    %114 = vector.load %arg2[%c0_83, %c0_84] : memref<128x2xf32, #tpu.memory_space<vmem>>, vector<128x2xf32>
    %c0_85 = arith.constant 0 : index
    %c40 = arith.constant 40 : index
    %c0_86 = arith.constant 0 : index
    %115 = vector.load %arg4[%c0_85, %c40, %c0_86] : memref<1x456x128xf32, #tpu.memory_space<vmem>>, vector<1x2x32xf32>
    %116 = vector.shape_cast %115 : vector<1x2x32xf32> to vector<2x32xf32>
    %cst_87 = arith.constant dense<0.000000e+00> : vector<128x32xf32>
    %117 = tpu.matmul %114, %116, %cst_87 {dimension_numbers = #tpu.dot_dimension_numbers<[1], [0], [0], [1], [0, 0, 1, 1], [], []>} : vector<128x2xf32>, vector<2x32xf32>, vector<128x32xf32> -> vector<128x32xf32>
    %118 = arith.addf %113, %117 : vector<128x32xf32>
    %c0_88 = arith.constant 0 : index
    %c48 = arith.constant 48 : index
    %c0_89 = arith.constant 0 : index
    %119 = vector.load %arg4[%c0_88, %c48, %c0_89] : memref<1x456x128xf32, #tpu.memory_space<vmem>>, vector<1x1x32xf32>
    %120 = vector.shape_cast %119 : vector<1x1x32xf32> to vector<1x32xf32>
    %121 = vector.broadcast %120 : vector<1x32xf32> to vector<128x32xf32>
    %122 = arith.addf %118, %121 : vector<128x32xf32>
    %123 = vector.extract_strided_slice %122 {offsets = [0, 0], sizes = [64, 32], strides = [1, 1]} : vector<128x32xf32> to vector<64x32xf32>
    %124 = tpu.transpose %123, [1, 0] : vector<64x32xf32> -> vector<32x64xf32>
    %125 = vector.extract_strided_slice %122 {offsets = [64, 0], sizes = [64, 32], strides = [1, 1]} : vector<128x32xf32> to vector<64x32xf32>
    %126 = tpu.transpose %125, [1, 0] : vector<64x32xf32> -> vector<32x64xf32>
    %127 = tpu.concatenate %124, %126 in 0 : vector<32x64xf32>, vector<32x64xf32> -> vector<64x64xf32>
    %c0_90 = arith.constant 0 : index
    %c56 = arith.constant 56 : index
    %c0_91 = arith.constant 0 : index
    %128 = vector.load %arg4[%c0_90, %c56, %c0_91] : memref<1x456x128xf32, #tpu.memory_space<vmem>>, vector<1x1x64xf32>
    %129 = vector.shape_cast %128 : vector<1x1x64xf32> to vector<1x64xf32>
    %c0_92 = arith.constant 0 : index
    %c64 = arith.constant 64 : index
    %c0_93 = arith.constant 0 : index
    %130 = vector.load %arg4[%c0_92, %c64, %c0_93] : memref<1x456x128xf32, #tpu.memory_space<vmem>>, vector<1x1x64xf32>
    %131 = vector.shape_cast %130 : vector<1x1x64xf32> to vector<1x64xf32>
    %c0_94 = arith.constant 0 : index
    %c72 = arith.constant 72 : index
    %c0_95 = arith.constant 0 : index
    %132 = vector.load %arg4[%c0_94, %c72, %c0_95] : memref<1x456x128xf32, #tpu.memory_space<vmem>>, vector<1x64x16xf32>
    %133 = vector.shape_cast %132 : vector<1x64x16xf32> to vector<64x16xf32>
    %c0_96 = arith.constant 0 : index
    %c136 = arith.constant 136 : index
    %c0_97 = arith.constant 0 : index
    %134 = vector.load %arg4[%c0_96, %c136, %c0_97] : memref<1x456x128xf32, #tpu.memory_space<vmem>>, vector<1x1x16xf32>
    %135 = vector.shape_cast %134 : vector<1x1x16xf32> to vector<1x16xf32>
    %c0_98 = arith.constant 0 : index
    %c144 = arith.constant 144 : index
    %c0_99 = arith.constant 0 : index
    %136 = vector.load %arg4[%c0_98, %c144, %c0_99] : memref<1x456x128xf32, #tpu.memory_space<vmem>>, vector<1x16x64xf32>
    %137 = vector.shape_cast %136 : vector<1x16x64xf32> to vector<16x64xf32>
    %c0_100 = arith.constant 0 : index
    %c160 = arith.constant 160 : index
    %c0_101 = arith.constant 0 : index
    %138 = vector.load %arg4[%c0_100, %c160, %c0_101] : memref<1x456x128xf32, #tpu.memory_space<vmem>>, vector<1x1x64xf32>
    %139 = vector.shape_cast %138 : vector<1x1x64xf32> to vector<1x64xf32>
    %cst_102 = arith.constant dense<0.000000e+00> : vector<64xf32>
    %140 = vector.multi_reduction <add>, %127, %cst_102 [1] : vector<64x64xf32> to vector<64xf32>
    %141 = vector.shape_cast %140 : vector<64xf32> to vector<64x1xf32>
    %cst_103 = arith.constant 6.400000e+01 : f32
    %142 = vector.broadcast %cst_103 : f32 to vector<64x1xf32>
    %143 = arith.divf %141, %142 : vector<64x1xf32>
    %144 = vector.broadcast %143 : vector<64x1xf32> to vector<64x64xf32>
    %145 = arith.subf %127, %144 : vector<64x64xf32>
    %146 = arith.mulf %145, %145 : vector<64x64xf32>
    %cst_104 = arith.constant dense<0.000000e+00> : vector<64xf32>
    %147 = vector.multi_reduction <add>, %146, %cst_104 [1] : vector<64x64xf32> to vector<64xf32>
    %148 = vector.shape_cast %147 : vector<64xf32> to vector<64x1xf32>
    %cst_105 = arith.constant 6.400000e+01 : f32
    %149 = vector.broadcast %cst_105 : f32 to vector<64x1xf32>
    %150 = arith.divf %148, %149 : vector<64x1xf32>
    %151 = vector.broadcast %143 : vector<64x1xf32> to vector<64x64xf32>
    %152 = arith.subf %127, %151 : vector<64x64xf32>
    %cst_106 = arith.constant 9.99999974E-6 : f32
    %153 = vector.broadcast %cst_106 : f32 to vector<64x1xf32>
    %154 = arith.addf %150, %153 : vector<64x1xf32>
    %155 = math.rsqrt %154 : vector<64x1xf32>
    %156 = vector.broadcast %155 : vector<64x1xf32> to vector<64x64xf32>
    %157 = arith.mulf %152, %156 : vector<64x64xf32>
    %158 = vector.broadcast %129 : vector<1x64xf32> to vector<64x64xf32>
    %159 = arith.mulf %157, %158 : vector<64x64xf32>
    %160 = vector.broadcast %131 : vector<1x64xf32> to vector<64x64xf32>
    %161 = arith.addf %159, %160 : vector<64x64xf32>
    %cst_107 = arith.constant dense<0.000000e+00> : vector<64x16xf32>
    %162 = tpu.matmul %161, %133, %cst_107 {dimension_numbers = #tpu.dot_dimension_numbers<[1], [0], [0], [1], [0, 0, 1, 1], [], []>} : vector<64x64xf32>, vector<64x16xf32>, vector<64x16xf32> -> vector<64x16xf32>
    %163 = vector.broadcast %135 : vector<1x16xf32> to vector<64x16xf32>
    %164 = arith.addf %162, %163 : vector<64x16xf32>
    %cst_108 = arith.constant 0.000000e+00 : f32
    %165 = vector.broadcast %cst_108 : f32 to vector<64x16xf32>
    %166 = arith.maximumf %164, %165 : vector<64x16xf32>
    %cst_109 = arith.constant dense<0.000000e+00> : vector<64x64xf32>
    %167 = tpu.matmul %166, %137, %cst_109 {dimension_numbers = #tpu.dot_dimension_numbers<[1], [0], [0], [1], [0, 0, 1, 1], [], []>} : vector<64x16xf32>, vector<16x64xf32>, vector<64x64xf32> -> vector<64x64xf32>
    %168 = arith.addf %127, %167 : vector<64x64xf32>
    %169 = vector.broadcast %139 : vector<1x64xf32> to vector<64x64xf32>
    %170 = arith.addf %168, %169 : vector<64x64xf32>
    %c0_110 = arith.constant 0 : index
    %c168 = arith.constant 168 : index
    %c0_111 = arith.constant 0 : index
    %171 = vector.load %arg4[%c0_110, %c168, %c0_111] : memref<1x456x128xf32, #tpu.memory_space<vmem>>, vector<1x1x64xf32>
    %172 = vector.shape_cast %171 : vector<1x1x64xf32> to vector<1x64xf32>
    %c0_112 = arith.constant 0 : index
    %c176 = arith.constant 176 : index
    %c0_113 = arith.constant 0 : index
    %173 = vector.load %arg4[%c0_112, %c176, %c0_113] : memref<1x456x128xf32, #tpu.memory_space<vmem>>, vector<1x1x64xf32>
    %174 = vector.shape_cast %173 : vector<1x1x64xf32> to vector<1x64xf32>
    %c0_114 = arith.constant 0 : index
    %c184 = arith.constant 184 : index
    %c0_115 = arith.constant 0 : index
    %175 = vector.load %arg4[%c0_114, %c184, %c0_115] : memref<1x456x128xf32, #tpu.memory_space<vmem>>, vector<1x64x16xf32>
    %176 = vector.shape_cast %175 : vector<1x64x16xf32> to vector<64x16xf32>
    %c0_116 = arith.constant 0 : index
    %c248 = arith.constant 248 : index
    %c0_117 = arith.constant 0 : index
    %177 = vector.load %arg4[%c0_116, %c248, %c0_117] : memref<1x456x128xf32, #tpu.memory_space<vmem>>, vector<1x1x16xf32>
    %178 = vector.shape_cast %177 : vector<1x1x16xf32> to vector<1x16xf32>
    %c0_118 = arith.constant 0 : index
    %c256 = arith.constant 256 : index
    %c0_119 = arith.constant 0 : index
    %179 = vector.load %arg4[%c0_118, %c256, %c0_119] : memref<1x456x128xf32, #tpu.memory_space<vmem>>, vector<1x16x64xf32>
    %180 = vector.shape_cast %179 : vector<1x16x64xf32> to vector<16x64xf32>
    %c0_120 = arith.constant 0 : index
    %c272 = arith.constant 272 : index
    %c0_121 = arith.constant 0 : index
    %181 = vector.load %arg4[%c0_120, %c272, %c0_121] : memref<1x456x128xf32, #tpu.memory_space<vmem>>, vector<1x1x64xf32>
    %182 = vector.shape_cast %181 : vector<1x1x64xf32> to vector<1x64xf32>
    %cst_122 = arith.constant dense<0.000000e+00> : vector<64xf32>
    %183 = vector.multi_reduction <add>, %170, %cst_122 [1] : vector<64x64xf32> to vector<64xf32>
    %184 = vector.shape_cast %183 : vector<64xf32> to vector<64x1xf32>
    %cst_123 = arith.constant 6.400000e+01 : f32
    %185 = vector.broadcast %cst_123 : f32 to vector<64x1xf32>
    %186 = arith.divf %184, %185 : vector<64x1xf32>
    %187 = vector.broadcast %186 : vector<64x1xf32> to vector<64x64xf32>
    %188 = arith.subf %170, %187 : vector<64x64xf32>
    %189 = arith.mulf %188, %188 : vector<64x64xf32>
    %cst_124 = arith.constant dense<0.000000e+00> : vector<64xf32>
    %190 = vector.multi_reduction <add>, %189, %cst_124 [1] : vector<64x64xf32> to vector<64xf32>
    %191 = vector.shape_cast %190 : vector<64xf32> to vector<64x1xf32>
    %cst_125 = arith.constant 6.400000e+01 : f32
    %192 = vector.broadcast %cst_125 : f32 to vector<64x1xf32>
    %193 = arith.divf %191, %192 : vector<64x1xf32>
    %194 = vector.broadcast %186 : vector<64x1xf32> to vector<64x64xf32>
    %195 = arith.subf %170, %194 : vector<64x64xf32>
    %cst_126 = arith.constant 9.99999974E-6 : f32
    %196 = vector.broadcast %cst_126 : f32 to vector<64x1xf32>
    %197 = arith.addf %193, %196 : vector<64x1xf32>
    %198 = math.rsqrt %197 : vector<64x1xf32>
    %199 = vector.broadcast %198 : vector<64x1xf32> to vector<64x64xf32>
    %200 = arith.mulf %195, %199 : vector<64x64xf32>
    %201 = vector.broadcast %172 : vector<1x64xf32> to vector<64x64xf32>
    %202 = arith.mulf %200, %201 : vector<64x64xf32>
    %203 = vector.broadcast %174 : vector<1x64xf32> to vector<64x64xf32>
    %204 = arith.addf %202, %203 : vector<64x64xf32>
    %cst_127 = arith.constant dense<0.000000e+00> : vector<64x16xf32>
    %205 = tpu.matmul %204, %176, %cst_127 {dimension_numbers = #tpu.dot_dimension_numbers<[1], [0], [0], [1], [0, 0, 1, 1], [], []>} : vector<64x64xf32>, vector<64x16xf32>, vector<64x16xf32> -> vector<64x16xf32>
    %206 = vector.broadcast %178 : vector<1x16xf32> to vector<64x16xf32>
    %207 = arith.addf %205, %206 : vector<64x16xf32>
    %cst_128 = arith.constant 0.000000e+00 : f32
    %208 = vector.broadcast %cst_128 : f32 to vector<64x16xf32>
    %209 = arith.maximumf %207, %208 : vector<64x16xf32>
    %cst_129 = arith.constant dense<0.000000e+00> : vector<64x64xf32>
    %210 = tpu.matmul %209, %180, %cst_129 {dimension_numbers = #tpu.dot_dimension_numbers<[1], [0], [0], [1], [0, 0, 1, 1], [], []>} : vector<64x16xf32>, vector<16x64xf32>, vector<64x64xf32> -> vector<64x64xf32>
    %211 = arith.addf %170, %210 : vector<64x64xf32>
    %212 = vector.broadcast %182 : vector<1x64xf32> to vector<64x64xf32>
    %213 = arith.addf %211, %212 : vector<64x64xf32>
    %214 = vector.shape_cast %213 : vector<64x64xf32> to vector<2x32x64xf32>
    %cst_130 = arith.constant dense<0xFF800000> : vector<2x32xf32>
    %215 = vector.multi_reduction <maximumf>, %214, %cst_130 [2] : vector<2x32x64xf32> to vector<2x32xf32>
    %c0_131 = arith.constant 0 : index
    %c280 = arith.constant 280 : index
    %c0_132 = arith.constant 0 : index
    %216 = vector.load %arg4[%c0_131, %c280, %c0_132] : memref<1x456x128xf32, #tpu.memory_space<vmem>>, vector<1x1x32xf32>
    %217 = vector.shape_cast %216 : vector<1x1x32xf32> to vector<1x32xf32>
    %c0_133 = arith.constant 0 : index
    %c288 = arith.constant 288 : index
    %c0_134 = arith.constant 0 : index
    %218 = vector.load %arg4[%c0_133, %c288, %c0_134] : memref<1x456x128xf32, #tpu.memory_space<vmem>>, vector<1x1x32xf32>
    %219 = vector.shape_cast %218 : vector<1x1x32xf32> to vector<1x32xf32>
    %c0_135 = arith.constant 0 : index
    %c296 = arith.constant 296 : index
    %c0_136 = arith.constant 0 : index
    %220 = vector.load %arg4[%c0_135, %c296, %c0_136] : memref<1x456x128xf32, #tpu.memory_space<vmem>>, vector<1x32x16xf32>
    %221 = vector.shape_cast %220 : vector<1x32x16xf32> to vector<32x16xf32>
    %c0_137 = arith.constant 0 : index
    %c328 = arith.constant 328 : index
    %c0_138 = arith.constant 0 : index
    %222 = vector.load %arg4[%c0_137, %c328, %c0_138] : memref<1x456x128xf32, #tpu.memory_space<vmem>>, vector<1x1x16xf32>
    %223 = vector.shape_cast %222 : vector<1x1x16xf32> to vector<1x16xf32>
    %c0_139 = arith.constant 0 : index
    %c336 = arith.constant 336 : index
    %c0_140 = arith.constant 0 : index
    %224 = vector.load %arg4[%c0_139, %c336, %c0_140] : memref<1x456x128xf32, #tpu.memory_space<vmem>>, vector<1x16x32xf32>
    %225 = vector.shape_cast %224 : vector<1x16x32xf32> to vector<16x32xf32>
    %c0_141 = arith.constant 0 : index
    %c352 = arith.constant 352 : index
    %c0_142 = arith.constant 0 : index
    %226 = vector.load %arg4[%c0_141, %c352, %c0_142] : memref<1x456x128xf32, #tpu.memory_space<vmem>>, vector<1x1x32xf32>
    %227 = vector.shape_cast %226 : vector<1x1x32xf32> to vector<1x32xf32>
    %cst_143 = arith.constant dense<0.000000e+00> : vector<2xf32>
    %228 = vector.multi_reduction <add>, %215, %cst_143 [1] : vector<2x32xf32> to vector<2xf32>
    %229 = vector.shape_cast %228 : vector<2xf32> to vector<2x1xf32>
    %cst_144 = arith.constant 3.200000e+01 : f32
    %230 = vector.broadcast %cst_144 : f32 to vector<2x1xf32>
    %231 = arith.divf %229, %230 : vector<2x1xf32>
    %232 = vector.broadcast %231 : vector<2x1xf32> to vector<2x32xf32>
    %233 = arith.subf %215, %232 : vector<2x32xf32>
    %234 = arith.mulf %233, %233 : vector<2x32xf32>
    %cst_145 = arith.constant dense<0.000000e+00> : vector<2xf32>
    %235 = vector.multi_reduction <add>, %234, %cst_145 [1] : vector<2x32xf32> to vector<2xf32>
    %236 = vector.shape_cast %235 : vector<2xf32> to vector<2x1xf32>
    %cst_146 = arith.constant 3.200000e+01 : f32
    %237 = vector.broadcast %cst_146 : f32 to vector<2x1xf32>
    %238 = arith.divf %236, %237 : vector<2x1xf32>
    %239 = vector.broadcast %231 : vector<2x1xf32> to vector<2x32xf32>
    %240 = arith.subf %215, %239 : vector<2x32xf32>
    %cst_147 = arith.constant 9.99999974E-6 : f32
    %241 = vector.broadcast %cst_147 : f32 to vector<2x1xf32>
    %242 = arith.addf %238, %241 : vector<2x1xf32>
    %243 = math.rsqrt %242 : vector<2x1xf32>
    %244 = vector.broadcast %243 : vector<2x1xf32> to vector<2x32xf32>
    %245 = arith.mulf %240, %244 : vector<2x32xf32>
    %246 = vector.broadcast %217 : vector<1x32xf32> to vector<2x32xf32>
    %247 = arith.mulf %245, %246 : vector<2x32xf32>
    %248 = vector.broadcast %219 : vector<1x32xf32> to vector<2x32xf32>
    %249 = arith.addf %247, %248 : vector<2x32xf32>
    %cst_148 = arith.constant dense<0.000000e+00> : vector<2x16xf32>
    %250 = tpu.matmul %249, %221, %cst_148 {dimension_numbers = #tpu.dot_dimension_numbers<[1], [0], [0], [1], [0, 0, 1, 1], [], []>} : vector<2x32xf32>, vector<32x16xf32>, vector<2x16xf32> -> vector<2x16xf32>
    %251 = vector.broadcast %223 : vector<1x16xf32> to vector<2x16xf32>
    %252 = arith.addf %250, %251 : vector<2x16xf32>
    %cst_149 = arith.constant 0.000000e+00 : f32
    %253 = vector.broadcast %cst_149 : f32 to vector<2x16xf32>
    %254 = arith.maximumf %252, %253 : vector<2x16xf32>
    %cst_150 = arith.constant dense<0.000000e+00> : vector<2x32xf32>
    %255 = tpu.matmul %254, %225, %cst_150 {dimension_numbers = #tpu.dot_dimension_numbers<[1], [0], [0], [1], [0, 0, 1, 1], [], []>} : vector<2x16xf32>, vector<16x32xf32>, vector<2x32xf32> -> vector<2x32xf32>
    %256 = arith.addf %215, %255 : vector<2x32xf32>
    %257 = vector.broadcast %227 : vector<1x32xf32> to vector<2x32xf32>
    %258 = arith.addf %256, %257 : vector<2x32xf32>
    %c0_151 = arith.constant 0 : index
    %c360 = arith.constant 360 : index
    %c0_152 = arith.constant 0 : index
    %259 = vector.load %arg4[%c0_151, %c360, %c0_152] : memref<1x456x128xf32, #tpu.memory_space<vmem>>, vector<1x1x32xf32>
    %260 = vector.shape_cast %259 : vector<1x1x32xf32> to vector<1x32xf32>
    %c0_153 = arith.constant 0 : index
    %c368 = arith.constant 368 : index
    %c0_154 = arith.constant 0 : index
    %261 = vector.load %arg4[%c0_153, %c368, %c0_154] : memref<1x456x128xf32, #tpu.memory_space<vmem>>, vector<1x1x32xf32>
    %262 = vector.shape_cast %261 : vector<1x1x32xf32> to vector<1x32xf32>
    %c0_155 = arith.constant 0 : index
    %c376 = arith.constant 376 : index
    %c0_156 = arith.constant 0 : index
    %263 = vector.load %arg4[%c0_155, %c376, %c0_156] : memref<1x456x128xf32, #tpu.memory_space<vmem>>, vector<1x32x16xf32>
    %264 = vector.shape_cast %263 : vector<1x32x16xf32> to vector<32x16xf32>
    %c0_157 = arith.constant 0 : index
    %c408 = arith.constant 408 : index
    %c0_158 = arith.constant 0 : index
    %265 = vector.load %arg4[%c0_157, %c408, %c0_158] : memref<1x456x128xf32, #tpu.memory_space<vmem>>, vector<1x1x16xf32>
    %266 = vector.shape_cast %265 : vector<1x1x16xf32> to vector<1x16xf32>
    %c0_159 = arith.constant 0 : index
    %c416 = arith.constant 416 : index
    %c0_160 = arith.constant 0 : index
    %267 = vector.load %arg4[%c0_159, %c416, %c0_160] : memref<1x456x128xf32, #tpu.memory_space<vmem>>, vector<1x16x32xf32>
    %268 = vector.shape_cast %267 : vector<1x16x32xf32> to vector<16x32xf32>
    %c0_161 = arith.constant 0 : index
    %c432 = arith.constant 432 : index
    %c0_162 = arith.constant 0 : index
    %269 = vector.load %arg4[%c0_161, %c432, %c0_162] : memref<1x456x128xf32, #tpu.memory_space<vmem>>, vector<1x1x32xf32>
    %270 = vector.shape_cast %269 : vector<1x1x32xf32> to vector<1x32xf32>
    %cst_163 = arith.constant dense<0.000000e+00> : vector<2xf32>
    %271 = vector.multi_reduction <add>, %258, %cst_163 [1] : vector<2x32xf32> to vector<2xf32>
    %272 = vector.shape_cast %271 : vector<2xf32> to vector<2x1xf32>
    %cst_164 = arith.constant 3.200000e+01 : f32
    %273 = vector.broadcast %cst_164 : f32 to vector<2x1xf32>
    %274 = arith.divf %272, %273 : vector<2x1xf32>
    %275 = vector.broadcast %274 : vector<2x1xf32> to vector<2x32xf32>
    %276 = arith.subf %258, %275 : vector<2x32xf32>
    %277 = arith.mulf %276, %276 : vector<2x32xf32>
    %cst_165 = arith.constant dense<0.000000e+00> : vector<2xf32>
    %278 = vector.multi_reduction <add>, %277, %cst_165 [1] : vector<2x32xf32> to vector<2xf32>
    %279 = vector.shape_cast %278 : vector<2xf32> to vector<2x1xf32>
    %cst_166 = arith.constant 3.200000e+01 : f32
    %280 = vector.broadcast %cst_166 : f32 to vector<2x1xf32>
    %281 = arith.divf %279, %280 : vector<2x1xf32>
    %282 = vector.broadcast %274 : vector<2x1xf32> to vector<2x32xf32>
    %283 = arith.subf %258, %282 : vector<2x32xf32>
    %cst_167 = arith.constant 9.99999974E-6 : f32
    %284 = vector.broadcast %cst_167 : f32 to vector<2x1xf32>
    %285 = arith.addf %281, %284 : vector<2x1xf32>
    %286 = math.rsqrt %285 : vector<2x1xf32>
    %287 = vector.broadcast %286 : vector<2x1xf32> to vector<2x32xf32>
    %288 = arith.mulf %283, %287 : vector<2x32xf32>
    %289 = vector.broadcast %260 : vector<1x32xf32> to vector<2x32xf32>
    %290 = arith.mulf %288, %289 : vector<2x32xf32>
    %291 = vector.broadcast %262 : vector<1x32xf32> to vector<2x32xf32>
    %292 = arith.addf %290, %291 : vector<2x32xf32>
    %cst_168 = arith.constant dense<0.000000e+00> : vector<2x16xf32>
    %293 = tpu.matmul %292, %264, %cst_168 {dimension_numbers = #tpu.dot_dimension_numbers<[1], [0], [0], [1], [0, 0, 1, 1], [], []>} : vector<2x32xf32>, vector<32x16xf32>, vector<2x16xf32> -> vector<2x16xf32>
    %294 = vector.broadcast %266 : vector<1x16xf32> to vector<2x16xf32>
    %295 = arith.addf %293, %294 : vector<2x16xf32>
    %cst_169 = arith.constant 0.000000e+00 : f32
    %296 = vector.broadcast %cst_169 : f32 to vector<2x16xf32>
    %297 = arith.maximumf %295, %296 : vector<2x16xf32>
    %cst_170 = arith.constant dense<0.000000e+00> : vector<2x32xf32>
    %298 = tpu.matmul %297, %268, %cst_170 {dimension_numbers = #tpu.dot_dimension_numbers<[1], [0], [0], [1], [0, 0, 1, 1], [], []>} : vector<2x16xf32>, vector<16x32xf32>, vector<2x32xf32> -> vector<2x32xf32>
    %299 = arith.addf %258, %298 : vector<2x32xf32>
    %300 = vector.broadcast %270 : vector<1x32xf32> to vector<2x32xf32>
    %301 = arith.addf %299, %300 : vector<2x32xf32>
    %c0_171 = arith.constant 0 : index
    %c440 = arith.constant 440 : index
    %c0_172 = arith.constant 0 : index
    %302 = vector.load %arg4[%c0_171, %c440, %c0_172] : memref<1x456x128xf32, #tpu.memory_space<vmem>>, vector<1x1x32xf32>
    %303 = vector.shape_cast %302 : vector<1x1x32xf32> to vector<1x32xf32>
    %304 = vector.broadcast %303 : vector<1x32xf32> to vector<2x32xf32>
    %305 = arith.mulf %301, %304 : vector<2x32xf32>
    %cst_173 = arith.constant dense<0.000000e+00> : vector<2xf32>
    %306 = vector.multi_reduction <add>, %305, %cst_173 [1] : vector<2x32xf32> to vector<2xf32>
    %307 = vector.shape_cast %306 : vector<2xf32> to vector<2x1xf32>
    %c0_174 = arith.constant 0 : index
    %c448 = arith.constant 448 : index
    %c0_175 = arith.constant 0 : index
    %308 = vector.load %arg4[%c0_174, %c448, %c0_175] : memref<1x456x128xf32, #tpu.memory_space<vmem>>, vector<1x1x1xf32>
    %309 = vector.shape_cast %308 : vector<1x1x1xf32> to vector<1x1xf32>
    %310 = vector.broadcast %309 : vector<1x1xf32> to vector<2x1xf32>
    %311 = arith.addf %307, %310 : vector<2x1xf32>
    %c0_176 = arith.constant 0 : index
    %c0_177 = arith.constant 0 : index
    %c0_178 = arith.constant 0 : index
    %312 = vector.load %arg5[%c0_176, %c0_177, %c0_178] : memref<1x2x1xf32, #tpu.memory_space<vmem>>, vector<1x2x1xf32>
    %313 = vector.shape_cast %312 : vector<1x2x1xf32> to vector<2x1xf32>
    %314 = vector.shape_cast %311 : vector<2x1xf32> to vector<1x2x1xf32>
    tpu.vector_store %arg5[%c0_176, %c0_177, %c0_178], %314 {strides = array<i32>} : memref<1x2x1xf32, #tpu.memory_space<vmem>>, vector<1x2x1xf32>,
    return
  }
  func.func @transform_0(%arg0: i32) -> (i32, i32, i32) {
    %c0_i32 = arith.constant 0 : i32
    %c0_i32_0 = arith.constant 0 : i32
    %c0_i32_1 = arith.constant 0 : i32
    %c0_i32_2 = arith.constant 0 : i32
    return %c0_i32, %c0_i32_0, %c0_i32_1 : i32, i32, i32
  }
  func.func @transform_1(%arg0: i32) -> (i32, i32) {
    %c0_i32 = arith.constant 0 : i32
    %c0_i32_0 = arith.constant 0 : i32
    %c0_i32_1 = arith.constant 0 : i32
    return %c0_i32, %c0_i32_0 : i32, i32
  }
  func.func @transform_2(%arg0: i32) -> (i32, i32) {
    %c0_i32 = arith.constant 0 : i32
    %c0_i32_0 = arith.constant 0 : i32
    %c0_i32_1 = arith.constant 0 : i32
    return %c0_i32, %c0_i32_0 : i32, i32
  }
  func.func @transform_3(%arg0: i32) -> (i32, i32, i32) {
    %c0_i32 = arith.constant 0 : i32
    %c0_i32_0 = arith.constant 0 : i32
    %c0_i32_1 = arith.constant 0 : i32
    return %arg0, %c0_i32, %c0_i32_0 : i32, i32, i32
  }
  func.func @transform_4(%arg0: i32) -> (i32, i32, i32) {
    %c0_i32 = arith.constant 0 : i32
    %c0_i32_0 = arith.constant 0 : i32
    %c0_i32_1 = arith.constant 0 : i32
    return %arg0, %c0_i32, %c0_i32_0 : i32, i32, i32
  }
}

</mosaic_0001>

<llo_original>
// kernel: fwd.1
$region0: #{fwd.1}
  #allocation0 [shape = 'u32[]', space=smem, size = 0x4, offset = 0x4, fixed_abs, tag = 'smem constant byte address 0x4 - core index']
  #allocation1 [shape = 'u32[72,128]{1,0:T(1,128)}', space=vmem, size = 0x9000, scoped, tag = 'internal scratch']
  %s0 = inlined_call_operand.hbm [shape: f32[9,128,128], index: 0, kind: input, shape index: {}]
  %s1 = inlined_call_operand.vmem [shape: f32[128,2], index: 1, kind: input, shape index: {}]
  %s2 = inlined_call_operand.vmem [shape: f32[128,4], index: 2, kind: input, shape index: {}]
  %s3 = inlined_call_operand.hbm [shape: f32[2,456,128], index: 3, kind: input, shape index: {}]
  %s4 = inlined_call_operand.vmem [shape: f32[2,2,1], index: 4, kind: output, shape index: {}]
  %s5 = sld [smem:[#allocation0]]
  $region57: #{fwd.1} parent=0
    _
  %s7 = ssub.s32 1, %s5
  %s8 = scalar_select 0, %s7, %s5
  $region1: #{fwd.1} parent=0
    #allocation2 [shape = 'u8[589824]{0}', space=vmem, size = 0x90000, scoped, tag = 'input window, operand 0, single buffered']
    #allocation3 [shape = 's32[2]{0}', space=sflag, size = 0x8, scoped, tag = 'scoped memory for fwd.1']
    #allocation4 [shape = 'u8[466944]{0}', space=vmem, size = 0x72000, scoped, tag = 'input window, operand 3']
    #allocation5 [shape = 's32[2]{0}', space=sflag, size = 0x8, scoped, tag = 'scoped memory for fwd.1']
    %9 = vsyncpa [#allocation3], 0
    %10 = vsyncpa [#allocation5], 0
    %s11 = scalar_lea.sflag [#allocation5], 1
    %12 = vsyncpa %s11, 0
    loop: start=0, step=1, limit=4
    $region2: #{fwd.1} parent=1 // loop_pre_header
      _
    $region3: #{fwd.1} parent=1 // loop_header
      %s14 = sphi 0, %s18
      %p15 = scmp.ge.s32.totalorder %s14, 4
      %s22 = sphi 0, %s22
      %s24 = sphi 0, %s22
      %s25 = sphi 0, %s24
      %s39 = sphi 0, %s25
      %s43 = sphi 0, %s43
      %s45 = sphi 0, %s43
      %s46 = sphi 0, %s45
      %s60 = sphi 0, %s46
      %s64 = sphi 0, %s64
      %s66 = sphi 0, %s64
      %s67 = sphi 0, %s66
      %s81 = sphi 0, %s67
      %s87 = sphi 0, %s89
      %s90 = sphi 0, %s87
      %s91 = sphi 0, %s90
      %s107 = sphi 0, %s91
      %s113 = sphi 0, %s115
      %s116 = sphi 0, %s113
      %s117 = sphi 0, %s116
      %s133 = sphi 0, %s117
    $region4: #{fwd.1} parent=1 // loop_header_branch
      %17 = sbr.rel (%p15) target = $region8
    $region5: #{fwd.1} parent=1 // loop_body
      %s19 = ssub.s32 %s14, 1
      %s20 = ssub.s32 %s14, 2
      %s21 = sadd.s32 %s14, 1
      %s23 = sadd.s32 %s22, 1
      %p26 = scmp.eq.s32.totalorder %s14, 1
      %p27 = scmp.ne.s32.totalorder %s22, %s24
      %p28 = scmp.eq.s32.totalorder %s14, 0
      %p29 = por %p27, %p28
      %p30 = scmp.ne.s32.totalorder %s22, %s24
      %p31 = scmp.eq.s32.totalorder %s19, 1
      %p32 = por %p30, %p31
      %p33 = scmp.ne.s32.totalorder %s24, %s25
      %p34 = scmp.eq.s32.totalorder %s19, 0
      %p35 = por %p33, %p34
      %p36 = scmp.ne.s32.totalorder %s24, %s25
      %p37 = scmp.eq.s32.totalorder %s20, 1
      %p38 = por %p36, %p37
      %p40 = scmp.ne.s32.totalorder %s25, %s39
      %p41 = scmp.eq.s32.totalorder %s20, 0
      %p42 = por %p40, %p41
      %s44 = sadd.s32 %s43, 1
      %p47 = scmp.eq.s32.totalorder %s14, 1
      %p48 = scmp.ne.s32.totalorder %s43, %s45
      %p49 = scmp.eq.s32.totalorder %s14, 0
      %p50 = por %p48, %p49
      %p51 = scmp.ne.s32.totalorder %s43, %s45
      %p52 = scmp.eq.s32.totalorder %s19, 1
      %p53 = por %p51, %p52
      %p54 = scmp.ne.s32.totalorder %s45, %s46
      %p55 = scmp.eq.s32.totalorder %s19, 0
      %p56 = por %p54, %p55
      %p57 = scmp.ne.s32.totalorder %s45, %s46
      %p58 = scmp.eq.s32.totalorder %s20, 1
      %p59 = por %p57, %p58
      %p61 = scmp.ne.s32.totalorder %s46, %s60
      %p62 = scmp.eq.s32.totalorder %s20, 0
      %p63 = por %p61, %p62
      %s65 = sadd.s32 %s64, 1
      %p68 = scmp.eq.s32.totalorder %s14, 1
      %p69 = scmp.ne.s32.totalorder %s64, %s66
      %p70 = scmp.eq.s32.totalorder %s14, 0
      %p71 = por %p69, %p70
      %p72 = scmp.ne.s32.totalorder %s64, %s66
      %p73 = scmp.eq.s32.totalorder %s19, 1
      %p74 = por %p72, %p73
      %p75 = scmp.ne.s32.totalorder %s66, %s67
      %p76 = scmp.eq.s32.totalorder %s19, 0
      %p77 = por %p75, %p76
      %p78 = scmp.ne.s32.totalorder %s66, %s67
      %p79 = scmp.eq.s32.totalorder %s20, 1
      %p80 = por %p78, %p79
      %p82 = scmp.ne.s32.totalorder %s67, %s81
      %p83 = scmp.eq.s32.totalorder %s20, 0
      %p84 = por %p82, %p83
      %s85 = ssub.s32 %s14, %s21
      %p86 = scmp.eq.s32.totalorder %s85, 0
      %s88 = sadd.s32 %s87, 1
      %s89 = scalar_select %p86, %s87, %s88
      %p92 = pneg %p86
      %p93 = scmp.eq.s32.totalorder %s14, 1
      %p94 = por %p92, %p93
      %p95 = scmp.ne.s32.totalorder %s87, %s90
      %p96 = scmp.eq.s32.totalorder %s14, 0
      %p97 = por %p95, %p96
      %p98 = scmp.ne.s32.totalorder %s87, %s90
      %p99 = scmp.eq.s32.totalorder %s19, 1
      %p100 = por %p98, %p99
      %p101 = scmp.ne.s32.totalorder %s90, %s91
      %p102 = scmp.eq.s32.totalorder %s19, 0
      %p103 = por %p101, %p102
      %p104 = scmp.ne.s32.totalorder %s90, %s91
      %p105 = scmp.eq.s32.totalorder %s20, 1
      %p106 = por %p104, %p105
      %p108 = scmp.ne.s32.totalorder %s91, %s107
      %p109 = scmp.eq.s32.totalorder %s20, 0
      %p110 = por %p108, %p109
      %s111 = ssub.s32 %s14, %s21
      %p112 = scmp.eq.s32.totalorder %s111, 0
      %s114 = sadd.s32 %s113, 1
      %s115 = scalar_select %p112, %s113, %s114
      %p118 = pneg %p112
      %p119 = scmp.eq.s32.totalorder %s14, 1
      %p120 = por %p118, %p119
      %p121 = scmp.ne.s32.totalorder %s113, %s116
      %p122 = scmp.eq.s32.totalorder %s14, 0
      %p123 = por %p121, %p122
      %p124 = scmp.ne.s32.totalorder %s113, %s116
      %p125 = scmp.eq.s32.totalorder %s19, 1
      %p126 = por %p124, %p125
      %p127 = scmp.ne.s32.totalorder %s116, %s117
      %p128 = scmp.eq.s32.totalorder %s19, 0
      %p129 = por %p127, %p128
      %p130 = scmp.ne.s32.totalorder %s116, %s117
      %p131 = scmp.eq.s32.totalorder %s20, 1
      %p132 = por %p130, %p131
      %p134 = scmp.ne.s32.totalorder %s117, %s133
      %p135 = scmp.eq.s32.totalorder %s20, 0
      %p136 = por %p134, %p135
      %p137 = scmp.le.s32.totalorder 1, %s14
      %p138 = scmp.lt.s32.totalorder %s14, 3
      %p139 = pnand %p137, %p138
      %p140 = pneg %p139
      // Predicated region
      $region9: #{fwd.1} parent=5 // pred_check
        _
      $region10: #{fwd.1} parent=5 // pred_check_branch
        %142 = sbr.rel (%p139) target = $region12
      $region11: #{fwd.1} parent=5 // pred_region
        %s143 = ssub.s32 %s14, 1
        // Predicated region
        $region13: #{fwd.1} parent=11 // pred_check
          %p144 = pneg %p35
        $region14: #{fwd.1} parent=11 // pred_check_branch
          %146 = sbr.rel (%p144) target = $region16
        $region15: #{fwd.1} parent=11 // pred_region
          %148 = vsyncadd [#allocation3], 0
          %s149 = sshll.u32 %s0, 4
          %s150 = int_to_ptr.hbm [resolvable:$true] %s149
          %s151 = sshll.u32 [#allocation2], 4
          %s152 = int_to_ptr.vmem [resolvable:$true] %s151
          %157 = dma.hbm_to_vmem [thread:$0]  %s150, 18432, %s152, [#allocation3], 128, 128, 8
        $region16: #{fwd.1} parent=11 // pred_fallthru
          _
        // Predicated region
        $region17: #{fwd.1} parent=11 // pred_check
          %p158 = pneg %p56
        $region18: #{fwd.1} parent=11 // pred_check_branch
          %160 = sbr.rel (%p158) target = $region20
        $region19: #{fwd.1} parent=11 // pred_region
          _
        $region20: #{fwd.1} parent=11 // pred_fallthru
          _
        // Predicated region
        $region21: #{fwd.1} parent=11 // pred_check
          %p161 = pneg %p77
        $region22: #{fwd.1} parent=11 // pred_check_branch
          %163 = sbr.rel (%p161) target = $region24
        $region23: #{fwd.1} parent=11 // pred_region
          _
        $region24: #{fwd.1} parent=11 // pred_fallthru
          _
      $region12: #{fwd.1} parent=5 // pred_fallthru
        _
      %p164 = scmp.lt.s32.totalorder %s14, 2
      // Predicated region
      $region25: #{fwd.1} parent=5 // pred_check
        %p165 = pneg %p164
      $region26: #{fwd.1} parent=5 // pred_check_branch
        %167 = sbr.rel (%p165) target = $region28
      $region27: #{fwd.1} parent=5 // pred_region
        // Predicated region
        $region29: #{fwd.1} parent=27 // pred_check
          %p168 = pneg %p97
        $region30: #{fwd.1} parent=27 // pred_check_branch
          %170 = sbr.rel (%p168) target = $region32
        $region31: #{fwd.1} parent=27 // pred_region
          %s171 = sand.u32 %s87, 1
          %s172 = scalar_lea.sflag [#allocation5], %s171
          %s173 = sand.u32 %s87, 1
          %s174 = smul.addr %s173, 456
          %s175 = scalar_lea.vmem [#allocation4], %s174
          %177 = vsyncadd %s172, 0
          %s178 = smul.addr %s14, 57
          %s179 = smul.addr %s178, 8
          %s180 = scalar_lea.hbm %s3, %s179
          %s181 = sshll.u32 %s180, 4
          %s182 = int_to_ptr.hbm [resolvable:$true] %s181
          %s183 = sshll.u32 %s175, 4
          %s184 = int_to_ptr.vmem [resolvable:$true] %s183
          %189 = dma.hbm_to_vmem [thread:$0]  %s182, 7296, %s184, %s172, 128, 128, 8
        $region32: #{fwd.1} parent=27 // pred_fallthru
          _
      $region28: #{fwd.1} parent=5 // pred_fallthru
        _
      %p190 = scmp.le.s32.totalorder 1, %s14
      %p191 = scmp.lt.s32.totalorder %s14, 3
      %p192 = pnand %p190, %p191
      %p193 = pneg %p192
      // Predicated region
      $region33: #{fwd.1} parent=5 // pred_check
        _
      $region34: #{fwd.1} parent=5 // pred_check_branch
        %195 = sbr.rel (%p192) target = $region36
      $region35: #{fwd.1} parent=5 // pred_region
        %s196 = ssub.s32 %s14, 1
        // Predicated region
        $region37: #{fwd.1} parent=35 // pred_check
          %p197 = pneg %p35
        $region38: #{fwd.1} parent=35 // pred_check_branch
          %199 = sbr.rel (%p197) target = $region40
        $region39: #{fwd.1} parent=35 // pred_region
          %201 = dma.done [#allocation3], 18432
        $region40: #{fwd.1} parent=35 // pred_fallthru
          _
        %s202 = sand.u32 %s90, 1
        %s203 = scalar_lea.sflag [#allocation5], %s202
        %s204 = sand.u32 %s90, 1
        %s205 = smul.addr %s204, 456
        %s206 = scalar_lea.vmem [#allocation4], %s205
        // Predicated region
        $region41: #{fwd.1} parent=35 // pred_check
          %p207 = pneg %p103
        $region42: #{fwd.1} parent=35 // pred_check_branch
          %209 = sbr.rel (%p207) target = $region44
        $region43: #{fwd.1} parent=35 // pred_region
          %211 = dma.done %s203, 7296
        $region44: #{fwd.1} parent=35 // pred_fallthru
          _
        %p212 = pneg %p35
        %p213 = pneg %p32
        %p214 = pneg %p56
        %p215 = pneg %p53
        %p216 = pneg %p77
        %p217 = pneg %p74
        %s218 = sand.u32 %s90, 1
        %s219 = scalar_lea.sflag [#allocation5], %s218
        %s220 = sand.u32 %s90, 1
        %s221 = smul.addr %s220, 456
        %s222 = scalar_lea.vmem [#allocation4], %s221
        %p223 = pneg %p103
        %p224 = pneg %p100
        %p225 = pneg %p129
        %p226 = pneg %p126
        %p227 = scmp.lt.s32.totalorder %s19, 1
        %s228 = scalar_select %p227, %s19, 1
        %s229 = smul.addr %s228, 2
        %s230 = scalar_lea.vmem %s4, %s229
        %p231 = scmp.lt.s32.totalorder %s19, 1
        %s232 = scalar_select %p231, %s19, 1
        %s233 = smul.addr %s232, 2
        %s234 = scalar_lea.vmem %s4, %s233
        %v235 = vld [vmem:[%s2] sm:$0xff]
        %v236 = vld [vmem:[%s2 + $0x8] sm:$0xff]
        %v237 = vld [vmem:[%s2 + $0x10] sm:$0xff]
        %v238 = vld [vmem:[%s2 + $0x18] sm:$0xff]
        %v239 = vld [vmem:[%s2 + $0x20] sm:$0xff]
        %v240 = vld [vmem:[%s2 + $0x28] sm:$0xff]
        %v241 = vld [vmem:[%s2 + $0x30] sm:$0xff]
        %v242 = vld [vmem:[%s2 + $0x38] sm:$0xff]
        %v243 = vld [vmem:[%s2 + $0x40] sm:$0xff]
        %v244 = vld [vmem:[%s2 + $0x48] sm:$0xff]
        %v245 = vld [vmem:[%s2 + $0x50] sm:$0xff]
        %v246 = vld [vmem:[%s2 + $0x58] sm:$0xff]
        %v247 = vld [vmem:[%s2 + $0x60] sm:$0xff]
        %v248 = vld [vmem:[%s2 + $0x68] sm:$0xff]
        %v249 = vld [vmem:[%s2 + $0x70] sm:$0xff]
        %v250 = vld [vmem:[%s2 + $0x78] sm:$0xff]
        %v251 = vld [vmem:[%s206] sm:$0xf]
        %v252 = vld [vmem:[%s206 + $0x8] sm:$0x1]
        %vm253 = vcmask 31744
        %v255 = vsel %vm253, %v235, 0
        %v258 = vsel %vm253, %v236, 0
        %v261 = vsel %vm253, %v237, 0
        %v264 = vsel %vm253, %v238, 0
        %v267 = vsel %vm253, %v239, 0
        %v270 = vsel %vm253, %v240, 0
        %v273 = vsel %vm253, %v241, 0
        %v276 = vsel %vm253, %v242, 0
        %v279 = vsel %vm253, %v243, 0
        %v282 = vsel %vm253, %v244, 0
        %v285 = vsel %vm253, %v245, 0
        %v288 = vsel %vm253, %v246, 0
        %v291 = vsel %vm253, %v247, 0
        %v294 = vsel %vm253, %v248, 0
        %v297 = vsel %vm253, %v249, 0
        %v300 = vsel %vm253, %v250, 0
        %vm302 = vcmask 1043456
        %v304 = vsel %vm302, %v251, 0
        %306 = vmatpush.msra.mxu0 0.0
        %307 = vmatpush.msra.mxu0 0.0
        %308 = vmatpush.msra.mxu0 0.0
        %309 = vmatpush.msra.mxu0 0.0
        %310 = vmatpush.msra.mxu0 0.0
        %311 = vmatpush.msra.mxu0 0.0
        %312 = vmatpush.msra.mxu0 0.0
        %313 = vmatpush.msra.mxu0 0.0
        %314 = vmatpush.msra.mxu0 0.0
        %315 = vmatpush.msra.mxu0 0.0
        %316 = vmatpush.msra.mxu0 0.0
        %317 = vmatpush.msra.mxu0 0.0
        %318 = vmatpush.msra.mxu0 0.0
        %319 = vmatpush.msra.mxu0 0.0
        %320 = vmatpush.msra.mxu0 0.0
        %321 = vmatpush.msra.mxu0 %v304
        %322 = vmatmul.f32.gmra.mxu0 %v255
        %v323 = vpop.f32.mrf.mxu0
        %v324 = vadd.f32 0.0, %v323
        %325 = vmatmul.f32.gmra.mxu0 %v258
        %v326 = vpop.f32.mrf.mxu0
        %v327 = vadd.f32 0.0, %v326
        %328 = vmatmul.f32.gmra.mxu0 %v261
        %v329 = vpop.f32.mrf.mxu0
        %v330 = vadd.f32 0.0, %v329
        %331 = vmatmul.f32.gmra.mxu0 %v264
        %v332 = vpop.f32.mrf.mxu0
        %v333 = vadd.f32 0.0, %v332
        %334 = vmatmul.f32.gmra.mxu0 %v267
        %v335 = vpop.f32.mrf.mxu0
        %v336 = vadd.f32 0.0, %v335
        %337 = vmatmul.f32.gmra.mxu0 %v270
        %v338 = vpop.f32.mrf.mxu0
        %v339 = vadd.f32 0.0, %v338
        %340 = vmatmul.f32.gmra.mxu0 %v273
        %v341 = vpop.f32.mrf.mxu0
        %v342 = vadd.f32 0.0, %v341
        %343 = vmatmul.f32.gmra.mxu0 %v276
        %v344 = vpop.f32.mrf.mxu0
        %v345 = vadd.f32 0.0, %v344
        %346 = vmatmul.f32.gmra.mxu0 %v279
        %v347 = vpop.f32.mrf.mxu0
        %v348 = vadd.f32 0.0, %v347
        %349 = vmatmul.f32.gmra.mxu0 %v282
        %v350 = vpop.f32.mrf.mxu0
        %v351 = vadd.f32 0.0, %v350
        %352 = vmatmul.f32.gmra.mxu0 %v285
        %v353 = vpop.f32.mrf.mxu0
        %v354 = vadd.f32 0.0, %v353
        %355 = vmatmul.f32.gmra.mxu0 %v288
        %v356 = vpop.f32.mrf.mxu0
        %v357 = vadd.f32 0.0, %v356
        %358 = vmatmul.f32.gmra.mxu0 %v291
        %v359 = vpop.f32.mrf.mxu0
        %v360 = vadd.f32 0.0, %v359
        %361 = vmatmul.f32.gmra.mxu0 %v294
        %v362 = vpop.f32.mrf.mxu0
        %v363 = vadd.f32 0.0, %v362
        %364 = vmatmul.f32.gmra.mxu0 %v297
        %v365 = vpop.f32.mrf.mxu0
        %v366 = vadd.f32 0.0, %v365
        %367 = vmatmul.f32.gmra.mxu0 %v300
        %v368 = vpop.f32.mrf.mxu0
        %v369 = vadd.f32 0.0, %v368
        %370 = vdwg.mxu0
        %v371 = vperm.slane %v252, 0
        %v372 = vadd.f32 %v371, 0.0
        %v373 = vld [vmem:[#allocation2] sm:$0xff]
        %v374 = vld [vmem:[#allocation2 + $0x8] sm:$0xff]
        %v375 = vld [vmem:[#allocation2 + $0x10] sm:$0xff]
        %v376 = vld [vmem:[#allocation2 + $0x18] sm:$0xff]
        %v377 = vld [vmem:[#allocation2 + $0x20] sm:$0xff]
        %v378 = vld [vmem:[#allocation2 + $0x28] sm:$0xff]
        %v379 = vld [vmem:[#allocation2 + $0x30] sm:$0xff]
        %v380 = vld [vmem:[#allocation2 + $0x38] sm:$0xff]
        %v381 = vld [vmem:[#allocation2 + $0x40] sm:$0xff]
        %v382 = vld [vmem:[#allocation2 + $0x48] sm:$0xff]
        %v383 = vld [vmem:[#allocation2 + $0x50] sm:$0xff]
        %v384 = vld [vmem:[#allocation2 + $0x58] sm:$0xff]
        %v385 = vld [vmem:[#allocation2 + $0x60] sm:$0xff]
        %v386 = vld [vmem:[#allocation2 + $0x68] sm:$0xff]
        %v387 = vld [vmem:[#allocation2 + $0x70] sm:$0xff]
        %v388 = vld [vmem:[#allocation2 + $0x78] sm:$0xff]
        %389 = vmatpush.msra.mxu0 %v369
        %390 = vmatpush.msra.mxu0 %v366
        %391 = vmatpush.msra.mxu0 %v363
        %392 = vmatpush.msra.mxu0 %v360
        %393 = vmatpush.msra.mxu0 %v357
        %394 = vmatpush.msra.mxu0 %v354
        %395 = vmatpush.msra.mxu0 %v351
        %396 = vmatpush.msra.mxu0 %v348
        %397 = vmatpush.msra.mxu0 %v345
        %398 = vmatpush.msra.mxu0 %v342
        %399 = vmatpush.msra.mxu0 %v339
        %400 = vmatpush.msra.mxu0 %v336
        %401 = vmatpush.msra.mxu0 %v333
        %402 = vmatpush.msra.mxu0 %v330
        %403 = vmatpush.msra.mxu0 %v327
        %404 = vmatpush.msra.mxu0 %v324
        %405 = vmatmul.f32.gmra.mxu0 %v373
        %v406 = vpop.f32.mrf.mxu0
        %v407 = vadd.f32 0.0, %v406
        %408 = vmatmul.f32.gmra.mxu0 %v374
        %v409 = vpop.f32.mrf.mxu0
        %v410 = vadd.f32 0.0, %v409
        %411 = vmatmul.f32.gmra.mxu0 %v375
        %v412 = vpop.f32.mrf.mxu0
        %v413 = vadd.f32 0.0, %v412
        %414 = vmatmul.f32.gmra.mxu0 %v376
        %v415 = vpop.f32.mrf.mxu0
        %v416 = vadd.f32 0.0, %v415
        %417 = vmatmul.f32.gmra.mxu0 %v377
        %v418 = vpop.f32.mrf.mxu0
        %v419 = vadd.f32 0.0, %v418
        %420 = vmatmul.f32.gmra.mxu0 %v378
        %v421 = vpop.f32.mrf.mxu0
        %v422 = vadd.f32 0.0, %v421
        %423 = vmatmul.f32.gmra.mxu0 %v379
        %v424 = vpop.f32.mrf.mxu0
        %v425 = vadd.f32 0.0, %v424
        %426 = vmatmul.f32.gmra.mxu0 %v380
        %v427 = vpop.f32.mrf.mxu0
        %v428 = vadd.f32 0.0, %v427
        %429 = vmatmul.f32.gmra.mxu0 %v381
        %v430 = vpop.f32.mrf.mxu0
        %v431 = vadd.f32 0.0, %v430
        %432 = vmatmul.f32.gmra.mxu0 %v382
        %v433 = vpop.f32.mrf.mxu0
        %v434 = vadd.f32 0.0, %v433
        %435 = vmatmul.f32.gmra.mxu0 %v383
        %v436 = vpop.f32.mrf.mxu0
        %v437 = vadd.f32 0.0, %v436
        %438 = vmatmul.f32.gmra.mxu0 %v384
        %v439 = vpop.f32.mrf.mxu0
        %v440 = vadd.f32 0.0, %v439
        %441 = vmatmul.f32.gmra.mxu0 %v385
        %v442 = vpop.f32.mrf.mxu0
        %v443 = vadd.f32 0.0, %v442
        %444 = vmatmul.f32.gmra.mxu0 %v386
        %v445 = vpop.f32.mrf.mxu0
        %v446 = vadd.f32 0.0, %v445
        %447 = vmatmul.f32.gmra.mxu0 %v387
        %v448 = vpop.f32.mrf.mxu0
        %v449 = vadd.f32 0.0, %v448
        %450 = vmatmul.f32.gmra.mxu0 %v388
        %v451 = vpop.f32.mrf.mxu0
        %v452 = vadd.f32 0.0, %v451
        %453 = vdwg.mxu0
        %v454 = vadd.f32 %v372, %v407
        %v455 = vadd.f32 %v372, %v410
        %v456 = vadd.f32 %v372, %v413
        %v457 = vadd.f32 %v372, %v416
        %v458 = vadd.f32 %v372, %v419
        %v459 = vadd.f32 %v372, %v422
        %v460 = vadd.f32 %v372, %v425
        %v461 = vadd.f32 %v372, %v428
        %v462 = vadd.f32 %v372, %v431
        %v463 = vadd.f32 %v372, %v434
        %v464 = vadd.f32 %v372, %v437
        %v465 = vadd.f32 %v372, %v440
        %v466 = vadd.f32 %v372, %v443
        %v467 = vadd.f32 %v372, %v446
        %v468 = vadd.f32 %v372, %v449
        %v469 = vadd.f32 %v372, %v452
        %s470 = scalar_lea.vmem [#allocation2], 128
        %v471 = vld [vmem:[%s470] sm:$0xff]
        %v472 = vld [vmem:[%s470 + $0x8] sm:$0xff]
        %v473 = vld [vmem:[%s470 + $0x10] sm:$0xff]
        %v474 = vld [vmem:[%s470 + $0x18] sm:$0xff]
        %v475 = vld [vmem:[%s470 + $0x20] sm:$0xff]
        %v476 = vld [vmem:[%s470 + $0x28] sm:$0xff]
        %v477 = vld [vmem:[%s470 + $0x30] sm:$0xff]
        %v478 = vld [vmem:[%s470 + $0x38] sm:$0xff]
        %v479 = vld [vmem:[%s470 + $0x40] sm:$0xff]
        %v480 = vld [vmem:[%s470 + $0x48] sm:$0xff]
        %v481 = vld [vmem:[%s470 + $0x50] sm:$0xff]
        %v482 = vld [vmem:[%s470 + $0x58] sm:$0xff]
        %v483 = vld [vmem:[%s470 + $0x60] sm:$0xff]
        %v484 = vld [vmem:[%s470 + $0x68] sm:$0xff]
        %v485 = vld [vmem:[%s470 + $0x70] sm:$0xff]
        %v486 = vld [vmem:[%s470 + $0x78] sm:$0xff]
        %503 = vrot.lane.b32.xlu0 %v324, 120
        %v504 = vpop.permute.xlu0 %503
        %505 = vrot.lane.b32.xlu0 %v327, 120
        %v506 = vpop.permute.xlu0 %505
        %507 = vrot.lane.b32.xlu0 %v330, 120
        %v508 = vpop.permute.xlu0 %507
        %509 = vrot.lane.b32.xlu0 %v333, 120
        %v510 = vpop.permute.xlu0 %509
        %511 = vrot.lane.b32.xlu0 %v336, 120
        %v512 = vpop.permute.xlu0 %511
        %513 = vrot.lane.b32.xlu0 %v339, 120
        %v514 = vpop.permute.xlu0 %513
        %515 = vrot.lane.b32.xlu0 %v342, 120
        %v516 = vpop.permute.xlu0 %515
        %517 = vrot.lane.b32.xlu0 %v345, 120
        %v518 = vpop.permute.xlu0 %517
        %519 = vrot.lane.b32.xlu0 %v348, 120
        %v520 = vpop.permute.xlu0 %519
        %521 = vrot.lane.b32.xlu0 %v351, 120
        %v522 = vpop.permute.xlu0 %521
        %523 = vrot.lane.b32.xlu0 %v354, 120
        %v524 = vpop.permute.xlu0 %523
        %525 = vrot.lane.b32.xlu0 %v357, 120
        %v526 = vpop.permute.xlu0 %525
        %527 = vrot.lane.b32.xlu0 %v360, 120
        %v528 = vpop.permute.xlu0 %527
        %529 = vrot.lane.b32.xlu0 %v363, 120
        %v530 = vpop.permute.xlu0 %529
        %531 = vrot.lane.b32.xlu0 %v366, 120
        %v532 = vpop.permute.xlu0 %531
        %533 = vrot.lane.b32.xlu0 %v369, 120
        %v534 = vpop.permute.xlu0 %533
        %551 = vmatpush.msra.mxu0 %v534
        %552 = vmatpush.msra.mxu0 %v532
        %553 = vmatpush.msra.mxu0 %v530
        %554 = vmatpush.msra.mxu0 %v528
        %555 = vmatpush.msra.mxu0 %v526
        %556 = vmatpush.msra.mxu0 %v524
        %557 = vmatpush.msra.mxu0 %v522
        %558 = vmatpush.msra.mxu0 %v520
        %559 = vmatpush.msra.mxu0 %v518
        %560 = vmatpush.msra.mxu0 %v516
        %561 = vmatpush.msra.mxu0 %v514
        %562 = vmatpush.msra.mxu0 %v512
        %563 = vmatpush.msra.mxu0 %v510
        %564 = vmatpush.msra.mxu0 %v508
        %565 = vmatpush.msra.mxu0 %v506
        %566 = vmatpush.msra.mxu0 %v504
        %567 = vmatmul.f32.gmra.mxu0 %v471
        %v568 = vpop.f32.mrf.mxu0
        %v569 = vadd.f32 0.0, %v568
        %570 = vmatmul.f32.gmra.mxu0 %v472
        %v571 = vpop.f32.mrf.mxu0
        %v572 = vadd.f32 0.0, %v571
        %573 = vmatmul.f32.gmra.mxu0 %v473
        %v574 = vpop.f32.mrf.mxu0
        %v575 = vadd.f32 0.0, %v574
        %576 = vmatmul.f32.gmra.mxu0 %v474
        %v577 = vpop.f32.mrf.mxu0
        %v578 = vadd.f32 0.0, %v577
        %579 = vmatmul.f32.gmra.mxu0 %v475
        %v580 = vpop.f32.mrf.mxu0
        %v581 = vadd.f32 0.0, %v580
        %582 = vmatmul.f32.gmra.mxu0 %v476
        %v583 = vpop.f32.mrf.mxu0
        %v584 = vadd.f32 0.0, %v583
        %585 = vmatmul.f32.gmra.mxu0 %v477
        %v586 = vpop.f32.mrf.mxu0
        %v587 = vadd.f32 0.0, %v586
        %588 = vmatmul.f32.gmra.mxu0 %v478
        %v589 = vpop.f32.mrf.mxu0
        %v590 = vadd.f32 0.0, %v589
        %591 = vmatmul.f32.gmra.mxu0 %v479
        %v592 = vpop.f32.mrf.mxu0
        %v593 = vadd.f32 0.0, %v592
        %594 = vmatmul.f32.gmra.mxu0 %v480
        %v595 = vpop.f32.mrf.mxu0
        %v596 = vadd.f32 0.0, %v595
        %597 = vmatmul.f32.gmra.mxu0 %v481
        %v598 = vpop.f32.mrf.mxu0
        %v599 = vadd.f32 0.0, %v598
        %600 = vmatmul.f32.gmra.mxu0 %v482
        %v601 = vpop.f32.mrf.mxu0
        %v602 = vadd.f32 0.0, %v601
        %603 = vmatmul.f32.gmra.mxu0 %v483
        %v604 = vpop.f32.mrf.mxu0
        %v605 = vadd.f32 0.0, %v604
        %606 = vmatmul.f32.gmra.mxu0 %v484
        %v607 = vpop.f32.mrf.mxu0
        %v608 = vadd.f32 0.0, %v607
        %609 = vmatmul.f32.gmra.mxu0 %v485
        %v610 = vpop.f32.mrf.mxu0
        %v611 = vadd.f32 0.0, %v610
        %612 = vmatmul.f32.gmra.mxu0 %v486
        %v613 = vpop.f32.mrf.mxu0
        %v614 = vadd.f32 0.0, %v613
        %615 = vdwg.mxu0
        %v616 = vadd.f32 %v454, %v569
        %v617 = vadd.f32 %v455, %v572
        %v618 = vadd.f32 %v456, %v575
        %v619 = vadd.f32 %v457, %v578
        %v620 = vadd.f32 %v458, %v581
        %v621 = vadd.f32 %v459, %v584
        %v622 = vadd.f32 %v460, %v587
        %v623 = vadd.f32 %v461, %v590
        %v624 = vadd.f32 %v462, %v593
        %v625 = vadd.f32 %v463, %v596
        %v626 = vadd.f32 %v464, %v599
        %v627 = vadd.f32 %v465, %v602
        %v628 = vadd.f32 %v466, %v605
        %v629 = vadd.f32 %v467, %v608
        %v630 = vadd.f32 %v468, %v611
        %v631 = vadd.f32 %v469, %v614
        %s632 = scalar_lea.vmem [#allocation2], 256
        %v633 = vld [vmem:[%s632] sm:$0xff]
        %v634 = vld [vmem:[%s632 + $0x8] sm:$0xff]
        %v635 = vld [vmem:[%s632 + $0x10] sm:$0xff]
        %v636 = vld [vmem:[%s632 + $0x18] sm:$0xff]
        %v637 = vld [vmem:[%s632 + $0x20] sm:$0xff]
        %v638 = vld [vmem:[%s632 + $0x28] sm:$0xff]
        %v639 = vld [vmem:[%s632 + $0x30] sm:$0xff]
        %v640 = vld [vmem:[%s632 + $0x38] sm:$0xff]
        %v641 = vld [vmem:[%s632 + $0x40] sm:$0xff]
        %v642 = vld [vmem:[%s632 + $0x48] sm:$0xff]
        %v643 = vld [vmem:[%s632 + $0x50] sm:$0xff]
        %v644 = vld [vmem:[%s632 + $0x58] sm:$0xff]
        %v645 = vld [vmem:[%s632 + $0x60] sm:$0xff]
        %v646 = vld [vmem:[%s632 + $0x68] sm:$0xff]
        %v647 = vld [vmem:[%s632 + $0x70] sm:$0xff]
        %v648 = vld [vmem:[%s632 + $0x78] sm:$0xff]
        %649 = vrot.lane.b32.xlu0 %v324, 112
        %v650 = vpop.permute.xlu0 %649
        %651 = vrot.lane.b32.xlu0 %v327, 112
        %v652 = vpop.permute.xlu0 %651
        %653 = vrot.lane.b32.xlu0 %v330, 112
        %v654 = vpop.permute.xlu0 %653
        %655 = vrot.lane.b32.xlu0 %v333, 112
        %v656 = vpop.permute.xlu0 %655
        %657 = vrot.lane.b32.xlu0 %v336, 112
        %v658 = vpop.permute.xlu0 %657
        %659 = vrot.lane.b32.xlu0 %v339, 112
        %v660 = vpop.permute.xlu0 %659
        %661 = vrot.lane.b32.xlu0 %v342, 112
        %v662 = vpop.permute.xlu0 %661
        %663 = vrot.lane.b32.xlu0 %v345, 112
        %v664 = vpop.permute.xlu0 %663
        %665 = vrot.lane.b32.xlu0 %v348, 112
        %v666 = vpop.permute.xlu0 %665
        %667 = vrot.lane.b32.xlu0 %v351, 112
        %v668 = vpop.permute.xlu0 %667
        %669 = vrot.lane.b32.xlu0 %v354, 112
        %v670 = vpop.permute.xlu0 %669
        %671 = vrot.lane.b32.xlu0 %v357, 112
        %v672 = vpop.permute.xlu0 %671
        %673 = vrot.lane.b32.xlu0 %v360, 112
        %v674 = vpop.permute.xlu0 %673
        %675 = vrot.lane.b32.xlu0 %v363, 112
        %v676 = vpop.permute.xlu0 %675
        %677 = vrot.lane.b32.xlu0 %v366, 112
        %v678 = vpop.permute.xlu0 %677
        %679 = vrot.lane.b32.xlu0 %v369, 112
        %v680 = vpop.permute.xlu0 %679
        %697 = vmatpush.msra.mxu0 %v680
        %698 = vmatpush.msra.mxu0 %v678
        %699 = vmatpush.msra.mxu0 %v676
        %700 = vmatpush.msra.mxu0 %v674
        %701 = vmatpush.msra.mxu0 %v672
        %702 = vmatpush.msra.mxu0 %v670
        %703 = vmatpush.msra.mxu0 %v668
        %704 = vmatpush.msra.mxu0 %v666
        %705 = vmatpush.msra.mxu0 %v664
        %706 = vmatpush.msra.mxu0 %v662
        %707 = vmatpush.msra.mxu0 %v660
        %708 = vmatpush.msra.mxu0 %v658
        %709 = vmatpush.msra.mxu0 %v656
        %710 = vmatpush.msra.mxu0 %v654
        %711 = vmatpush.msra.mxu0 %v652
        %712 = vmatpush.msra.mxu0 %v650
        %713 = vmatmul.f32.gmra.mxu0 %v633
        %v714 = vpop.f32.mrf.mxu0
        %v715 = vadd.f32 0.0, %v714
        %716 = vmatmul.f32.gmra.mxu0 %v634
        %v717 = vpop.f32.mrf.mxu0
        %v718 = vadd.f32 0.0, %v717
        %719 = vmatmul.f32.gmra.mxu0 %v635
        %v720 = vpop.f32.mrf.mxu0
        %v721 = vadd.f32 0.0, %v720
        %722 = vmatmul.f32.gmra.mxu0 %v636
        %v723 = vpop.f32.mrf.mxu0
        %v724 = vadd.f32 0.0, %v723
        %725 = vmatmul.f32.gmra.mxu0 %v637
        %v726 = vpop.f32.mrf.mxu0
        %v727 = vadd.f32 0.0, %v726
        %728 = vmatmul.f32.gmra.mxu0 %v638
        %v729 = vpop.f32.mrf.mxu0
        %v730 = vadd.f32 0.0, %v729
        %731 = vmatmul.f32.gmra.mxu0 %v639
        %v732 = vpop.f32.mrf.mxu0
        %v733 = vadd.f32 0.0, %v732
        %734 = vmatmul.f32.gmra.mxu0 %v640
        %v735 = vpop.f32.mrf.mxu0
        %v736 = vadd.f32 0.0, %v735
        %737 = vmatmul.f32.gmra.mxu0 %v641
        %v738 = vpop.f32.mrf.mxu0
        %v739 = vadd.f32 0.0, %v738
        %740 = vmatmul.f32.gmra.mxu0 %v642
        %v741 = vpop.f32.mrf.mxu0
        %v742 = vadd.f32 0.0, %v741
        %743 = vmatmul.f32.gmra.mxu0 %v643
        %v744 = vpop.f32.mrf.mxu0
        %v745 = vadd.f32 0.0, %v744
        %746 = vmatmul.f32.gmra.mxu0 %v644
        %v747 = vpop.f32.mrf.mxu0
        %v748 = vadd.f32 0.0, %v747
        %749 = vmatmul.f32.gmra.mxu0 %v645
        %v750 = vpop.f32.mrf.mxu0
        %v751 = vadd.f32 0.0, %v750
        %752 = vmatmul.f32.gmra.mxu0 %v646
        %v753 = vpop.f32.mrf.mxu0
        %v754 = vadd.f32 0.0, %v753
        %755 = vmatmul.f32.gmra.mxu0 %v647
        %v756 = vpop.f32.mrf.mxu0
        %v757 = vadd.f32 0.0, %v756
        %758 = vmatmul.f32.gmra.mxu0 %v648
        %v759 = vpop.f32.mrf.mxu0
        %v760 = vadd.f32 0.0, %v759
        %761 = vdwg.mxu0
        %v762 = vadd.f32 %v616, %v715
        %v763 = vadd.f32 %v617, %v718
        %v764 = vadd.f32 %v618, %v721
        %v765 = vadd.f32 %v619, %v724
        %v766 = vadd.f32 %v620, %v727
        %v767 = vadd.f32 %v621, %v730
        %v768 = vadd.f32 %v622, %v733
        %v769 = vadd.f32 %v623, %v736
        %v770 = vadd.f32 %v624, %v739
        %v771 = vadd.f32 %v625, %v742
        %v772 = vadd.f32 %v626, %v745
        %v773 = vadd.f32 %v627, %v748
        %v774 = vadd.f32 %v628, %v751
        %v775 = vadd.f32 %v629, %v754
        %v776 = vadd.f32 %v630, %v757
        %v777 = vadd.f32 %v631, %v760
        %s778 = scalar_lea.vmem [#allocation2], 384
        %v779 = vld [vmem:[%s778] sm:$0xff]
        %v780 = vld [vmem:[%s778 + $0x8] sm:$0xff]
        %v781 = vld [vmem:[%s778 + $0x10] sm:$0xff]
        %v782 = vld [vmem:[%s778 + $0x18] sm:$0xff]
        %v783 = vld [vmem:[%s778 + $0x20] sm:$0xff]
        %v784 = vld [vmem:[%s778 + $0x28] sm:$0xff]
        %v785 = vld [vmem:[%s778 + $0x30] sm:$0xff]
        %v786 = vld [vmem:[%s778 + $0x38] sm:$0xff]
        %v787 = vld [vmem:[%s778 + $0x40] sm:$0xff]
        %v788 = vld [vmem:[%s778 + $0x48] sm:$0xff]
        %v789 = vld [vmem:[%s778 + $0x50] sm:$0xff]
        %v790 = vld [vmem:[%s778 + $0x58] sm:$0xff]
        %v791 = vld [vmem:[%s778 + $0x60] sm:$0xff]
        %v792 = vld [vmem:[%s778 + $0x68] sm:$0xff]
        %v793 = vld [vmem:[%s778 + $0x70] sm:$0xff]
        %v794 = vld [vmem:[%s778 + $0x78] sm:$0xff]
        %795 = vrot.lane.b32.xlu0 %v324, 104
        %v796 = vpop.permute.xlu0 %795
        %797 = vrot.lane.b32.xlu0 %v327, 104
        %v798 = vpop.permute.xlu0 %797
        %799 = vrot.lane.b32.xlu0 %v330, 104
        %v800 = vpop.permute.xlu0 %799
        %801 = vrot.lane.b32.xlu0 %v333, 104
        %v802 = vpop.permute.xlu0 %801
        %803 = vrot.lane.b32.xlu0 %v336, 104
        %v804 = vpop.permute.xlu0 %803
        %805 = vrot.lane.b32.xlu0 %v339, 104
        %v806 = vpop.permute.xlu0 %805
        %807 = vrot.lane.b32.xlu0 %v342, 104
        %v808 = vpop.permute.xlu0 %807
        %809 = vrot.lane.b32.xlu0 %v345, 104
        %v810 = vpop.permute.xlu0 %809
        %811 = vrot.lane.b32.xlu0 %v348, 104
        %v812 = vpop.permute.xlu0 %811
        %813 = vrot.lane.b32.xlu0 %v351, 104
        %v814 = vpop.permute.xlu0 %813
        %815 = vrot.lane.b32.xlu0 %v354, 104
        %v816 = vpop.permute.xlu0 %815
        %817 = vrot.lane.b32.xlu0 %v357, 104
        %v818 = vpop.permute.xlu0 %817
        %819 = vrot.lane.b32.xlu0 %v360, 104
        %v820 = vpop.permute.xlu0 %819
        %821 = vrot.lane.b32.xlu0 %v363, 104
        %v822 = vpop.permute.xlu0 %821
        %823 = vrot.lane.b32.xlu0 %v366, 104
        %v824 = vpop.permute.xlu0 %823
        %825 = vrot.lane.b32.xlu0 %v369, 104
        %v826 = vpop.permute.xlu0 %825
        %843 = vmatpush.msra.mxu0 %v826
        %844 = vmatpush.msra.mxu0 %v824
        %845 = vmatpush.msra.mxu0 %v822
        %846 = vmatpush.msra.mxu0 %v820
        %847 = vmatpush.msra.mxu0 %v818
        %848 = vmatpush.msra.mxu0 %v816
        %849 = vmatpush.msra.mxu0 %v814
        %850 = vmatpush.msra.mxu0 %v812
        %851 = vmatpush.msra.mxu0 %v810
        %852 = vmatpush.msra.mxu0 %v808
        %853 = vmatpush.msra.mxu0 %v806
        %854 = vmatpush.msra.mxu0 %v804
        %855 = vmatpush.msra.mxu0 %v802
        %856 = vmatpush.msra.mxu0 %v800
        %857 = vmatpush.msra.mxu0 %v798
        %858 = vmatpush.msra.mxu0 %v796
        %859 = vmatmul.f32.gmra.mxu0 %v779
        %v860 = vpop.f32.mrf.mxu0
        %v861 = vadd.f32 0.0, %v860
        %862 = vmatmul.f32.gmra.mxu0 %v780
        %v863 = vpop.f32.mrf.mxu0
        %v864 = vadd.f32 0.0, %v863
        %865 = vmatmul.f32.gmra.mxu0 %v781
        %v866 = vpop.f32.mrf.mxu0
        %v867 = vadd.f32 0.0, %v866
        %868 = vmatmul.f32.gmra.mxu0 %v782
        %v869 = vpop.f32.mrf.mxu0
        %v870 = vadd.f32 0.0, %v869
        %871 = vmatmul.f32.gmra.mxu0 %v783
        %v872 = vpop.f32.mrf.mxu0
        %v873 = vadd.f32 0.0, %v872
        %874 = vmatmul.f32.gmra.mxu0 %v784
        %v875 = vpop.f32.mrf.mxu0
        %v876 = vadd.f32 0.0, %v875
        %877 = vmatmul.f32.gmra.mxu0 %v785
        %v878 = vpop.f32.mrf.mxu0
        %v879 = vadd.f32 0.0, %v878
        %880 = vmatmul.f32.gmra.mxu0 %v786
        %v881 = vpop.f32.mrf.mxu0
        %v882 = vadd.f32 0.0, %v881
        %883 = vmatmul.f32.gmra.mxu0 %v787
        %v884 = vpop.f32.mrf.mxu0
        %v885 = vadd.f32 0.0, %v884
        %886 = vmatmul.f32.gmra.mxu0 %v788
        %v887 = vpop.f32.mrf.mxu0
        %v888 = vadd.f32 0.0, %v887
        %889 = vmatmul.f32.gmra.mxu0 %v789
        %v890 = vpop.f32.mrf.mxu0
        %v891 = vadd.f32 0.0, %v890
        %892 = vmatmul.f32.gmra.mxu0 %v790
        %v893 = vpop.f32.mrf.mxu0
        %v894 = vadd.f32 0.0, %v893
        %895 = vmatmul.f32.gmra.mxu0 %v791
        %v896 = vpop.f32.mrf.mxu0
        %v897 = vadd.f32 0.0, %v896
        %898 = vmatmul.f32.gmra.mxu0 %v792
        %v899 = vpop.f32.mrf.mxu0
        %v900 = vadd.f32 0.0, %v899
        %901 = vmatmul.f32.gmra.mxu0 %v793
        %v902 = vpop.f32.mrf.mxu0
        %v903 = vadd.f32 0.0, %v902
        %904 = vmatmul.f32.gmra.mxu0 %v794
        %v905 = vpop.f32.mrf.mxu0
        %v906 = vadd.f32 0.0, %v905
        %907 = vdwg.mxu0
        %v908 = vadd.f32 %v762, %v861
        %v909 = vadd.f32 %v763, %v864
        %v910 = vadd.f32 %v764, %v867
        %v911 = vadd.f32 %v765, %v870
        %v912 = vadd.f32 %v766, %v873
        %v913 = vadd.f32 %v767, %v876
        %v914 = vadd.f32 %v768, %v879
        %v915 = vadd.f32 %v769, %v882
        %v916 = vadd.f32 %v770, %v885
        %v917 = vadd.f32 %v771, %v888
        %v918 = vadd.f32 %v772, %v891
        %v919 = vadd.f32 %v773, %v894
        %v920 = vadd.f32 %v774, %v897
        %v921 = vadd.f32 %v775, %v900
        %v922 = vadd.f32 %v776, %v903
        %v923 = vadd.f32 %v777, %v906
        %s924 = scalar_lea.vmem [#allocation2], 512
        %v925 = vld [vmem:[%s924] sm:$0xff]
        %v926 = vld [vmem:[%s924 + $0x8] sm:$0xff]
        %v927 = vld [vmem:[%s924 + $0x10] sm:$0xff]
        %v928 = vld [vmem:[%s924 + $0x18] sm:$0xff]
        %v929 = vld [vmem:[%s924 + $0x20] sm:$0xff]
        %v930 = vld [vmem:[%s924 + $0x28] sm:$0xff]
        %v931 = vld [vmem:[%s924 + $0x30] sm:$0xff]
        %v932 = vld [vmem:[%s924 + $0x38] sm:$0xff]
        %v933 = vld [vmem:[%s924 + $0x40] sm:$0xff]
        %v934 = vld [vmem:[%s924 + $0x48] sm:$0xff]
        %v935 = vld [vmem:[%s924 + $0x50] sm:$0xff]
        %v936 = vld [vmem:[%s924 + $0x58] sm:$0xff]
        %v937 = vld [vmem:[%s924 + $0x60] sm:$0xff]
        %v938 = vld [vmem:[%s924 + $0x68] sm:$0xff]
        %v939 = vld [vmem:[%s924 + $0x70] sm:$0xff]
        %v940 = vld [vmem:[%s924 + $0x78] sm:$0xff]
        %941 = vrot.lane.b32.xlu0 %v324, 96
        %v942 = vpop.permute.xlu0 %941
        %943 = vrot.lane.b32.xlu0 %v327, 96
        %v944 = vpop.permute.xlu0 %943
        %945 = vrot.lane.b32.xlu0 %v330, 96
        %v946 = vpop.permute.xlu0 %945
        %947 = vrot.lane.b32.xlu0 %v333, 96
        %v948 = vpop.permute.xlu0 %947
        %949 = vrot.lane.b32.xlu0 %v336, 96
        %v950 = vpop.permute.xlu0 %949
        %951 = vrot.lane.b32.xlu0 %v339, 96
        %v952 = vpop.permute.xlu0 %951
        %953 = vrot.lane.b32.xlu0 %v342, 96
        %v954 = vpop.permute.xlu0 %953
        %955 = vrot.lane.b32.xlu0 %v345, 96
        %v956 = vpop.permute.xlu0 %955
        %957 = vrot.lane.b32.xlu0 %v348, 96
        %v958 = vpop.permute.xlu0 %957
        %959 = vrot.lane.b32.xlu0 %v351, 96
        %v960 = vpop.permute.xlu0 %959
        %961 = vrot.lane.b32.xlu0 %v354, 96
        %v962 = vpop.permute.xlu0 %961
        %963 = vrot.lane.b32.xlu0 %v357, 96
        %v964 = vpop.permute.xlu0 %963
        %965 = vrot.lane.b32.xlu0 %v360, 96
        %v966 = vpop.permute.xlu0 %965
        %967 = vrot.lane.b32.xlu0 %v363, 96
        %v968 = vpop.permute.xlu0 %967
        %969 = vrot.lane.b32.xlu0 %v366, 96
        %v970 = vpop.permute.xlu0 %969
        %971 = vrot.lane.b32.xlu0 %v369, 96
        %v972 = vpop.permute.xlu0 %971
        %989 = vmatpush.msra.mxu0 %v972
        %990 = vmatpush.msra.mxu0 %v970
        %991 = vmatpush.msra.mxu0 %v968
        %992 = vmatpush.msra.mxu0 %v966
        %993 = vmatpush.msra.mxu0 %v964
        %994 = vmatpush.msra.mxu0 %v962
        %995 = vmatpush.msra.mxu0 %v960
        %996 = vmatpush.msra.mxu0 %v958
        %997 = vmatpush.msra.mxu0 %v956
        %998 = vmatpush.msra.mxu0 %v954
        %999 = vmatpush.msra.mxu0 %v952
        %1000 = vmatpush.msra.mxu0 %v950
        %1001 = vmatpush.msra.mxu0 %v948
        %1002 = vmatpush.msra.mxu0 %v946
        %1003 = vmatpush.msra.mxu0 %v944
        %1004 = vmatpush.msra.mxu0 %v942
        %1005 = vmatmul.f32.gmra.mxu0 %v925
        %v1006 = vpop.f32.mrf.mxu0
        %v1007 = vadd.f32 0.0, %v1006
        %1008 = vmatmul.f32.gmra.mxu0 %v926
        %v1009 = vpop.f32.mrf.mxu0
        %v1010 = vadd.f32 0.0, %v1009
        %1011 = vmatmul.f32.gmra.mxu0 %v927
        %v1012 = vpop.f32.mrf.mxu0
        %v1013 = vadd.f32 0.0, %v1012
        %1014 = vmatmul.f32.gmra.mxu0 %v928
        %v1015 = vpop.f32.mrf.mxu0
        %v1016 = vadd.f32 0.0, %v1015
        %1017 = vmatmul.f32.gmra.mxu0 %v929
        %v1018 = vpop.f32.mrf.mxu0
        %v1019 = vadd.f32 0.0, %v1018
        %1020 = vmatmul.f32.gmra.mxu0 %v930
        %v1021 = vpop.f32.mrf.mxu0
        %v1022 = vadd.f32 0.0, %v1021
        %1023 = vmatmul.f32.gmra.mxu0 %v931
        %v1024 = vpop.f32.mrf.mxu0
        %v1025 = vadd.f32 0.0, %v1024
        %1026 = vmatmul.f32.gmra.mxu0 %v932
        %v1027 = vpop.f32.mrf.mxu0
        %v1028 = vadd.f32 0.0, %v1027
        %1029 = vmatmul.f32.gmra.mxu0 %v933
        %v1030 = vpop.f32.mrf.mxu0
        %v1031 = vadd.f32 0.0, %v1030
        %1032 = vmatmul.f32.gmra.mxu0 %v934
        %v1033 = vpop.f32.mrf.mxu0
        %v1034 = vadd.f32 0.0, %v1033
        %1035 = vmatmul.f32.gmra.mxu0 %v935
        %v1036 = vpop.f32.mrf.mxu0
        %v1037 = vadd.f32 0.0, %v1036
        %1038 = vmatmul.f32.gmra.mxu0 %v936
        %v1039 = vpop.f32.mrf.mxu0
        %v1040 = vadd.f32 0.0, %v1039
        %1041 = vmatmul.f32.gmra.mxu0 %v937
        %v1042 = vpop.f32.mrf.mxu0
        %v1043 = vadd.f32 0.0, %v1042
        %1044 = vmatmul.f32.gmra.mxu0 %v938
        %v1045 = vpop.f32.mrf.mxu0
        %v1046 = vadd.f32 0.0, %v1045
        %1047 = vmatmul.f32.gmra.mxu0 %v939
        %v1048 = vpop.f32.mrf.mxu0
        %v1049 = vadd.f32 0.0, %v1048
        %1050 = vmatmul.f32.gmra.mxu0 %v940
        %v1051 = vpop.f32.mrf.mxu0
        %v1052 = vadd.f32 0.0, %v1051
        %1053 = vdwg.mxu0
        %v1054 = vadd.f32 %v908, %v1007
        %v1055 = vadd.f32 %v909, %v1010
        %v1056 = vadd.f32 %v910, %v1013
        %v1057 = vadd.f32 %v911, %v1016
        %v1058 = vadd.f32 %v912, %v1019
        %v1059 = vadd.f32 %v913, %v1022
        %v1060 = vadd.f32 %v914, %v1025
        %v1061 = vadd.f32 %v915, %v1028
        %v1062 = vadd.f32 %v916, %v1031
        %v1063 = vadd.f32 %v917, %v1034
        %v1064 = vadd.f32 %v918, %v1037
        %v1065 = vadd.f32 %v919, %v1040
        %v1066 = vadd.f32 %v920, %v1043
        %v1067 = vadd.f32 %v921, %v1046
        %v1068 = vadd.f32 %v922, %v1049
        %v1069 = vadd.f32 %v923, %v1052
        %s1070 = scalar_lea.vmem [#allocation2], 640
        %v1071 = vld [vmem:[%s1070] sm:$0xff]
        %v1072 = vld [vmem:[%s1070 + $0x8] sm:$0xff]
        %v1073 = vld [vmem:[%s1070 + $0x10] sm:$0xff]
        %v1074 = vld [vmem:[%s1070 + $0x18] sm:$0xff]
        %v1075 = vld [vmem:[%s1070 + $0x20] sm:$0xff]
        %v1076 = vld [vmem:[%s1070 + $0x28] sm:$0xff]
        %v1077 = vld [vmem:[%s1070 + $0x30] sm:$0xff]
        %v1078 = vld [vmem:[%s1070 + $0x38] sm:$0xff]
        %v1079 = vld [vmem:[%s1070 + $0x40] sm:$0xff]
        %v1080 = vld [vmem:[%s1070 + $0x48] sm:$0xff]
        %v1081 = vld [vmem:[%s1070 + $0x50] sm:$0xff]
        %v1082 = vld [vmem:[%s1070 + $0x58] sm:$0xff]
        %v1083 = vld [vmem:[%s1070 + $0x60] sm:$0xff]
        %v1084 = vld [vmem:[%s1070 + $0x68] sm:$0xff]
        %v1085 = vld [vmem:[%s1070 + $0x70] sm:$0xff]
        %v1086 = vld [vmem:[%s1070 + $0x78] sm:$0xff]
        %1087 = vrot.lane.b32.xlu0 %v324, 88
        %v1088 = vpop.permute.xlu0 %1087
        %1089 = vrot.lane.b32.xlu0 %v327, 88
        %v1090 = vpop.permute.xlu0 %1089
        %1091 = vrot.lane.b32.xlu0 %v330, 88
        %v1092 = vpop.permute.xlu0 %1091
        %1093 = vrot.lane.b32.xlu0 %v333, 88
        %v1094 = vpop.permute.xlu0 %1093
        %1095 = vrot.lane.b32.xlu0 %v336, 88
        %v1096 = vpop.permute.xlu0 %1095
        %1097 = vrot.lane.b32.xlu0 %v339, 88
        %v1098 = vpop.permute.xlu0 %1097
        %1099 = vrot.lane.b32.xlu0 %v342, 88
        %v1100 = vpop.permute.xlu0 %1099
        %1101 = vrot.lane.b32.xlu0 %v345, 88
        %v1102 = vpop.permute.xlu0 %1101
        %1103 = vrot.lane.b32.xlu0 %v348, 88
        %v1104 = vpop.permute.xlu0 %1103
        %1105 = vrot.lane.b32.xlu0 %v351, 88
        %v1106 = vpop.permute.xlu0 %1105
        %1107 = vrot.lane.b32.xlu0 %v354, 88
        %v1108 = vpop.permute.xlu0 %1107
        %1109 = vrot.lane.b32.xlu0 %v357, 88
        %v1110 = vpop.permute.xlu0 %1109
        %1111 = vrot.lane.b32.xlu0 %v360, 88
        %v1112 = vpop.permute.xlu0 %1111
        %1113 = vrot.lane.b32.xlu0 %v363, 88
        %v1114 = vpop.permute.xlu0 %1113
        %1115 = vrot.lane.b32.xlu0 %v366, 88
        %v1116 = vpop.permute.xlu0 %1115
        %1117 = vrot.lane.b32.xlu0 %v369, 88
        %v1118 = vpop.permute.xlu0 %1117
        %1135 = vmatpush.msra.mxu0 %v1118
        %1136 = vmatpush.msra.mxu0 %v1116
        %1137 = vmatpush.msra.mxu0 %v1114
        %1138 = vmatpush.msra.mxu0 %v1112
        %1139 = vmatpush.msra.mxu0 %v1110
        %1140 = vmatpush.msra.mxu0 %v1108
        %1141 = vmatpush.msra.mxu0 %v1106
        %1142 = vmatpush.msra.mxu0 %v1104
        %1143 = vmatpush.msra.mxu0 %v1102
        %1144 = vmatpush.msra.mxu0 %v1100
        %1145 = vmatpush.msra.mxu0 %v1098
        %1146 = vmatpush.msra.mxu0 %v1096
        %1147 = vmatpush.msra.mxu0 %v1094
        %1148 = vmatpush.msra.mxu0 %v1092
        %1149 = vmatpush.msra.mxu0 %v1090
        %1150 = vmatpush.msra.mxu0 %v1088
        %1151 = vmatmul.f32.gmra.mxu0 %v1071
        %v1152 = vpop.f32.mrf.mxu0
        %v1153 = vadd.f32 0.0, %v1152
        %1154 = vmatmul.f32.gmra.mxu0 %v1072
        %v1155 = vpop.f32.mrf.mxu0
        %v1156 = vadd.f32 0.0, %v1155
        %1157 = vmatmul.f32.gmra.mxu0 %v1073
        %v1158 = vpop.f32.mrf.mxu0
        %v1159 = vadd.f32 0.0, %v1158
        %1160 = vmatmul.f32.gmra.mxu0 %v1074
        %v1161 = vpop.f32.mrf.mxu0
        %v1162 = vadd.f32 0.0, %v1161
        %1163 = vmatmul.f32.gmra.mxu0 %v1075
        %v1164 = vpop.f32.mrf.mxu0
        %v1165 = vadd.f32 0.0, %v1164
        %1166 = vmatmul.f32.gmra.mxu0 %v1076
        %v1167 = vpop.f32.mrf.mxu0
        %v1168 = vadd.f32 0.0, %v1167
        %1169 = vmatmul.f32.gmra.mxu0 %v1077
        %v1170 = vpop.f32.mrf.mxu0
        %v1171 = vadd.f32 0.0, %v1170
        %1172 = vmatmul.f32.gmra.mxu0 %v1078
        %v1173 = vpop.f32.mrf.mxu0
        %v1174 = vadd.f32 0.0, %v1173
        %1175 = vmatmul.f32.gmra.mxu0 %v1079
        %v1176 = vpop.f32.mrf.mxu0
        %v1177 = vadd.f32 0.0, %v1176
        %1178 = vmatmul.f32.gmra.mxu0 %v1080
        %v1179 = vpop.f32.mrf.mxu0
        %v1180 = vadd.f32 0.0, %v1179
        %1181 = vmatmul.f32.gmra.mxu0 %v1081
        %v1182 = vpop.f32.mrf.mxu0
        %v1183 = vadd.f32 0.0, %v1182
        %1184 = vmatmul.f32.gmra.mxu0 %v1082
        %v1185 = vpop.f32.mrf.mxu0
        %v1186 = vadd.f32 0.0, %v1185
        %1187 = vmatmul.f32.gmra.mxu0 %v1083
        %v1188 = vpop.f32.mrf.mxu0
        %v1189 = vadd.f32 0.0, %v1188
        %1190 = vmatmul.f32.gmra.mxu0 %v1084
        %v1191 = vpop.f32.mrf.mxu0
        %v1192 = vadd.f32 0.0, %v1191
        %1193 = vmatmul.f32.gmra.mxu0 %v1085
        %v1194 = vpop.f32.mrf.mxu0
        %v1195 = vadd.f32 0.0, %v1194
        %1196 = vmatmul.f32.gmra.mxu0 %v1086
        %v1197 = vpop.f32.mrf.mxu0
        %v1198 = vadd.f32 0.0, %v1197
        %1199 = vdwg.mxu0
        %v1200 = vadd.f32 %v1054, %v1153
        %v1201 = vadd.f32 %v1055, %v1156
        %v1202 = vadd.f32 %v1056, %v1159
        %v1203 = vadd.f32 %v1057, %v1162
        %v1204 = vadd.f32 %v1058, %v1165
        %v1205 = vadd.f32 %v1059, %v1168
        %v1206 = vadd.f32 %v1060, %v1171
        %v1207 = vadd.f32 %v1061, %v1174
        %v1208 = vadd.f32 %v1062, %v1177
        %v1209 = vadd.f32 %v1063, %v1180
        %v1210 = vadd.f32 %v1064, %v1183
        %v1211 = vadd.f32 %v1065, %v1186
        %v1212 = vadd.f32 %v1066, %v1189
        %v1213 = vadd.f32 %v1067, %v1192
        %v1214 = vadd.f32 %v1068, %v1195
        %v1215 = vadd.f32 %v1069, %v1198
        %s1216 = scalar_lea.vmem [#allocation2], 768
        %v1217 = vld [vmem:[%s1216] sm:$0xff]
        %v1218 = vld [vmem:[%s1216 + $0x8] sm:$0xff]
        %v1219 = vld [vmem:[%s1216 + $0x10] sm:$0xff]
        %v1220 = vld [vmem:[%s1216 + $0x18] sm:$0xff]
        %v1221 = vld [vmem:[%s1216 + $0x20] sm:$0xff]
        %v1222 = vld [vmem:[%s1216 + $0x28] sm:$0xff]
        %v1223 = vld [vmem:[%s1216 + $0x30] sm:$0xff]
        %v1224 = vld [vmem:[%s1216 + $0x38] sm:$0xff]
        %v1225 = vld [vmem:[%s1216 + $0x40] sm:$0xff]
        %v1226 = vld [vmem:[%s1216 + $0x48] sm:$0xff]
        %v1227 = vld [vmem:[%s1216 + $0x50] sm:$0xff]
        %v1228 = vld [vmem:[%s1216 + $0x58] sm:$0xff]
        %v1229 = vld [vmem:[%s1216 + $0x60] sm:$0xff]
        %v1230 = vld [vmem:[%s1216 + $0x68] sm:$0xff]
        %v1231 = vld [vmem:[%s1216 + $0x70] sm:$0xff]
        %v1232 = vld [vmem:[%s1216 + $0x78] sm:$0xff]
        %1233 = vrot.lane.b32.xlu0 %v324, 80
        %v1234 = vpop.permute.xlu0 %1233
        %1235 = vrot.lane.b32.xlu0 %v327, 80
        %v1236 = vpop.permute.xlu0 %1235
        %1237 = vrot.lane.b32.xlu0 %v330, 80
        %v1238 = vpop.permute.xlu0 %1237
        %1239 = vrot.lane.b32.xlu0 %v333, 80
        %v1240 = vpop.permute.xlu0 %1239
        %1241 = vrot.lane.b32.xlu0 %v336, 80
        %v1242 = vpop.permute.xlu0 %1241
        %1243 = vrot.lane.b32.xlu0 %v339, 80
        %v1244 = vpop.permute.xlu0 %1243
        %1245 = vrot.lane.b32.xlu0 %v342, 80
        %v1246 = vpop.permute.xlu0 %1245
        %1247 = vrot.lane.b32.xlu0 %v345, 80
        %v1248 = vpop.permute.xlu0 %1247
        %1249 = vrot.lane.b32.xlu0 %v348, 80
        %v1250 = vpop.permute.xlu0 %1249
        %1251 = vrot.lane.b32.xlu0 %v351, 80
        %v1252 = vpop.permute.xlu0 %1251
        %1253 = vrot.lane.b32.xlu0 %v354, 80
        %v1254 = vpop.permute.xlu0 %1253
        %1255 = vrot.lane.b32.xlu0 %v357, 80
        %v1256 = vpop.permute.xlu0 %1255
        %1257 = vrot.lane.b32.xlu0 %v360, 80
        %v1258 = vpop.permute.xlu0 %1257
        %1259 = vrot.lane.b32.xlu0 %v363, 80
        %v1260 = vpop.permute.xlu0 %1259
        %1261 = vrot.lane.b32.xlu0 %v366, 80
        %v1262 = vpop.permute.xlu0 %1261
        %1263 = vrot.lane.b32.xlu0 %v369, 80
        %v1264 = vpop.permute.xlu0 %1263
        %1281 = vmatpush.msra.mxu0 %v1264
        %1282 = vmatpush.msra.mxu0 %v1262
        %1283 = vmatpush.msra.mxu0 %v1260
        %1284 = vmatpush.msra.mxu0 %v1258
        %1285 = vmatpush.msra.mxu0 %v1256
        %1286 = vmatpush.msra.mxu0 %v1254
        %1287 = vmatpush.msra.mxu0 %v1252
        %1288 = vmatpush.msra.mxu0 %v1250
        %1289 = vmatpush.msra.mxu0 %v1248
        %1290 = vmatpush.msra.mxu0 %v1246
        %1291 = vmatpush.msra.mxu0 %v1244
        %1292 = vmatpush.msra.mxu0 %v1242
        %1293 = vmatpush.msra.mxu0 %v1240
        %1294 = vmatpush.msra.mxu0 %v1238
        %1295 = vmatpush.msra.mxu0 %v1236
        %1296 = vmatpush.msra.mxu0 %v1234
        %1297 = vmatmul.f32.gmra.mxu0 %v1217
        %v1298 = vpop.f32.mrf.mxu0
        %v1299 = vadd.f32 0.0, %v1298
        %1300 = vmatmul.f32.gmra.mxu0 %v1218
        %v1301 = vpop.f32.mrf.mxu0
        %v1302 = vadd.f32 0.0, %v1301
        %1303 = vmatmul.f32.gmra.mxu0 %v1219
        %v1304 = vpop.f32.mrf.mxu0
        %v1305 = vadd.f32 0.0, %v1304
        %1306 = vmatmul.f32.gmra.mxu0 %v1220
        %v1307 = vpop.f32.mrf.mxu0
        %v1308 = vadd.f32 0.0, %v1307
        %1309 = vmatmul.f32.gmra.mxu0 %v1221
        %v1310 = vpop.f32.mrf.mxu0
        %v1311 = vadd.f32 0.0, %v1310
        %1312 = vmatmul.f32.gmra.mxu0 %v1222
        %v1313 = vpop.f32.mrf.mxu0
        %v1314 = vadd.f32 0.0, %v1313
        %1315 = vmatmul.f32.gmra.mxu0 %v1223
        %v1316 = vpop.f32.mrf.mxu0
        %v1317 = vadd.f32 0.0, %v1316
        %1318 = vmatmul.f32.gmra.mxu0 %v1224
        %v1319 = vpop.f32.mrf.mxu0
        %v1320 = vadd.f32 0.0, %v1319
        %1321 = vmatmul.f32.gmra.mxu0 %v1225
        %v1322 = vpop.f32.mrf.mxu0
        %v1323 = vadd.f32 0.0, %v1322
        %1324 = vmatmul.f32.gmra.mxu0 %v1226
        %v1325 = vpop.f32.mrf.mxu0
        %v1326 = vadd.f32 0.0, %v1325
        %1327 = vmatmul.f32.gmra.mxu0 %v1227
        %v1328 = vpop.f32.mrf.mxu0
        %v1329 = vadd.f32 0.0, %v1328
        %1330 = vmatmul.f32.gmra.mxu0 %v1228
        %v1331 = vpop.f32.mrf.mxu0
        %v1332 = vadd.f32 0.0, %v1331
        %1333 = vmatmul.f32.gmra.mxu0 %v1229
        %v1334 = vpop.f32.mrf.mxu0
        %v1335 = vadd.f32 0.0, %v1334
        %1336 = vmatmul.f32.gmra.mxu0 %v1230
        %v1337 = vpop.f32.mrf.mxu0
        %v1338 = vadd.f32 0.0, %v1337
        %1339 = vmatmul.f32.gmra.mxu0 %v1231
        %v1340 = vpop.f32.mrf.mxu0
        %v1341 = vadd.f32 0.0, %v1340
        %1342 = vmatmul.f32.gmra.mxu0 %v1232
        %v1343 = vpop.f32.mrf.mxu0
        %v1344 = vadd.f32 0.0, %v1343
        %1345 = vdwg.mxu0
        %v1346 = vadd.f32 %v1200, %v1299
        %v1347 = vadd.f32 %v1201, %v1302
        %v1348 = vadd.f32 %v1202, %v1305
        %v1349 = vadd.f32 %v1203, %v1308
        %v1350 = vadd.f32 %v1204, %v1311
        %v1351 = vadd.f32 %v1205, %v1314
        %v1352 = vadd.f32 %v1206, %v1317
        %v1353 = vadd.f32 %v1207, %v1320
        %v1354 = vadd.f32 %v1208, %v1323
        %v1355 = vadd.f32 %v1209, %v1326
        %v1356 = vadd.f32 %v1210, %v1329
        %v1357 = vadd.f32 %v1211, %v1332
        %v1358 = vadd.f32 %v1212, %v1335
        %v1359 = vadd.f32 %v1213, %v1338
        %v1360 = vadd.f32 %v1214, %v1341
        %v1361 = vadd.f32 %v1215, %v1344
        %s1362 = scalar_lea.vmem [#allocation2], 896
        %v1363 = vld [vmem:[%s1362] sm:$0xff]
        %v1364 = vld [vmem:[%s1362 + $0x8] sm:$0xff]
        %v1365 = vld [vmem:[%s1362 + $0x10] sm:$0xff]
        %v1366 = vld [vmem:[%s1362 + $0x18] sm:$0xff]
        %v1367 = vld [vmem:[%s1362 + $0x20] sm:$0xff]
        %v1368 = vld [vmem:[%s1362 + $0x28] sm:$0xff]
        %v1369 = vld [vmem:[%s1362 + $0x30] sm:$0xff]
        %v1370 = vld [vmem:[%s1362 + $0x38] sm:$0xff]
        %v1371 = vld [vmem:[%s1362 + $0x40] sm:$0xff]
        %v1372 = vld [vmem:[%s1362 + $0x48] sm:$0xff]
        %v1373 = vld [vmem:[%s1362 + $0x50] sm:$0xff]
        %v1374 = vld [vmem:[%s1362 + $0x58] sm:$0xff]
        %v1375 = vld [vmem:[%s1362 + $0x60] sm:$0xff]
        %v1376 = vld [vmem:[%s1362 + $0x68] sm:$0xff]
        %v1377 = vld [vmem:[%s1362 + $0x70] sm:$0xff]
        %v1378 = vld [vmem:[%s1362 + $0x78] sm:$0xff]
        %1379 = vrot.lane.b32.xlu0 %v324, 72
        %v1380 = vpop.permute.xlu0 %1379
        %1381 = vrot.lane.b32.xlu0 %v327, 72
        %v1382 = vpop.permute.xlu0 %1381
        %1383 = vrot.lane.b32.xlu0 %v330, 72
        %v1384 = vpop.permute.xlu0 %1383
        %1385 = vrot.lane.b32.xlu0 %v333, 72
        %v1386 = vpop.permute.xlu0 %1385
        %1387 = vrot.lane.b32.xlu0 %v336, 72
        %v1388 = vpop.permute.xlu0 %1387
        %1389 = vrot.lane.b32.xlu0 %v339, 72
        %v1390 = vpop.permute.xlu0 %1389
        %1391 = vrot.lane.b32.xlu0 %v342, 72
        %v1392 = vpop.permute.xlu0 %1391
        %1393 = vrot.lane.b32.xlu0 %v345, 72
        %v1394 = vpop.permute.xlu0 %1393
        %1395 = vrot.lane.b32.xlu0 %v348, 72
        %v1396 = vpop.permute.xlu0 %1395
        %1397 = vrot.lane.b32.xlu0 %v351, 72
        %v1398 = vpop.permute.xlu0 %1397
        %1399 = vrot.lane.b32.xlu0 %v354, 72
        %v1400 = vpop.permute.xlu0 %1399
        %1401 = vrot.lane.b32.xlu0 %v357, 72
        %v1402 = vpop.permute.xlu0 %1401
        %1403 = vrot.lane.b32.xlu0 %v360, 72
        %v1404 = vpop.permute.xlu0 %1403
        %1405 = vrot.lane.b32.xlu0 %v363, 72
        %v1406 = vpop.permute.xlu0 %1405
        %1407 = vrot.lane.b32.xlu0 %v366, 72
        %v1408 = vpop.permute.xlu0 %1407
        %1409 = vrot.lane.b32.xlu0 %v369, 72
        %v1410 = vpop.permute.xlu0 %1409
        %1427 = vmatpush.msra.mxu0 %v1410
        %1428 = vmatpush.msra.mxu0 %v1408
        %1429 = vmatpush.msra.mxu0 %v1406
        %1430 = vmatpush.msra.mxu0 %v1404
        %1431 = vmatpush.msra.mxu0 %v1402
        %1432 = vmatpush.msra.mxu0 %v1400
        %1433 = vmatpush.msra.mxu0 %v1398
        %1434 = vmatpush.msra.mxu0 %v1396
        %1435 = vmatpush.msra.mxu0 %v1394
        %1436 = vmatpush.msra.mxu0 %v1392
        %1437 = vmatpush.msra.mxu0 %v1390
        %1438 = vmatpush.msra.mxu0 %v1388
        %1439 = vmatpush.msra.mxu0 %v1386
        %1440 = vmatpush.msra.mxu0 %v1384
        %1441 = vmatpush.msra.mxu0 %v1382
        %1442 = vmatpush.msra.mxu0 %v1380
        %1443 = vmatmul.f32.gmra.mxu0 %v1363
        %v1444 = vpop.f32.mrf.mxu0
        %v1445 = vadd.f32 0.0, %v1444
        %1446 = vmatmul.f32.gmra.mxu0 %v1364
        %v1447 = vpop.f32.mrf.mxu0
        %v1448 = vadd.f32 0.0, %v1447
        %1449 = vmatmul.f32.gmra.mxu0 %v1365
        %v1450 = vpop.f32.mrf.mxu0
        %v1451 = vadd.f32 0.0, %v1450
        %1452 = vmatmul.f32.gmra.mxu0 %v1366
        %v1453 = vpop.f32.mrf.mxu0
        %v1454 = vadd.f32 0.0, %v1453
        %1455 = vmatmul.f32.gmra.mxu0 %v1367
        %v1456 = vpop.f32.mrf.mxu0
        %v1457 = vadd.f32 0.0, %v1456
        %1458 = vmatmul.f32.gmra.mxu0 %v1368
        %v1459 = vpop.f32.mrf.mxu0
        %v1460 = vadd.f32 0.0, %v1459
        %1461 = vmatmul.f32.gmra.mxu0 %v1369
        %v1462 = vpop.f32.mrf.mxu0
        %v1463 = vadd.f32 0.0, %v1462
        %1464 = vmatmul.f32.gmra.mxu0 %v1370
        %v1465 = vpop.f32.mrf.mxu0
        %v1466 = vadd.f32 0.0, %v1465
        %1467 = vmatmul.f32.gmra.mxu0 %v1371
        %v1468 = vpop.f32.mrf.mxu0
        %v1469 = vadd.f32 0.0, %v1468
        %1470 = vmatmul.f32.gmra.mxu0 %v1372
        %v1471 = vpop.f32.mrf.mxu0
        %v1472 = vadd.f32 0.0, %v1471
        %1473 = vmatmul.f32.gmra.mxu0 %v1373
        %v1474 = vpop.f32.mrf.mxu0
        %v1475 = vadd.f32 0.0, %v1474
        %1476 = vmatmul.f32.gmra.mxu0 %v1374
        %v1477 = vpop.f32.mrf.mxu0
        %v1478 = vadd.f32 0.0, %v1477
        %1479 = vmatmul.f32.gmra.mxu0 %v1375
        %v1480 = vpop.f32.mrf.mxu0
        %v1481 = vadd.f32 0.0, %v1480
        %1482 = vmatmul.f32.gmra.mxu0 %v1376
        %v1483 = vpop.f32.mrf.mxu0
        %v1484 = vadd.f32 0.0, %v1483
        %1485 = vmatmul.f32.gmra.mxu0 %v1377
        %v1486 = vpop.f32.mrf.mxu0
        %v1487 = vadd.f32 0.0, %v1486
        %1488 = vmatmul.f32.gmra.mxu0 %v1378
        %v1489 = vpop.f32.mrf.mxu0
        %v1490 = vadd.f32 0.0, %v1489
        %1491 = vdwg.mxu0
        %v1492 = vadd.f32 %v1346, %v1445
        %v1493 = vadd.f32 %v1347, %v1448
        %v1494 = vadd.f32 %v1348, %v1451
        %v1495 = vadd.f32 %v1349, %v1454
        %v1496 = vadd.f32 %v1350, %v1457
        %v1497 = vadd.f32 %v1351, %v1460
        %v1498 = vadd.f32 %v1352, %v1463
        %v1499 = vadd.f32 %v1353, %v1466
        %v1500 = vadd.f32 %v1354, %v1469
        %v1501 = vadd.f32 %v1355, %v1472
        %v1502 = vadd.f32 %v1356, %v1475
        %v1503 = vadd.f32 %v1357, %v1478
        %v1504 = vadd.f32 %v1358, %v1481
        %v1505 = vadd.f32 %v1359, %v1484
        %v1506 = vadd.f32 %v1360, %v1487
        %v1507 = vadd.f32 %v1361, %v1490
        %s1508 = scalar_lea.vmem [#allocation2], 1024
        %v1509 = vld [vmem:[%s1508] sm:$0xff]
        %v1510 = vld [vmem:[%s1508 + $0x8] sm:$0xff]
        %v1511 = vld [vmem:[%s1508 + $0x10] sm:$0xff]
        %v1512 = vld [vmem:[%s1508 + $0x18] sm:$0xff]
        %v1513 = vld [vmem:[%s1508 + $0x20] sm:$0xff]
        %v1514 = vld [vmem:[%s1508 + $0x28] sm:$0xff]
        %v1515 = vld [vmem:[%s1508 + $0x30] sm:$0xff]
        %v1516 = vld [vmem:[%s1508 + $0x38] sm:$0xff]
        %v1517 = vld [vmem:[%s1508 + $0x40] sm:$0xff]
        %v1518 = vld [vmem:[%s1508 + $0x48] sm:$0xff]
        %v1519 = vld [vmem:[%s1508 + $0x50] sm:$0xff]
        %v1520 = vld [vmem:[%s1508 + $0x58] sm:$0xff]
        %v1521 = vld [vmem:[%s1508 + $0x60] sm:$0xff]
        %v1522 = vld [vmem:[%s1508 + $0x68] sm:$0xff]
        %v1523 = vld [vmem:[%s1508 + $0x70] sm:$0xff]
        %v1524 = vld [vmem:[%s1508 + $0x78] sm:$0xff]
        %1525 = vrot.lane.b32.xlu0 %v324, 64
        %v1526 = vpop.permute.xlu0 %1525
        %1527 = vrot.lane.b32.xlu0 %v327, 64
        %v1528 = vpop.permute.xlu0 %1527
        %1529 = vrot.lane.b32.xlu0 %v330, 64
        %v1530 = vpop.permute.xlu0 %1529
        %1531 = vrot.lane.b32.xlu0 %v333, 64
        %v1532 = vpop.permute.xlu0 %1531
        %1533 = vrot.lane.b32.xlu0 %v336, 64
        %v1534 = vpop.permute.xlu0 %1533
        %1535 = vrot.lane.b32.xlu0 %v339, 64
        %v1536 = vpop.permute.xlu0 %1535
        %1537 = vrot.lane.b32.xlu0 %v342, 64
        %v1538 = vpop.permute.xlu0 %1537
        %1539 = vrot.lane.b32.xlu0 %v345, 64
        %v1540 = vpop.permute.xlu0 %1539
        %1541 = vrot.lane.b32.xlu0 %v348, 64
        %v1542 = vpop.permute.xlu0 %1541
        %1543 = vrot.lane.b32.xlu0 %v351, 64
        %v1544 = vpop.permute.xlu0 %1543
        %1545 = vrot.lane.b32.xlu0 %v354, 64
        %v1546 = vpop.permute.xlu0 %1545
        %1547 = vrot.lane.b32.xlu0 %v357, 64
        %v1548 = vpop.permute.xlu0 %1547
        %1549 = vrot.lane.b32.xlu0 %v360, 64
        %v1550 = vpop.permute.xlu0 %1549
        %1551 = vrot.lane.b32.xlu0 %v363, 64
        %v1552 = vpop.permute.xlu0 %1551
        %1553 = vrot.lane.b32.xlu0 %v366, 64
        %v1554 = vpop.permute.xlu0 %1553
        %1555 = vrot.lane.b32.xlu0 %v369, 64
        %v1556 = vpop.permute.xlu0 %1555
        %1573 = vmatpush.msra.mxu0 %v1556
        %1574 = vmatpush.msra.mxu0 %v1554
        %1575 = vmatpush.msra.mxu0 %v1552
        %1576 = vmatpush.msra.mxu0 %v1550
        %1577 = vmatpush.msra.mxu0 %v1548
        %1578 = vmatpush.msra.mxu0 %v1546
        %1579 = vmatpush.msra.mxu0 %v1544
        %1580 = vmatpush.msra.mxu0 %v1542
        %1581 = vmatpush.msra.mxu0 %v1540
        %1582 = vmatpush.msra.mxu0 %v1538
        %1583 = vmatpush.msra.mxu0 %v1536
        %1584 = vmatpush.msra.mxu0 %v1534
        %1585 = vmatpush.msra.mxu0 %v1532
        %1586 = vmatpush.msra.mxu0 %v1530
        %1587 = vmatpush.msra.mxu0 %v1528
        %1588 = vmatpush.msra.mxu0 %v1526
        %1589 = vmatmul.f32.gmra.mxu0 %v1509
        %v1590 = vpop.f32.mrf.mxu0
        %v1591 = vadd.f32 0.0, %v1590
        %1592 = vmatmul.f32.gmra.mxu0 %v1510
        %v1593 = vpop.f32.mrf.mxu0
        %v1594 = vadd.f32 0.0, %v1593
        %1595 = vmatmul.f32.gmra.mxu0 %v1511
        %v1596 = vpop.f32.mrf.mxu0
        %v1597 = vadd.f32 0.0, %v1596
        %1598 = vmatmul.f32.gmra.mxu0 %v1512
        %v1599 = vpop.f32.mrf.mxu0
        %v1600 = vadd.f32 0.0, %v1599
        %1601 = vmatmul.f32.gmra.mxu0 %v1513
        %v1602 = vpop.f32.mrf.mxu0
        %v1603 = vadd.f32 0.0, %v1602
        %1604 = vmatmul.f32.gmra.mxu0 %v1514
        %v1605 = vpop.f32.mrf.mxu0
        %v1606 = vadd.f32 0.0, %v1605
        %1607 = vmatmul.f32.gmra.mxu0 %v1515
        %v1608 = vpop.f32.mrf.mxu0
        %v1609 = vadd.f32 0.0, %v1608
        %1610 = vmatmul.f32.gmra.mxu0 %v1516
        %v1611 = vpop.f32.mrf.mxu0
        %v1612 = vadd.f32 0.0, %v1611
        %1613 = vmatmul.f32.gmra.mxu0 %v1517
        %v1614 = vpop.f32.mrf.mxu0
        %v1615 = vadd.f32 0.0, %v1614
        %1616 = vmatmul.f32.gmra.mxu0 %v1518
        %v1617 = vpop.f32.mrf.mxu0
        %v1618 = vadd.f32 0.0, %v1617
        %1619 = vmatmul.f32.gmra.mxu0 %v1519
        %v1620 = vpop.f32.mrf.mxu0
        %v1621 = vadd.f32 0.0, %v1620
        %1622 = vmatmul.f32.gmra.mxu0 %v1520
        %v1623 = vpop.f32.mrf.mxu0
        %v1624 = vadd.f32 0.0, %v1623
        %1625 = vmatmul.f32.gmra.mxu0 %v1521
        %v1626 = vpop.f32.mrf.mxu0
        %v1627 = vadd.f32 0.0, %v1626
        %1628 = vmatmul.f32.gmra.mxu0 %v1522
        %v1629 = vpop.f32.mrf.mxu0
        %v1630 = vadd.f32 0.0, %v1629
        %1631 = vmatmul.f32.gmra.mxu0 %v1523
        %v1632 = vpop.f32.mrf.mxu0
        %v1633 = vadd.f32 0.0, %v1632
        %1634 = vmatmul.f32.gmra.mxu0 %v1524
        %v1635 = vpop.f32.mrf.mxu0
        %v1636 = vadd.f32 0.0, %v1635
        %1637 = vdwg.mxu0
        %v1638 = vadd.f32 %v1492, %v1591
        %v1639 = vadd.f32 %v1493, %v1594
        %v1640 = vadd.f32 %v1494, %v1597
        %v1641 = vadd.f32 %v1495, %v1600
        %v1642 = vadd.f32 %v1496, %v1603
        %v1643 = vadd.f32 %v1497, %v1606
        %v1644 = vadd.f32 %v1498, %v1609
        %v1645 = vadd.f32 %v1499, %v1612
        %v1646 = vadd.f32 %v1500, %v1615
        %v1647 = vadd.f32 %v1501, %v1618
        %v1648 = vadd.f32 %v1502, %v1621
        %v1649 = vadd.f32 %v1503, %v1624
        %v1650 = vadd.f32 %v1504, %v1627
        %v1651 = vadd.f32 %v1505, %v1630
        %v1652 = vadd.f32 %v1506, %v1633
        %v1653 = vadd.f32 %v1507, %v1636
        %v1654 = vmax.f32 %v1638, 0.0
        %v1655 = vmax.f32 %v1639, 0.0
        %v1656 = vmax.f32 %v1640, 0.0
        %v1657 = vmax.f32 %v1641, 0.0
        %v1658 = vmax.f32 %v1642, 0.0
        %v1659 = vmax.f32 %v1643, 0.0
        %v1660 = vmax.f32 %v1644, 0.0
        %v1661 = vmax.f32 %v1645, 0.0
        %v1662 = vmax.f32 %v1646, 0.0
        %v1663 = vmax.f32 %v1647, 0.0
        %v1664 = vmax.f32 %v1648, 0.0
        %v1665 = vmax.f32 %v1649, 0.0
        %v1666 = vmax.f32 %v1650, 0.0
        %v1667 = vmax.f32 %v1651, 0.0
        %v1668 = vmax.f32 %v1652, 0.0
        %v1669 = vmax.f32 %v1653, 0.0
        %v1670 = vld [vmem:[%s206 + $0x10] sm:$0xff]
        %v1671 = vld [vmem:[%s206 + $0x18] sm:$0x1]
        %vm1672 = vcmask 64512
        %v1674 = vsel %vm1672, %v1654, 0
        %v1677 = vsel %vm1672, %v1655, 0
        %v1680 = vsel %vm1672, %v1656, 0
        %v1683 = vsel %vm1672, %v1657, 0
        %v1686 = vsel %vm1672, %v1658, 0
        %v1689 = vsel %vm1672, %v1659, 0
        %v1692 = vsel %vm1672, %v1660, 0
        %v1695 = vsel %vm1672, %v1661, 0
        %v1698 = vsel %vm1672, %v1662, 0
        %v1701 = vsel %vm1672, %v1663, 0
        %v1704 = vsel %vm1672, %v1664, 0
        %v1707 = vsel %vm1672, %v1665, 0
        %v1710 = vsel %vm1672, %v1666, 0
        %v1713 = vsel %vm1672, %v1667, 0
        %v1716 = vsel %vm1672, %v1668, 0
        %v1719 = vsel %vm1672, %v1669, 0
        %1721 = vmatpush.msra.mxu0 0.0
        %1722 = vmatpush.msra.mxu0 0.0
        %1723 = vmatpush.msra.mxu0 0.0
        %1724 = vmatpush.msra.mxu0 0.0
        %1725 = vmatpush.msra.mxu0 0.0
        %1726 = vmatpush.msra.mxu0 0.0
        %1727 = vmatpush.msra.mxu0 0.0
        %1728 = vmatpush.msra.mxu0 0.0
        %1729 = vmatpush.msra.mxu0 0.0
        %1730 = vmatpush.msra.mxu0 0.0
        %1731 = vmatpush.msra.mxu0 0.0
        %1732 = vmatpush.msra.mxu0 0.0
        %1733 = vmatpush.msra.mxu0 0.0
        %1734 = vmatpush.msra.mxu0 0.0
        %1735 = vmatpush.msra.mxu0 0.0
        %1736 = vmatpush.msra.mxu0 %v1670
        %1737 = vmatmul.f32.gmra.mxu0 %v1674
        %v1738 = vpop.f32.mrf.mxu0
        %v1739 = vadd.f32 0.0, %v1738
        %1740 = vmatmul.f32.gmra.mxu0 %v1677
        %v1741 = vpop.f32.mrf.mxu0
        %v1742 = vadd.f32 0.0, %v1741
        %1743 = vmatmul.f32.gmra.mxu0 %v1680
        %v1744 = vpop.f32.mrf.mxu0
        %v1745 = vadd.f32 0.0, %v1744
        %1746 = vmatmul.f32.gmra.mxu0 %v1683
        %v1747 = vpop.f32.mrf.mxu0
        %v1748 = vadd.f32 0.0, %v1747
        %1749 = vmatmul.f32.gmra.mxu0 %v1686
        %v1750 = vpop.f32.mrf.mxu0
        %v1751 = vadd.f32 0.0, %v1750
        %1752 = vmatmul.f32.gmra.mxu0 %v1689
        %v1753 = vpop.f32.mrf.mxu0
        %v1754 = vadd.f32 0.0, %v1753
        %1755 = vmatmul.f32.gmra.mxu0 %v1692
        %v1756 = vpop.f32.mrf.mxu0
        %v1757 = vadd.f32 0.0, %v1756
        %1758 = vmatmul.f32.gmra.mxu0 %v1695
        %v1759 = vpop.f32.mrf.mxu0
        %v1760 = vadd.f32 0.0, %v1759
        %1761 = vmatmul.f32.gmra.mxu0 %v1698
        %v1762 = vpop.f32.mrf.mxu0
        %v1763 = vadd.f32 0.0, %v1762
        %1764 = vmatmul.f32.gmra.mxu0 %v1701
        %v1765 = vpop.f32.mrf.mxu0
        %v1766 = vadd.f32 0.0, %v1765
        %1767 = vmatmul.f32.gmra.mxu0 %v1704
        %v1768 = vpop.f32.mrf.mxu0
        %v1769 = vadd.f32 0.0, %v1768
        %1770 = vmatmul.f32.gmra.mxu0 %v1707
        %v1771 = vpop.f32.mrf.mxu0
        %v1772 = vadd.f32 0.0, %v1771
        %1773 = vmatmul.f32.gmra.mxu0 %v1710
        %v1774 = vpop.f32.mrf.mxu0
        %v1775 = vadd.f32 0.0, %v1774
        %1776 = vmatmul.f32.gmra.mxu0 %v1713
        %v1777 = vpop.f32.mrf.mxu0
        %v1778 = vadd.f32 0.0, %v1777
        %1779 = vmatmul.f32.gmra.mxu0 %v1716
        %v1780 = vpop.f32.mrf.mxu0
        %v1781 = vadd.f32 0.0, %v1780
        %1782 = vmatmul.f32.gmra.mxu0 %v1719
        %v1783 = vpop.f32.mrf.mxu0
        %v1784 = vadd.f32 0.0, %v1783
        %1785 = vdwg.mxu0
        %v1786 = vperm.slane %v1671, 0
        %v1787 = vadd.f32 %v1786, 0.0
        %1788 = vmatpush.msra.mxu0 %v1784
        %1789 = vmatpush.msra.mxu0 %v1781
        %1790 = vmatpush.msra.mxu0 %v1778
        %1791 = vmatpush.msra.mxu0 %v1775
        %1792 = vmatpush.msra.mxu0 %v1772
        %1793 = vmatpush.msra.mxu0 %v1769
        %1794 = vmatpush.msra.mxu0 %v1766
        %1795 = vmatpush.msra.mxu0 %v1763
        %1796 = vmatpush.msra.mxu0 %v1760
        %1797 = vmatpush.msra.mxu0 %v1757
        %1798 = vmatpush.msra.mxu0 %v1754
        %1799 = vmatpush.msra.mxu0 %v1751
        %1800 = vmatpush.msra.mxu0 %v1748
        %1801 = vmatpush.msra.mxu0 %v1745
        %1802 = vmatpush.msra.mxu0 %v1742
        %1803 = vmatpush.msra.mxu0 %v1739
        %1804 = vmatmul.f32.gmra.mxu0 %v373
        %v1805 = vpop.f32.mrf.mxu0
        %v1806 = vadd.f32 0.0, %v1805
        %1807 = vmatmul.f32.gmra.mxu0 %v374
        %v1808 = vpop.f32.mrf.mxu0
        %v1809 = vadd.f32 0.0, %v1808
        %1810 = vmatmul.f32.gmra.mxu0 %v375
        %v1811 = vpop.f32.mrf.mxu0
        %v1812 = vadd.f32 0.0, %v1811
        %1813 = vmatmul.f32.gmra.mxu0 %v376
        %v1814 = vpop.f32.mrf.mxu0
        %v1815 = vadd.f32 0.0, %v1814
        %1816 = vmatmul.f32.gmra.mxu0 %v377
        %v1817 = vpop.f32.mrf.mxu0
        %v1818 = vadd.f32 0.0, %v1817
        %1819 = vmatmul.f32.gmra.mxu0 %v378
        %v1820 = vpop.f32.mrf.mxu0
        %v1821 = vadd.f32 0.0, %v1820
        %1822 = vmatmul.f32.gmra.mxu0 %v379
        %v1823 = vpop.f32.mrf.mxu0
        %v1824 = vadd.f32 0.0, %v1823
        %1825 = vmatmul.f32.gmra.mxu0 %v380
        %v1826 = vpop.f32.mrf.mxu0
        %v1827 = vadd.f32 0.0, %v1826
        %1828 = vmatmul.f32.gmra.mxu0 %v381
        %v1829 = vpop.f32.mrf.mxu0
        %v1830 = vadd.f32 0.0, %v1829
        %1831 = vmatmul.f32.gmra.mxu0 %v382
        %v1832 = vpop.f32.mrf.mxu0
        %v1833 = vadd.f32 0.0, %v1832
        %1834 = vmatmul.f32.gmra.mxu0 %v383
        %v1835 = vpop.f32.mrf.mxu0
        %v1836 = vadd.f32 0.0, %v1835
        %1837 = vmatmul.f32.gmra.mxu0 %v384
        %v1838 = vpop.f32.mrf.mxu0
        %v1839 = vadd.f32 0.0, %v1838
        %1840 = vmatmul.f32.gmra.mxu0 %v385
        %v1841 = vpop.f32.mrf.mxu0
        %v1842 = vadd.f32 0.0, %v1841
        %1843 = vmatmul.f32.gmra.mxu0 %v386
        %v1844 = vpop.f32.mrf.mxu0
        %v1845 = vadd.f32 0.0, %v1844
        %1846 = vmatmul.f32.gmra.mxu0 %v387
        %v1847 = vpop.f32.mrf.mxu0
        %v1848 = vadd.f32 0.0, %v1847
        %1849 = vmatmul.f32.gmra.mxu0 %v388
        %v1850 = vpop.f32.mrf.mxu0
        %v1851 = vadd.f32 0.0, %v1850
        %1852 = vdwg.mxu0
        %v1853 = vadd.f32 %v1787, %v1806
        %v1854 = vadd.f32 %v1787, %v1809
        %v1855 = vadd.f32 %v1787, %v1812
        %v1856 = vadd.f32 %v1787, %v1815
        %v1857 = vadd.f32 %v1787, %v1818
        %v1858 = vadd.f32 %v1787, %v1821
        %v1859 = vadd.f32 %v1787, %v1824
        %v1860 = vadd.f32 %v1787, %v1827
        %v1861 = vadd.f32 %v1787, %v1830
        %v1862 = vadd.f32 %v1787, %v1833
        %v1863 = vadd.f32 %v1787, %v1836
        %v1864 = vadd.f32 %v1787, %v1839
        %v1865 = vadd.f32 %v1787, %v1842
        %v1866 = vadd.f32 %v1787, %v1845
        %v1867 = vadd.f32 %v1787, %v1848
        %v1868 = vadd.f32 %v1787, %v1851
        %1885 = vrot.lane.b32.xlu0 %v1739, 120
        %v1886 = vpop.permute.xlu0 %1885
        %1887 = vrot.lane.b32.xlu0 %v1742, 120
        %v1888 = vpop.permute.xlu0 %1887
        %1889 = vrot.lane.b32.xlu0 %v1745, 120
        %v1890 = vpop.permute.xlu0 %1889
        %1891 = vrot.lane.b32.xlu0 %v1748, 120
        %v1892 = vpop.permute.xlu0 %1891
        %1893 = vrot.lane.b32.xlu0 %v1751, 120
        %v1894 = vpop.permute.xlu0 %1893
        %1895 = vrot.lane.b32.xlu0 %v1754, 120
        %v1896 = vpop.permute.xlu0 %1895
        %1897 = vrot.lane.b32.xlu0 %v1757, 120
        %v1898 = vpop.permute.xlu0 %1897
        %1899 = vrot.lane.b32.xlu0 %v1760, 120
        %v1900 = vpop.permute.xlu0 %1899
        %1901 = vrot.lane.b32.xlu0 %v1763, 120
        %v1902 = vpop.permute.xlu0 %1901
        %1903 = vrot.lane.b32.xlu0 %v1766, 120
        %v1904 = vpop.permute.xlu0 %1903
        %1905 = vrot.lane.b32.xlu0 %v1769, 120
        %v1906 = vpop.permute.xlu0 %1905
        %1907 = vrot.lane.b32.xlu0 %v1772, 120
        %v1908 = vpop.permute.xlu0 %1907
        %1909 = vrot.lane.b32.xlu0 %v1775, 120
        %v1910 = vpop.permute.xlu0 %1909
        %1911 = vrot.lane.b32.xlu0 %v1778, 120
        %v1912 = vpop.permute.xlu0 %1911
        %1913 = vrot.lane.b32.xlu0 %v1781, 120
        %v1914 = vpop.permute.xlu0 %1913
        %1915 = vrot.lane.b32.xlu0 %v1784, 120
        %v1916 = vpop.permute.xlu0 %1915
        %1933 = vmatpush.msra.mxu0 %v1916
        %1934 = vmatpush.msra.mxu0 %v1914
        %1935 = vmatpush.msra.mxu0 %v1912
        %1936 = vmatpush.msra.mxu0 %v1910
        %1937 = vmatpush.msra.mxu0 %v1908
        %1938 = vmatpush.msra.mxu0 %v1906
        %1939 = vmatpush.msra.mxu0 %v1904
        %1940 = vmatpush.msra.mxu0 %v1902
        %1941 = vmatpush.msra.mxu0 %v1900
        %1942 = vmatpush.msra.mxu0 %v1898
        %1943 = vmatpush.msra.mxu0 %v1896
        %1944 = vmatpush.msra.mxu0 %v1894
        %1945 = vmatpush.msra.mxu0 %v1892
        %1946 = vmatpush.msra.mxu0 %v1890
        %1947 = vmatpush.msra.mxu0 %v1888
        %1948 = vmatpush.msra.mxu0 %v1886
        %1949 = vmatmul.f32.gmra.mxu0 %v471
        %v1950 = vpop.f32.mrf.mxu0
        %v1951 = vadd.f32 0.0, %v1950
        %1952 = vmatmul.f32.gmra.mxu0 %v472
        %v1953 = vpop.f32.mrf.mxu0
        %v1954 = vadd.f32 0.0, %v1953
        %1955 = vmatmul.f32.gmra.mxu0 %v473
        %v1956 = vpop.f32.mrf.mxu0
        %v1957 = vadd.f32 0.0, %v1956
        %1958 = vmatmul.f32.gmra.mxu0 %v474
        %v1959 = vpop.f32.mrf.mxu0
        %v1960 = vadd.f32 0.0, %v1959
        %1961 = vmatmul.f32.gmra.mxu0 %v475
        %v1962 = vpop.f32.mrf.mxu0
        %v1963 = vadd.f32 0.0, %v1962
        %1964 = vmatmul.f32.gmra.mxu0 %v476
        %v1965 = vpop.f32.mrf.mxu0
        %v1966 = vadd.f32 0.0, %v1965
        %1967 = vmatmul.f32.gmra.mxu0 %v477
        %v1968 = vpop.f32.mrf.mxu0
        %v1969 = vadd.f32 0.0, %v1968
        %1970 = vmatmul.f32.gmra.mxu0 %v478
        %v1971 = vpop.f32.mrf.mxu0
        %v1972 = vadd.f32 0.0, %v1971
        %1973 = vmatmul.f32.gmra.mxu0 %v479
        %v1974 = vpop.f32.mrf.mxu0
        %v1975 = vadd.f32 0.0, %v1974
        %1976 = vmatmul.f32.gmra.mxu0 %v480
        %v1977 = vpop.f32.mrf.mxu0
        %v1978 = vadd.f32 0.0, %v1977
        %1979 = vmatmul.f32.gmra.mxu0 %v481
        %v1980 = vpop.f32.mrf.mxu0
        %v1981 = vadd.f32 0.0, %v1980
        %1982 = vmatmul.f32.gmra.mxu0 %v482
        %v1983 = vpop.f32.mrf.mxu0
        %v1984 = vadd.f32 0.0, %v1983
        %1985 = vmatmul.f32.gmra.mxu0 %v483
        %v1986 = vpop.f32.mrf.mxu0
        %v1987 = vadd.f32 0.0, %v1986
        %1988 = vmatmul.f32.gmra.mxu0 %v484
        %v1989 = vpop.f32.mrf.mxu0
        %v1990 = vadd.f32 0.0, %v1989
        %1991 = vmatmul.f32.gmra.mxu0 %v485
        %v1992 = vpop.f32.mrf.mxu0
        %v1993 = vadd.f32 0.0, %v1992
        %1994 = vmatmul.f32.gmra.mxu0 %v486
        %v1995 = vpop.f32.mrf.mxu0
        %v1996 = vadd.f32 0.0, %v1995
        %1997 = vdwg.mxu0
        %v1998 = vadd.f32 %v1853, %v1951
        %v1999 = vadd.f32 %v1854, %v1954
        %v2000 = vadd.f32 %v1855, %v1957
        %v2001 = vadd.f32 %v1856, %v1960
        %v2002 = vadd.f32 %v1857, %v1963
        %v2003 = vadd.f32 %v1858, %v1966
        %v2004 = vadd.f32 %v1859, %v1969
        %v2005 = vadd.f32 %v1860, %v1972
        %v2006 = vadd.f32 %v1861, %v1975
        %v2007 = vadd.f32 %v1862, %v1978
        %v2008 = vadd.f32 %v1863, %v1981
        %v2009 = vadd.f32 %v1864, %v1984
        %v2010 = vadd.f32 %v1865, %v1987
        %v2011 = vadd.f32 %v1866, %v1990
        %v2012 = vadd.f32 %v1867, %v1993
        %v2013 = vadd.f32 %v1868, %v1996
        %2014 = vrot.lane.b32.xlu0 %v1739, 112
        %v2015 = vpop.permute.xlu0 %2014
        %2016 = vrot.lane.b32.xlu0 %v1742, 112
        %v2017 = vpop.permute.xlu0 %2016
        %2018 = vrot.lane.b32.xlu0 %v1745, 112
        %v2019 = vpop.permute.xlu0 %2018
        %2020 = vrot.lane.b32.xlu0 %v1748, 112
        %v2021 = vpop.permute.xlu0 %2020
        %2022 = vrot.lane.b32.xlu0 %v1751, 112
        %v2023 = vpop.permute.xlu0 %2022
        %2024 = vrot.lane.b32.xlu0 %v1754, 112
        %v2025 = vpop.permute.xlu0 %2024
        %2026 = vrot.lane.b32.xlu0 %v1757, 112
        %v2027 = vpop.permute.xlu0 %2026
        %2028 = vrot.lane.b32.xlu0 %v1760, 112
        %v2029 = vpop.permute.xlu0 %2028
        %2030 = vrot.lane.b32.xlu0 %v1763, 112
        %v2031 = vpop.permute.xlu0 %2030
        %2032 = vrot.lane.b32.xlu0 %v1766, 112
        %v2033 = vpop.permute.xlu0 %2032
        %2034 = vrot.lane.b32.xlu0 %v1769, 112
        %v2035 = vpop.permute.xlu0 %2034
        %2036 = vrot.lane.b32.xlu0 %v1772, 112
        %v2037 = vpop.permute.xlu0 %2036
        %2038 = vrot.lane.b32.xlu0 %v1775, 112
        %v2039 = vpop.permute.xlu0 %2038
        %2040 = vrot.lane.b32.xlu0 %v1778, 112
        %v2041 = vpop.permute.xlu0 %2040
        %2042 = vrot.lane.b32.xlu0 %v1781, 112
        %v2043 = vpop.permute.xlu0 %2042
        %2044 = vrot.lane.b32.xlu0 %v1784, 112
        %v2045 = vpop.permute.xlu0 %2044
        %2062 = vmatpush.msra.mxu0 %v2045
        %2063 = vmatpush.msra.mxu0 %v2043
        %2064 = vmatpush.msra.mxu0 %v2041
        %2065 = vmatpush.msra.mxu0 %v2039
        %2066 = vmatpush.msra.mxu0 %v2037
        %2067 = vmatpush.msra.mxu0 %v2035
        %2068 = vmatpush.msra.mxu0 %v2033
        %2069 = vmatpush.msra.mxu0 %v2031
        %2070 = vmatpush.msra.mxu0 %v2029
        %2071 = vmatpush.msra.mxu0 %v2027
        %2072 = vmatpush.msra.mxu0 %v2025
        %2073 = vmatpush.msra.mxu0 %v2023
        %2074 = vmatpush.msra.mxu0 %v2021
        %2075 = vmatpush.msra.mxu0 %v2019
        %2076 = vmatpush.msra.mxu0 %v2017
        %2077 = vmatpush.msra.mxu0 %v2015
        %2078 = vmatmul.f32.gmra.mxu0 %v633
        %v2079 = vpop.f32.mrf.mxu0
        %v2080 = vadd.f32 0.0, %v2079
        %2081 = vmatmul.f32.gmra.mxu0 %v634
        %v2082 = vpop.f32.mrf.mxu0
        %v2083 = vadd.f32 0.0, %v2082
        %2084 = vmatmul.f32.gmra.mxu0 %v635
        %v2085 = vpop.f32.mrf.mxu0
        %v2086 = vadd.f32 0.0, %v2085
        %2087 = vmatmul.f32.gmra.mxu0 %v636
        %v2088 = vpop.f32.mrf.mxu0
        %v2089 = vadd.f32 0.0, %v2088
        %2090 = vmatmul.f32.gmra.mxu0 %v637
        %v2091 = vpop.f32.mrf.mxu0
        %v2092 = vadd.f32 0.0, %v2091
        %2093 = vmatmul.f32.gmra.mxu0 %v638
        %v2094 = vpop.f32.mrf.mxu0
        %v2095 = vadd.f32 0.0, %v2094
        %2096 = vmatmul.f32.gmra.mxu0 %v639
        %v2097 = vpop.f32.mrf.mxu0
        %v2098 = vadd.f32 0.0, %v2097
        %2099 = vmatmul.f32.gmra.mxu0 %v640
        %v2100 = vpop.f32.mrf.mxu0
        %v2101 = vadd.f32 0.0, %v2100
        %2102 = vmatmul.f32.gmra.mxu0 %v641
        %v2103 = vpop.f32.mrf.mxu0
        %v2104 = vadd.f32 0.0, %v2103
        %2105 = vmatmul.f32.gmra.mxu0 %v642
        %v2106 = vpop.f32.mrf.mxu0
        %v2107 = vadd.f32 0.0, %v2106
        %2108 = vmatmul.f32.gmra.mxu0 %v643
        %v2109 = vpop.f32.mrf.mxu0
        %v2110 = vadd.f32 0.0, %v2109
        %2111 = vmatmul.f32.gmra.mxu0 %v644
        %v2112 = vpop.f32.mrf.mxu0
        %v2113 = vadd.f32 0.0, %v2112
        %2114 = vmatmul.f32.gmra.mxu0 %v645
        %v2115 = vpop.f32.mrf.mxu0
        %v2116 = vadd.f32 0.0, %v2115
        %2117 = vmatmul.f32.gmra.mxu0 %v646
        %v2118 = vpop.f32.mrf.mxu0
        %v2119 = vadd.f32 0.0, %v2118
        %2120 = vmatmul.f32.gmra.mxu0 %v647
        %v2121 = vpop.f32.mrf.mxu0
        %v2122 = vadd.f32 0.0, %v2121
        %2123 = vmatmul.f32.gmra.mxu0 %v648
        %v2124 = vpop.f32.mrf.mxu0
        %v2125 = vadd.f32 0.0, %v2124
        %2126 = vdwg.mxu0
        %v2127 = vadd.f32 %v1998, %v2080
        %v2128 = vadd.f32 %v1999, %v2083
        %v2129 = vadd.f32 %v2000, %v2086
        %v2130 = vadd.f32 %v2001, %v2089
        %v2131 = vadd.f32 %v2002, %v2092
        %v2132 = vadd.f32 %v2003, %v2095
        %v2133 = vadd.f32 %v2004, %v2098
        %v2134 = vadd.f32 %v2005, %v2101
        %v2135 = vadd.f32 %v2006, %v2104
        %v2136 = vadd.f32 %v2007, %v2107
        %v2137 = vadd.f32 %v2008, %v2110
        %v2138 = vadd.f32 %v2009, %v2113
        %v2139 = vadd.f32 %v2010, %v2116
        %v2140 = vadd.f32 %v2011, %v2119
        %v2141 = vadd.f32 %v2012, %v2122
        %v2142 = vadd.f32 %v2013, %v2125
        %2143 = vrot.lane.b32.xlu0 %v1739, 104
        %v2144 = vpop.permute.xlu0 %2143
        %2145 = vrot.lane.b32.xlu0 %v1742, 104
        %v2146 = vpop.permute.xlu0 %2145
        %2147 = vrot.lane.b32.xlu0 %v1745, 104
        %v2148 = vpop.permute.xlu0 %2147
        %2149 = vrot.lane.b32.xlu0 %v1748, 104
        %v2150 = vpop.permute.xlu0 %2149
        %2151 = vrot.lane.b32.xlu0 %v1751, 104
        %v2152 = vpop.permute.xlu0 %2151
        %2153 = vrot.lane.b32.xlu0 %v1754, 104
        %v2154 = vpop.permute.xlu0 %2153
        %2155 = vrot.lane.b32.xlu0 %v1757, 104
        %v2156 = vpop.permute.xlu0 %2155
        %2157 = vrot.lane.b32.xlu0 %v1760, 104
        %v2158 = vpop.permute.xlu0 %2157
        %2159 = vrot.lane.b32.xlu0 %v1763, 104
        %v2160 = vpop.permute.xlu0 %2159
        %2161 = vrot.lane.b32.xlu0 %v1766, 104
        %v2162 = vpop.permute.xlu0 %2161
        %2163 = vrot.lane.b32.xlu0 %v1769, 104
        %v2164 = vpop.permute.xlu0 %2163
        %2165 = vrot.lane.b32.xlu0 %v1772, 104
        %v2166 = vpop.permute.xlu0 %2165
        %2167 = vrot.lane.b32.xlu0 %v1775, 104
        %v2168 = vpop.permute.xlu0 %2167
        %2169 = vrot.lane.b32.xlu0 %v1778, 104
        %v2170 = vpop.permute.xlu0 %2169
        %2171 = vrot.lane.b32.xlu0 %v1781, 104
        %v2172 = vpop.permute.xlu0 %2171
        %2173 = vrot.lane.b32.xlu0 %v1784, 104
        %v2174 = vpop.permute.xlu0 %2173
        %2191 = vmatpush.msra.mxu0 %v2174
        %2192 = vmatpush.msra.mxu0 %v2172
        %2193 = vmatpush.msra.mxu0 %v2170
        %2194 = vmatpush.msra.mxu0 %v2168
        %2195 = vmatpush.msra.mxu0 %v2166
        %2196 = vmatpush.msra.mxu0 %v2164
        %2197 = vmatpush.msra.mxu0 %v2162
        %2198 = vmatpush.msra.mxu0 %v2160
        %2199 = vmatpush.msra.mxu0 %v2158
        %2200 = vmatpush.msra.mxu0 %v2156
        %2201 = vmatpush.msra.mxu0 %v2154
        %2202 = vmatpush.msra.mxu0 %v2152
        %2203 = vmatpush.msra.mxu0 %v2150
        %2204 = vmatpush.msra.mxu0 %v2148
        %2205 = vmatpush.msra.mxu0 %v2146
        %2206 = vmatpush.msra.mxu0 %v2144
        %2207 = vmatmul.f32.gmra.mxu0 %v779
        %v2208 = vpop.f32.mrf.mxu0
        %v2209 = vadd.f32 0.0, %v2208
        %2210 = vmatmul.f32.gmra.mxu0 %v780
        %v2211 = vpop.f32.mrf.mxu0
        %v2212 = vadd.f32 0.0, %v2211
        %2213 = vmatmul.f32.gmra.mxu0 %v781
        %v2214 = vpop.f32.mrf.mxu0
        %v2215 = vadd.f32 0.0, %v2214
        %2216 = vmatmul.f32.gmra.mxu0 %v782
        %v2217 = vpop.f32.mrf.mxu0
        %v2218 = vadd.f32 0.0, %v2217
        %2219 = vmatmul.f32.gmra.mxu0 %v783
        %v2220 = vpop.f32.mrf.mxu0
        %v2221 = vadd.f32 0.0, %v2220
        %2222 = vmatmul.f32.gmra.mxu0 %v784
        %v2223 = vpop.f32.mrf.mxu0
        %v2224 = vadd.f32 0.0, %v2223
        %2225 = vmatmul.f32.gmra.mxu0 %v785
        %v2226 = vpop.f32.mrf.mxu0
        %v2227 = vadd.f32 0.0, %v2226
        %2228 = vmatmul.f32.gmra.mxu0 %v786
        %v2229 = vpop.f32.mrf.mxu0
        %v2230 = vadd.f32 0.0, %v2229
        %2231 = vmatmul.f32.gmra.mxu0 %v787
        %v2232 = vpop.f32.mrf.mxu0
        %v2233 = vadd.f32 0.0, %v2232
        %2234 = vmatmul.f32.gmra.mxu0 %v788
        %v2235 = vpop.f32.mrf.mxu0
        %v2236 = vadd.f32 0.0, %v2235
        %2237 = vmatmul.f32.gmra.mxu0 %v789
        %v2238 = vpop.f32.mrf.mxu0
        %v2239 = vadd.f32 0.0, %v2238
        %2240 = vmatmul.f32.gmra.mxu0 %v790
        %v2241 = vpop.f32.mrf.mxu0
        %v2242 = vadd.f32 0.0, %v2241
        %2243 = vmatmul.f32.gmra.mxu0 %v791
        %v2244 = vpop.f32.mrf.mxu0
        %v2245 = vadd.f32 0.0, %v2244
        %2246 = vmatmul.f32.gmra.mxu0 %v792
        %v2247 = vpop.f32.mrf.mxu0
        %v2248 = vadd.f32 0.0, %v2247
        %2249 = vmatmul.f32.gmra.mxu0 %v793
        %v2250 = vpop.f32.mrf.mxu0
        %v2251 = vadd.f32 0.0, %v2250
        %2252 = vmatmul.f32.gmra.mxu0 %v794
        %v2253 = vpop.f32.mrf.mxu0
        %v2254 = vadd.f32 0.0, %v2253
        %2255 = vdwg.mxu0
        %v2256 = vadd.f32 %v2127, %v2209
        %v2257 = vadd.f32 %v2128, %v2212
        %v2258 = vadd.f32 %v2129, %v2215
        %v2259 = vadd.f32 %v2130, %v2218
        %v2260 = vadd.f32 %v2131, %v2221
        %v2261 = vadd.f32 %v2132, %v2224
        %v2262 = vadd.f32 %v2133, %v2227
        %v2263 = vadd.f32 %v2134, %v2230
        %v2264 = vadd.f32 %v2135, %v2233
        %v2265 = vadd.f32 %v2136, %v2236
        %v2266 = vadd.f32 %v2137, %v2239
        %v2267 = vadd.f32 %v2138, %v2242
        %v2268 = vadd.f32 %v2139, %v2245
        %v2269 = vadd.f32 %v2140, %v2248
        %v2270 = vadd.f32 %v2141, %v2251
        %v2271 = vadd.f32 %v2142, %v2254
        %2272 = vrot.lane.b32.xlu0 %v1739, 96
        %v2273 = vpop.permute.xlu0 %2272
        %2274 = vrot.lane.b32.xlu0 %v1742, 96
        %v2275 = vpop.permute.xlu0 %2274
        %2276 = vrot.lane.b32.xlu0 %v1745, 96
        %v2277 = vpop.permute.xlu0 %2276
        %2278 = vrot.lane.b32.xlu0 %v1748, 96
        %v2279 = vpop.permute.xlu0 %2278
        %2280 = vrot.lane.b32.xlu0 %v1751, 96
        %v2281 = vpop.permute.xlu0 %2280
        %2282 = vrot.lane.b32.xlu0 %v1754, 96
        %v2283 = vpop.permute.xlu0 %2282
        %2284 = vrot.lane.b32.xlu0 %v1757, 96
        %v2285 = vpop.permute.xlu0 %2284
        %2286 = vrot.lane.b32.xlu0 %v1760, 96
        %v2287 = vpop.permute.xlu0 %2286
        %2288 = vrot.lane.b32.xlu0 %v1763, 96
        %v2289 = vpop.permute.xlu0 %2288
        %2290 = vrot.lane.b32.xlu0 %v1766, 96
        %v2291 = vpop.permute.xlu0 %2290
        %2292 = vrot.lane.b32.xlu0 %v1769, 96
        %v2293 = vpop.permute.xlu0 %2292
        %2294 = vrot.lane.b32.xlu0 %v1772, 96
        %v2295 = vpop.permute.xlu0 %2294
        %2296 = vrot.lane.b32.xlu0 %v1775, 96
        %v2297 = vpop.permute.xlu0 %2296
        %2298 = vrot.lane.b32.xlu0 %v1778, 96
        %v2299 = vpop.permute.xlu0 %2298
        %2300 = vrot.lane.b32.xlu0 %v1781, 96
        %v2301 = vpop.permute.xlu0 %2300
        %2302 = vrot.lane.b32.xlu0 %v1784, 96
        %v2303 = vpop.permute.xlu0 %2302
        %2320 = vmatpush.msra.mxu0 %v2303
        %2321 = vmatpush.msra.mxu0 %v2301
        %2322 = vmatpush.msra.mxu0 %v2299
        %2323 = vmatpush.msra.mxu0 %v2297
        %2324 = vmatpush.msra.mxu0 %v2295
        %2325 = vmatpush.msra.mxu0 %v2293
        %2326 = vmatpush.msra.mxu0 %v2291
        %2327 = vmatpush.msra.mxu0 %v2289
        %2328 = vmatpush.msra.mxu0 %v2287
        %2329 = vmatpush.msra.mxu0 %v2285
        %2330 = vmatpush.msra.mxu0 %v2283
        %2331 = vmatpush.msra.mxu0 %v2281
        %2332 = vmatpush.msra.mxu0 %v2279
        %2333 = vmatpush.msra.mxu0 %v2277
        %2334 = vmatpush.msra.mxu0 %v2275
        %2335 = vmatpush.msra.mxu0 %v2273
        %2336 = vmatmul.f32.gmra.mxu0 %v925
        %v2337 = vpop.f32.mrf.mxu0
        %v2338 = vadd.f32 0.0, %v2337
        %2339 = vmatmul.f32.gmra.mxu0 %v926
        %v2340 = vpop.f32.mrf.mxu0
        %v2341 = vadd.f32 0.0, %v2340
        %2342 = vmatmul.f32.gmra.mxu0 %v927
        %v2343 = vpop.f32.mrf.mxu0
        %v2344 = vadd.f32 0.0, %v2343
        %2345 = vmatmul.f32.gmra.mxu0 %v928
        %v2346 = vpop.f32.mrf.mxu0
        %v2347 = vadd.f32 0.0, %v2346
        %2348 = vmatmul.f32.gmra.mxu0 %v929
        %v2349 = vpop.f32.mrf.mxu0
        %v2350 = vadd.f32 0.0, %v2349
        %2351 = vmatmul.f32.gmra.mxu0 %v930
        %v2352 = vpop.f32.mrf.mxu0
        %v2353 = vadd.f32 0.0, %v2352
        %2354 = vmatmul.f32.gmra.mxu0 %v931
        %v2355 = vpop.f32.mrf.mxu0
        %v2356 = vadd.f32 0.0, %v2355
        %2357 = vmatmul.f32.gmra.mxu0 %v932
        %v2358 = vpop.f32.mrf.mxu0
        %v2359 = vadd.f32 0.0, %v2358
        %2360 = vmatmul.f32.gmra.mxu0 %v933
        %v2361 = vpop.f32.mrf.mxu0
        %v2362 = vadd.f32 0.0, %v2361
        %2363 = vmatmul.f32.gmra.mxu0 %v934
        %v2364 = vpop.f32.mrf.mxu0
        %v2365 = vadd.f32 0.0, %v2364
        %2366 = vmatmul.f32.gmra.mxu0 %v935
        %v2367 = vpop.f32.mrf.mxu0
        %v2368 = vadd.f32 0.0, %v2367
        %2369 = vmatmul.f32.gmra.mxu0 %v936
        %v2370 = vpop.f32.mrf.mxu0
        %v2371 = vadd.f32 0.0, %v2370
        %2372 = vmatmul.f32.gmra.mxu0 %v937
        %v2373 = vpop.f32.mrf.mxu0
        %v2374 = vadd.f32 0.0, %v2373
        %2375 = vmatmul.f32.gmra.mxu0 %v938
        %v2376 = vpop.f32.mrf.mxu0
        %v2377 = vadd.f32 0.0, %v2376
        %2378 = vmatmul.f32.gmra.mxu0 %v939
        %v2379 = vpop.f32.mrf.mxu0
        %v2380 = vadd.f32 0.0, %v2379
        %2381 = vmatmul.f32.gmra.mxu0 %v940
        %v2382 = vpop.f32.mrf.mxu0
        %v2383 = vadd.f32 0.0, %v2382
        %2384 = vdwg.mxu0
        %v2385 = vadd.f32 %v2256, %v2338
        %v2386 = vadd.f32 %v2257, %v2341
        %v2387 = vadd.f32 %v2258, %v2344
        %v2388 = vadd.f32 %v2259, %v2347
        %v2389 = vadd.f32 %v2260, %v2350
        %v2390 = vadd.f32 %v2261, %v2353
        %v2391 = vadd.f32 %v2262, %v2356
        %v2392 = vadd.f32 %v2263, %v2359
        %v2393 = vadd.f32 %v2264, %v2362
        %v2394 = vadd.f32 %v2265, %v2365
        %v2395 = vadd.f32 %v2266, %v2368
        %v2396 = vadd.f32 %v2267, %v2371
        %v2397 = vadd.f32 %v2268, %v2374
        %v2398 = vadd.f32 %v2269, %v2377
        %v2399 = vadd.f32 %v2270, %v2380
        %v2400 = vadd.f32 %v2271, %v2383
        %2401 = vrot.lane.b32.xlu0 %v1739, 88
        %v2402 = vpop.permute.xlu0 %2401
        %2403 = vrot.lane.b32.xlu0 %v1742, 88
        %v2404 = vpop.permute.xlu0 %2403
        %2405 = vrot.lane.b32.xlu0 %v1745, 88
        %v2406 = vpop.permute.xlu0 %2405
        %2407 = vrot.lane.b32.xlu0 %v1748, 88
        %v2408 = vpop.permute.xlu0 %2407
        %2409 = vrot.lane.b32.xlu0 %v1751, 88
        %v2410 = vpop.permute.xlu0 %2409
        %2411 = vrot.lane.b32.xlu0 %v1754, 88
        %v2412 = vpop.permute.xlu0 %2411
        %2413 = vrot.lane.b32.xlu0 %v1757, 88
        %v2414 = vpop.permute.xlu0 %2413
        %2415 = vrot.lane.b32.xlu0 %v1760, 88
        %v2416 = vpop.permute.xlu0 %2415
        %2417 = vrot.lane.b32.xlu0 %v1763, 88
        %v2418 = vpop.permute.xlu0 %2417
        %2419 = vrot.lane.b32.xlu0 %v1766, 88
        %v2420 = vpop.permute.xlu0 %2419
        %2421 = vrot.lane.b32.xlu0 %v1769, 88
        %v2422 = vpop.permute.xlu0 %2421
        %2423 = vrot.lane.b32.xlu0 %v1772, 88
        %v2424 = vpop.permute.xlu0 %2423
        %2425 = vrot.lane.b32.xlu0 %v1775, 88
        %v2426 = vpop.permute.xlu0 %2425
        %2427 = vrot.lane.b32.xlu0 %v1778, 88
        %v2428 = vpop.permute.xlu0 %2427
        %2429 = vrot.lane.b32.xlu0 %v1781, 88
        %v2430 = vpop.permute.xlu0 %2429
        %2431 = vrot.lane.b32.xlu0 %v1784, 88
        %v2432 = vpop.permute.xlu0 %2431
        %2449 = vmatpush.msra.mxu0 %v2432
        %2450 = vmatpush.msra.mxu0 %v2430
        %2451 = vmatpush.msra.mxu0 %v2428
        %2452 = vmatpush.msra.mxu0 %v2426
        %2453 = vmatpush.msra.mxu0 %v2424
        %2454 = vmatpush.msra.mxu0 %v2422
        %2455 = vmatpush.msra.mxu0 %v2420
        %2456 = vmatpush.msra.mxu0 %v2418
        %2457 = vmatpush.msra.mxu0 %v2416
        %2458 = vmatpush.msra.mxu0 %v2414
        %2459 = vmatpush.msra.mxu0 %v2412
        %2460 = vmatpush.msra.mxu0 %v2410
        %2461 = vmatpush.msra.mxu0 %v2408
        %2462 = vmatpush.msra.mxu0 %v2406
        %2463 = vmatpush.msra.mxu0 %v2404
        %2464 = vmatpush.msra.mxu0 %v2402
        %2465 = vmatmul.f32.gmra.mxu0 %v1071
        %v2466 = vpop.f32.mrf.mxu0
        %v2467 = vadd.f32 0.0, %v2466
        %2468 = vmatmul.f32.gmra.mxu0 %v1072
        %v2469 = vpop.f32.mrf.mxu0
        %v2470 = vadd.f32 0.0, %v2469
        %2471 = vmatmul.f32.gmra.mxu0 %v1073
        %v2472 = vpop.f32.mrf.mxu0
        %v2473 = vadd.f32 0.0, %v2472
        %2474 = vmatmul.f32.gmra.mxu0 %v1074
        %v2475 = vpop.f32.mrf.mxu0
        %v2476 = vadd.f32 0.0, %v2475
        %2477 = vmatmul.f32.gmra.mxu0 %v1075
        %v2478 = vpop.f32.mrf.mxu0
        %v2479 = vadd.f32 0.0, %v2478
        %2480 = vmatmul.f32.gmra.mxu0 %v1076
        %v2481 = vpop.f32.mrf.mxu0
        %v2482 = vadd.f32 0.0, %v2481
        %2483 = vmatmul.f32.gmra.mxu0 %v1077
        %v2484 = vpop.f32.mrf.mxu0
        %v2485 = vadd.f32 0.0, %v2484
        %2486 = vmatmul.f32.gmra.mxu0 %v1078
        %v2487 = vpop.f32.mrf.mxu0
        %v2488 = vadd.f32 0.0, %v2487
        %2489 = vmatmul.f32.gmra.mxu0 %v1079
        %v2490 = vpop.f32.mrf.mxu0
        %v2491 = vadd.f32 0.0, %v2490
        %2492 = vmatmul.f32.gmra.mxu0 %v1080
        %v2493 = vpop.f32.mrf.mxu0
        %v2494 = vadd.f32 0.0, %v2493
        %2495 = vmatmul.f32.gmra.mxu0 %v1081
        %v2496 = vpop.f32.mrf.mxu0
        %v2497 = vadd.f32 0.0, %v2496
        %2498 = vmatmul.f32.gmra.mxu0 %v1082
        %v2499 = vpop.f32.mrf.mxu0
        %v2500 = vadd.f32 0.0, %v2499
        %2501 = vmatmul.f32.gmra.mxu0 %v1083
        %v2502 = vpop.f32.mrf.mxu0
        %v2503 = vadd.f32 0.0, %v2502
        %2504 = vmatmul.f32.gmra.mxu0 %v1084
        %v2505 = vpop.f32.mrf.mxu0
        %v2506 = vadd.f32 0.0, %v2505
        %2507 = vmatmul.f32.gmra.mxu0 %v1085
        %v2508 = vpop.f32.mrf.mxu0
        %v2509 = vadd.f32 0.0, %v2508
        %2510 = vmatmul.f32.gmra.mxu0 %v1086
        %v2511 = vpop.f32.mrf.mxu0
        %v2512 = vadd.f32 0.0, %v2511
        %2513 = vdwg.mxu0
        %v2514 = vadd.f32 %v2385, %v2467
        %v2515 = vadd.f32 %v2386, %v2470
        %v2516 = vadd.f32 %v2387, %v2473
        %v2517 = vadd.f32 %v2388, %v2476
        %v2518 = vadd.f32 %v2389, %v2479
        %v2519 = vadd.f32 %v2390, %v2482
        %v2520 = vadd.f32 %v2391, %v2485
        %v2521 = vadd.f32 %v2392, %v2488
        %v2522 = vadd.f32 %v2393, %v2491
        %v2523 = vadd.f32 %v2394, %v2494
        %v2524 = vadd.f32 %v2395, %v2497
        %v2525 = vadd.f32 %v2396, %v2500
        %v2526 = vadd.f32 %v2397, %v2503
        %v2527 = vadd.f32 %v2398, %v2506
        %v2528 = vadd.f32 %v2399, %v2509
        %v2529 = vadd.f32 %v2400, %v2512
        %2530 = vrot.lane.b32.xlu0 %v1739, 80
        %v2531 = vpop.permute.xlu0 %2530
        %2532 = vrot.lane.b32.xlu0 %v1742, 80
        %v2533 = vpop.permute.xlu0 %2532
        %2534 = vrot.lane.b32.xlu0 %v1745, 80
        %v2535 = vpop.permute.xlu0 %2534
        %2536 = vrot.lane.b32.xlu0 %v1748, 80
        %v2537 = vpop.permute.xlu0 %2536
        %2538 = vrot.lane.b32.xlu0 %v1751, 80
        %v2539 = vpop.permute.xlu0 %2538
        %2540 = vrot.lane.b32.xlu0 %v1754, 80
        %v2541 = vpop.permute.xlu0 %2540
        %2542 = vrot.lane.b32.xlu0 %v1757, 80
        %v2543 = vpop.permute.xlu0 %2542
        %2544 = vrot.lane.b32.xlu0 %v1760, 80
        %v2545 = vpop.permute.xlu0 %2544
        %2546 = vrot.lane.b32.xlu0 %v1763, 80
        %v2547 = vpop.permute.xlu0 %2546
        %2548 = vrot.lane.b32.xlu0 %v1766, 80
        %v2549 = vpop.permute.xlu0 %2548
        %2550 = vrot.lane.b32.xlu0 %v1769, 80
        %v2551 = vpop.permute.xlu0 %2550
        %2552 = vrot.lane.b32.xlu0 %v1772, 80
        %v2553 = vpop.permute.xlu0 %2552
        %2554 = vrot.lane.b32.xlu0 %v1775, 80
        %v2555 = vpop.permute.xlu0 %2554
        %2556 = vrot.lane.b32.xlu0 %v1778, 80
        %v2557 = vpop.permute.xlu0 %2556
        %2558 = vrot.lane.b32.xlu0 %v1781, 80
        %v2559 = vpop.permute.xlu0 %2558
        %2560 = vrot.lane.b32.xlu0 %v1784, 80
        %v2561 = vpop.permute.xlu0 %2560
        %2578 = vmatpush.msra.mxu0 %v2561
        %2579 = vmatpush.msra.mxu0 %v2559
        %2580 = vmatpush.msra.mxu0 %v2557
        %2581 = vmatpush.msra.mxu0 %v2555
        %2582 = vmatpush.msra.mxu0 %v2553
        %2583 = vmatpush.msra.mxu0 %v2551
        %2584 = vmatpush.msra.mxu0 %v2549
        %2585 = vmatpush.msra.mxu0 %v2547
        %2586 = vmatpush.msra.mxu0 %v2545
        %2587 = vmatpush.msra.mxu0 %v2543
        %2588 = vmatpush.msra.mxu0 %v2541
        %2589 = vmatpush.msra.mxu0 %v2539
        %2590 = vmatpush.msra.mxu0 %v2537
        %2591 = vmatpush.msra.mxu0 %v2535
        %2592 = vmatpush.msra.mxu0 %v2533
        %2593 = vmatpush.msra.mxu0 %v2531
        %2594 = vmatmul.f32.gmra.mxu0 %v1217
        %v2595 = vpop.f32.mrf.mxu0
        %v2596 = vadd.f32 0.0, %v2595
        %2597 = vmatmul.f32.gmra.mxu0 %v1218
        %v2598 = vpop.f32.mrf.mxu0
        %v2599 = vadd.f32 0.0, %v2598
        %2600 = vmatmul.f32.gmra.mxu0 %v1219
        %v2601 = vpop.f32.mrf.mxu0
        %v2602 = vadd.f32 0.0, %v2601
        %2603 = vmatmul.f32.gmra.mxu0 %v1220
        %v2604 = vpop.f32.mrf.mxu0
        %v2605 = vadd.f32 0.0, %v2604
        %2606 = vmatmul.f32.gmra.mxu0 %v1221
        %v2607 = vpop.f32.mrf.mxu0
        %v2608 = vadd.f32 0.0, %v2607
        %2609 = vmatmul.f32.gmra.mxu0 %v1222
        %v2610 = vpop.f32.mrf.mxu0
        %v2611 = vadd.f32 0.0, %v2610
        %2612 = vmatmul.f32.gmra.mxu0 %v1223
        %v2613 = vpop.f32.mrf.mxu0
        %v2614 = vadd.f32 0.0, %v2613
        %2615 = vmatmul.f32.gmra.mxu0 %v1224
        %v2616 = vpop.f32.mrf.mxu0
        %v2617 = vadd.f32 0.0, %v2616
        %2618 = vmatmul.f32.gmra.mxu0 %v1225
        %v2619 = vpop.f32.mrf.mxu0
        %v2620 = vadd.f32 0.0, %v2619
        %2621 = vmatmul.f32.gmra.mxu0 %v1226
        %v2622 = vpop.f32.mrf.mxu0
        %v2623 = vadd.f32 0.0, %v2622
        %2624 = vmatmul.f32.gmra.mxu0 %v1227
        %v2625 = vpop.f32.mrf.mxu0
        %v2626 = vadd.f32 0.0, %v2625
        %2627 = vmatmul.f32.gmra.mxu0 %v1228
        %v2628 = vpop.f32.mrf.mxu0
        %v2629 = vadd.f32 0.0, %v2628
        %2630 = vmatmul.f32.gmra.mxu0 %v1229
        %v2631 = vpop.f32.mrf.mxu0
        %v2632 = vadd.f32 0.0, %v2631
        %2633 = vmatmul.f32.gmra.mxu0 %v1230
        %v2634 = vpop.f32.mrf.mxu0
        %v2635 = vadd.f32 0.0, %v2634
        %2636 = vmatmul.f32.gmra.mxu0 %v1231
        %v2637 = vpop.f32.mrf.mxu0
        %v2638 = vadd.f32 0.0, %v2637
        %2639 = vmatmul.f32.gmra.mxu0 %v1232
        %v2640 = vpop.f32.mrf.mxu0
        %v2641 = vadd.f32 0.0, %v2640
        %2642 = vdwg.mxu0
        %v2643 = vadd.f32 %v2514, %v2596
        %v2644 = vadd.f32 %v2515, %v2599
        %v2645 = vadd.f32 %v2516, %v2602
        %v2646 = vadd.f32 %v2517, %v2605
        %v2647 = vadd.f32 %v2518, %v2608
        %v2648 = vadd.f32 %v2519, %v2611
        %v2649 = vadd.f32 %v2520, %v2614
        %v2650 = vadd.f32 %v2521, %v2617
        %v2651 = vadd.f32 %v2522, %v2620
        %v2652 = vadd.f32 %v2523, %v2623
        %v2653 = vadd.f32 %v2524, %v2626
        %v2654 = vadd.f32 %v2525, %v2629
        %v2655 = vadd.f32 %v2526, %v2632
        %v2656 = vadd.f32 %v2527, %v2635
        %v2657 = vadd.f32 %v2528, %v2638
        %v2658 = vadd.f32 %v2529, %v2641
        %2659 = vrot.lane.b32.xlu0 %v1739, 72
        %v2660 = vpop.permute.xlu0 %2659
        %2661 = vrot.lane.b32.xlu0 %v1742, 72
        %v2662 = vpop.permute.xlu0 %2661
        %2663 = vrot.lane.b32.xlu0 %v1745, 72
        %v2664 = vpop.permute.xlu0 %2663
        %2665 = vrot.lane.b32.xlu0 %v1748, 72
        %v2666 = vpop.permute.xlu0 %2665
        %2667 = vrot.lane.b32.xlu0 %v1751, 72
        %v2668 = vpop.permute.xlu0 %2667
        %2669 = vrot.lane.b32.xlu0 %v1754, 72
        %v2670 = vpop.permute.xlu0 %2669
        %2671 = vrot.lane.b32.xlu0 %v1757, 72
        %v2672 = vpop.permute.xlu0 %2671
        %2673 = vrot.lane.b32.xlu0 %v1760, 72
        %v2674 = vpop.permute.xlu0 %2673
        %2675 = vrot.lane.b32.xlu0 %v1763, 72
        %v2676 = vpop.permute.xlu0 %2675
        %2677 = vrot.lane.b32.xlu0 %v1766, 72
        %v2678 = vpop.permute.xlu0 %2677
        %2679 = vrot.lane.b32.xlu0 %v1769, 72
        %v2680 = vpop.permute.xlu0 %2679
        %2681 = vrot.lane.b32.xlu0 %v1772, 72
        %v2682 = vpop.permute.xlu0 %2681
        %2683 = vrot.lane.b32.xlu0 %v1775, 72
        %v2684 = vpop.permute.xlu0 %2683
        %2685 = vrot.lane.b32.xlu0 %v1778, 72
        %v2686 = vpop.permute.xlu0 %2685
        %2687 = vrot.lane.b32.xlu0 %v1781, 72
        %v2688 = vpop.permute.xlu0 %2687
        %2689 = vrot.lane.b32.xlu0 %v1784, 72
        %v2690 = vpop.permute.xlu0 %2689
        %2707 = vmatpush.msra.mxu0 %v2690
        %2708 = vmatpush.msra.mxu0 %v2688
        %2709 = vmatpush.msra.mxu0 %v2686
        %2710 = vmatpush.msra.mxu0 %v2684
        %2711 = vmatpush.msra.mxu0 %v2682
        %2712 = vmatpush.msra.mxu0 %v2680
        %2713 = vmatpush.msra.mxu0 %v2678
        %2714 = vmatpush.msra.mxu0 %v2676
        %2715 = vmatpush.msra.mxu0 %v2674
        %2716 = vmatpush.msra.mxu0 %v2672
        %2717 = vmatpush.msra.mxu0 %v2670
        %2718 = vmatpush.msra.mxu0 %v2668
        %2719 = vmatpush.msra.mxu0 %v2666
        %2720 = vmatpush.msra.mxu0 %v2664
        %2721 = vmatpush.msra.mxu0 %v2662
        %2722 = vmatpush.msra.mxu0 %v2660
        %2723 = vmatmul.f32.gmra.mxu0 %v1363
        %v2724 = vpop.f32.mrf.mxu0
        %v2725 = vadd.f32 0.0, %v2724
        %2726 = vmatmul.f32.gmra.mxu0 %v1364
        %v2727 = vpop.f32.mrf.mxu0
        %v2728 = vadd.f32 0.0, %v2727
        %2729 = vmatmul.f32.gmra.mxu0 %v1365
        %v2730 = vpop.f32.mrf.mxu0
        %v2731 = vadd.f32 0.0, %v2730
        %2732 = vmatmul.f32.gmra.mxu0 %v1366
        %v2733 = vpop.f32.mrf.mxu0
        %v2734 = vadd.f32 0.0, %v2733
        %2735 = vmatmul.f32.gmra.mxu0 %v1367
        %v2736 = vpop.f32.mrf.mxu0
        %v2737 = vadd.f32 0.0, %v2736
        %2738 = vmatmul.f32.gmra.mxu0 %v1368
        %v2739 = vpop.f32.mrf.mxu0
        %v2740 = vadd.f32 0.0, %v2739
        %2741 = vmatmul.f32.gmra.mxu0 %v1369
        %v2742 = vpop.f32.mrf.mxu0
        %v2743 = vadd.f32 0.0, %v2742
        %2744 = vmatmul.f32.gmra.mxu0 %v1370
        %v2745 = vpop.f32.mrf.mxu0
        %v2746 = vadd.f32 0.0, %v2745
        %2747 = vmatmul.f32.gmra.mxu0 %v1371
        %v2748 = vpop.f32.mrf.mxu0
        %v2749 = vadd.f32 0.0, %v2748
        %2750 = vmatmul.f32.gmra.mxu0 %v1372
        %v2751 = vpop.f32.mrf.mxu0
        %v2752 = vadd.f32 0.0, %v2751
        %2753 = vmatmul.f32.gmra.mxu0 %v1373
        %v2754 = vpop.f32.mrf.mxu0
        %v2755 = vadd.f32 0.0, %v2754
        %2756 = vmatmul.f32.gmra.mxu0 %v1374
        %v2757 = vpop.f32.mrf.mxu0
        %v2758 = vadd.f32 0.0, %v2757
        %2759 = vmatmul.f32.gmra.mxu0 %v1375
        %v2760 = vpop.f32.mrf.mxu0
        %v2761 = vadd.f32 0.0, %v2760
        %2762 = vmatmul.f32.gmra.mxu0 %v1376
        %v2763 = vpop.f32.mrf.mxu0
        %v2764 = vadd.f32 0.0, %v2763
        %2765 = vmatmul.f32.gmra.mxu0 %v1377
        %v2766 = vpop.f32.mrf.mxu0
        %v2767 = vadd.f32 0.0, %v2766
        %2768 = vmatmul.f32.gmra.mxu0 %v1378
        %v2769 = vpop.f32.mrf.mxu0
        %v2770 = vadd.f32 0.0, %v2769
        %2771 = vdwg.mxu0
        %v2772 = vadd.f32 %v2643, %v2725
        %v2773 = vadd.f32 %v2644, %v2728
        %v2774 = vadd.f32 %v2645, %v2731
        %v2775 = vadd.f32 %v2646, %v2734
        %v2776 = vadd.f32 %v2647, %v2737
        %v2777 = vadd.f32 %v2648, %v2740
        %v2778 = vadd.f32 %v2649, %v2743
        %v2779 = vadd.f32 %v2650, %v2746
        %v2780 = vadd.f32 %v2651, %v2749
        %v2781 = vadd.f32 %v2652, %v2752
        %v2782 = vadd.f32 %v2653, %v2755
        %v2783 = vadd.f32 %v2654, %v2758
        %v2784 = vadd.f32 %v2655, %v2761
        %v2785 = vadd.f32 %v2656, %v2764
        %v2786 = vadd.f32 %v2657, %v2767
        %v2787 = vadd.f32 %v2658, %v2770
        %2788 = vrot.lane.b32.xlu0 %v1739, 64
        %v2789 = vpop.permute.xlu0 %2788
        %2790 = vrot.lane.b32.xlu0 %v1742, 64
        %v2791 = vpop.permute.xlu0 %2790
        %2792 = vrot.lane.b32.xlu0 %v1745, 64
        %v2793 = vpop.permute.xlu0 %2792
        %2794 = vrot.lane.b32.xlu0 %v1748, 64
        %v2795 = vpop.permute.xlu0 %2794
        %2796 = vrot.lane.b32.xlu0 %v1751, 64
        %v2797 = vpop.permute.xlu0 %2796
        %2798 = vrot.lane.b32.xlu0 %v1754, 64
        %v2799 = vpop.permute.xlu0 %2798
        %2800 = vrot.lane.b32.xlu0 %v1757, 64
        %v2801 = vpop.permute.xlu0 %2800
        %2802 = vrot.lane.b32.xlu0 %v1760, 64
        %v2803 = vpop.permute.xlu0 %2802
        %2804 = vrot.lane.b32.xlu0 %v1763, 64
        %v2805 = vpop.permute.xlu0 %2804
        %2806 = vrot.lane.b32.xlu0 %v1766, 64
        %v2807 = vpop.permute.xlu0 %2806
        %2808 = vrot.lane.b32.xlu0 %v1769, 64
        %v2809 = vpop.permute.xlu0 %2808
        %2810 = vrot.lane.b32.xlu0 %v1772, 64
        %v2811 = vpop.permute.xlu0 %2810
        %2812 = vrot.lane.b32.xlu0 %v1775, 64
        %v2813 = vpop.permute.xlu0 %2812
        %2814 = vrot.lane.b32.xlu0 %v1778, 64
        %v2815 = vpop.permute.xlu0 %2814
        %2816 = vrot.lane.b32.xlu0 %v1781, 64
        %v2817 = vpop.permute.xlu0 %2816
        %2818 = vrot.lane.b32.xlu0 %v1784, 64
        %v2819 = vpop.permute.xlu0 %2818
        %2836 = vmatpush.msra.mxu0 %v2819
        %2837 = vmatpush.msra.mxu0 %v2817
        %2838 = vmatpush.msra.mxu0 %v2815
        %2839 = vmatpush.msra.mxu0 %v2813
        %2840 = vmatpush.msra.mxu0 %v2811
        %2841 = vmatpush.msra.mxu0 %v2809
        %2842 = vmatpush.msra.mxu0 %v2807
        %2843 = vmatpush.msra.mxu0 %v2805
        %2844 = vmatpush.msra.mxu0 %v2803
        %2845 = vmatpush.msra.mxu0 %v2801
        %2846 = vmatpush.msra.mxu0 %v2799
        %2847 = vmatpush.msra.mxu0 %v2797
        %2848 = vmatpush.msra.mxu0 %v2795
        %2849 = vmatpush.msra.mxu0 %v2793
        %2850 = vmatpush.msra.mxu0 %v2791
        %2851 = vmatpush.msra.mxu0 %v2789
        %2852 = vmatmul.f32.gmra.mxu0 %v1509
        %v2853 = vpop.f32.mrf.mxu0
        %v2854 = vadd.f32 0.0, %v2853
        %2855 = vmatmul.f32.gmra.mxu0 %v1510
        %v2856 = vpop.f32.mrf.mxu0
        %v2857 = vadd.f32 0.0, %v2856
        %2858 = vmatmul.f32.gmra.mxu0 %v1511
        %v2859 = vpop.f32.mrf.mxu0
        %v2860 = vadd.f32 0.0, %v2859
        %2861 = vmatmul.f32.gmra.mxu0 %v1512
        %v2862 = vpop.f32.mrf.mxu0
        %v2863 = vadd.f32 0.0, %v2862
        %2864 = vmatmul.f32.gmra.mxu0 %v1513
        %v2865 = vpop.f32.mrf.mxu0
        %v2866 = vadd.f32 0.0, %v2865
        %2867 = vmatmul.f32.gmra.mxu0 %v1514
        %v2868 = vpop.f32.mrf.mxu0
        %v2869 = vadd.f32 0.0, %v2868
        %2870 = vmatmul.f32.gmra.mxu0 %v1515
        %v2871 = vpop.f32.mrf.mxu0
        %v2872 = vadd.f32 0.0, %v2871
        %2873 = vmatmul.f32.gmra.mxu0 %v1516
        %v2874 = vpop.f32.mrf.mxu0
        %v2875 = vadd.f32 0.0, %v2874
        %2876 = vmatmul.f32.gmra.mxu0 %v1517
        %v2877 = vpop.f32.mrf.mxu0
        %v2878 = vadd.f32 0.0, %v2877
        %2879 = vmatmul.f32.gmra.mxu0 %v1518
        %v2880 = vpop.f32.mrf.mxu0
        %v2881 = vadd.f32 0.0, %v2880
        %2882 = vmatmul.f32.gmra.mxu0 %v1519
        %v2883 = vpop.f32.mrf.mxu0
        %v2884 = vadd.f32 0.0, %v2883
        %2885 = vmatmul.f32.gmra.mxu0 %v1520
        %v2886 = vpop.f32.mrf.mxu0
        %v2887 = vadd.f32 0.0, %v2886
        %2888 = vmatmul.f32.gmra.mxu0 %v1521
        %v2889 = vpop.f32.mrf.mxu0
        %v2890 = vadd.f32 0.0, %v2889
        %2891 = vmatmul.f32.gmra.mxu0 %v1522
        %v2892 = vpop.f32.mrf.mxu0
        %v2893 = vadd.f32 0.0, %v2892
        %2894 = vmatmul.f32.gmra.mxu0 %v1523
        %v2895 = vpop.f32.mrf.mxu0
        %v2896 = vadd.f32 0.0, %v2895
        %2897 = vmatmul.f32.gmra.mxu0 %v1524
        %v2898 = vpop.f32.mrf.mxu0
        %v2899 = vadd.f32 0.0, %v2898
        %2900 = vdwg.mxu0
        %v2901 = vadd.f32 %v2772, %v2854
        %v2902 = vadd.f32 %v2773, %v2857
        %v2903 = vadd.f32 %v2774, %v2860
        %v2904 = vadd.f32 %v2775, %v2863
        %v2905 = vadd.f32 %v2776, %v2866
        %v2906 = vadd.f32 %v2777, %v2869
        %v2907 = vadd.f32 %v2778, %v2872
        %v2908 = vadd.f32 %v2779, %v2875
        %v2909 = vadd.f32 %v2780, %v2878
        %v2910 = vadd.f32 %v2781, %v2881
        %v2911 = vadd.f32 %v2782, %v2884
        %v2912 = vadd.f32 %v2783, %v2887
        %v2913 = vadd.f32 %v2784, %v2890
        %v2914 = vadd.f32 %v2785, %v2893
        %v2915 = vadd.f32 %v2786, %v2896
        %v2916 = vadd.f32 %v2787, %v2899
        %v2917 = vmax.f32 %v2901, 0.0
        %v2918 = vmax.f32 %v2902, 0.0
        %v2919 = vmax.f32 %v2903, 0.0
        %v2920 = vmax.f32 %v2904, 0.0
        %v2921 = vmax.f32 %v2905, 0.0
        %v2922 = vmax.f32 %v2906, 0.0
        %v2923 = vmax.f32 %v2907, 0.0
        %v2924 = vmax.f32 %v2908, 0.0
        %v2925 = vmax.f32 %v2909, 0.0
        %v2926 = vmax.f32 %v2910, 0.0
        %v2927 = vmax.f32 %v2911, 0.0
        %v2928 = vmax.f32 %v2912, 0.0
        %v2929 = vmax.f32 %v2913, 0.0
        %v2930 = vmax.f32 %v2914, 0.0
        %v2931 = vmax.f32 %v2915, 0.0
        %v2932 = vmax.f32 %v2916, 0.0
        %v2933 = vld [vmem:[%s206 + $0x20] sm:$0xff]
        %v2934 = vld [vmem:[%s1] sm:$0xff]
        %v2935 = vld [vmem:[%s1 + $0x8] sm:$0xff]
        %v2936 = vld [vmem:[%s1 + $0x10] sm:$0xff]
        %v2937 = vld [vmem:[%s1 + $0x18] sm:$0xff]
        %v2938 = vld [vmem:[%s1 + $0x20] sm:$0xff]
        %v2939 = vld [vmem:[%s1 + $0x28] sm:$0xff]
        %v2940 = vld [vmem:[%s1 + $0x30] sm:$0xff]
        %v2941 = vld [vmem:[%s1 + $0x38] sm:$0xff]
        %v2942 = vld [vmem:[%s1 + $0x40] sm:$0xff]
        %v2943 = vld [vmem:[%s1 + $0x48] sm:$0xff]
        %v2944 = vld [vmem:[%s1 + $0x50] sm:$0xff]
        %v2945 = vld [vmem:[%s1 + $0x58] sm:$0xff]
        %v2946 = vld [vmem:[%s1 + $0x60] sm:$0xff]
        %v2947 = vld [vmem:[%s1 + $0x68] sm:$0xff]
        %v2948 = vld [vmem:[%s1 + $0x70] sm:$0xff]
        %v2949 = vld [vmem:[%s1 + $0x78] sm:$0xff]
        %v2950 = vld [vmem:[%s206 + $0x28] sm:$0x3]
        %vm2951 = vcmask 15360
        %v2953 = vsel %vm2951, %v2934, 0
        %v2956 = vsel %vm2951, %v2935, 0
        %v2959 = vsel %vm2951, %v2936, 0
        %v2962 = vsel %vm2951, %v2937, 0
        %v2965 = vsel %vm2951, %v2938, 0
        %v2968 = vsel %vm2951, %v2939, 0
        %v2971 = vsel %vm2951, %v2940, 0
        %v2974 = vsel %vm2951, %v2941, 0
        %v2977 = vsel %vm2951, %v2942, 0
        %v2980 = vsel %vm2951, %v2943, 0
        %v2983 = vsel %vm2951, %v2944, 0
        %v2986 = vsel %vm2951, %v2945, 0
        %v2989 = vsel %vm2951, %v2946, 0
        %v2992 = vsel %vm2951, %v2947, 0
        %v2995 = vsel %vm2951, %v2948, 0
        %v2998 = vsel %vm2951, %v2949, 0
        %vm3000 = vcmask 1041408
        %v3002 = vsel %vm3000, %v2950, 0
        %3004 = vmatpush.msra.mxu0 0.0
        %3005 = vmatpush.msra.mxu0 0.0
        %3006 = vmatpush.msra.mxu0 0.0
        %3007 = vmatpush.msra.mxu0 0.0
        %3008 = vmatpush.msra.mxu0 0.0
        %3009 = vmatpush.msra.mxu0 0.0
        %3010 = vmatpush.msra.mxu0 0.0
        %3011 = vmatpush.msra.mxu0 0.0
        %3012 = vmatpush.msra.mxu0 0.0
        %3013 = vmatpush.msra.mxu0 0.0
        %3014 = vmatpush.msra.mxu0 0.0
        %3015 = vmatpush.msra.mxu0 0.0
        %3016 = vmatpush.msra.mxu0 0.0
        %3017 = vmatpush.msra.mxu0 0.0
        %3018 = vmatpush.msra.mxu0 0.0
        %3019 = vmatpush.msra.mxu0 %v3002
        %3020 = vmatmul.f32.gmra.mxu0 %v2953
        %v3021 = vpop.f32.mrf.mxu0
        %v3022 = vadd.f32 0.0, %v3021
        %3023 = vmatmul.f32.gmra.mxu0 %v2956
        %v3024 = vpop.f32.mrf.mxu0
        %v3025 = vadd.f32 0.0, %v3024
        %3026 = vmatmul.f32.gmra.mxu0 %v2959
        %v3027 = vpop.f32.mrf.mxu0
        %v3028 = vadd.f32 0.0, %v3027
        %3029 = vmatmul.f32.gmra.mxu0 %v2962
        %v3030 = vpop.f32.mrf.mxu0
        %v3031 = vadd.f32 0.0, %v3030
        %3032 = vmatmul.f32.gmra.mxu0 %v2965
        %v3033 = vpop.f32.mrf.mxu0
        %v3034 = vadd.f32 0.0, %v3033
        %3035 = vmatmul.f32.gmra.mxu0 %v2968
        %v3036 = vpop.f32.mrf.mxu0
        %v3037 = vadd.f32 0.0, %v3036
        %3038 = vmatmul.f32.gmra.mxu0 %v2971
        %v3039 = vpop.f32.mrf.mxu0
        %v3040 = vadd.f32 0.0, %v3039
        %3041 = vmatmul.f32.gmra.mxu0 %v2974
        %v3042 = vpop.f32.mrf.mxu0
        %v3043 = vadd.f32 0.0, %v3042
        %3044 = vmatmul.f32.gmra.mxu0 %v2977
        %v3045 = vpop.f32.mrf.mxu0
        %v3046 = vadd.f32 0.0, %v3045
        %3047 = vmatmul.f32.gmra.mxu0 %v2980
        %v3048 = vpop.f32.mrf.mxu0
        %v3049 = vadd.f32 0.0, %v3048
        %3050 = vmatmul.f32.gmra.mxu0 %v2983
        %v3051 = vpop.f32.mrf.mxu0
        %v3052 = vadd.f32 0.0, %v3051
        %3053 = vmatmul.f32.gmra.mxu0 %v2986
        %v3054 = vpop.f32.mrf.mxu0
        %v3055 = vadd.f32 0.0, %v3054
        %3056 = vmatmul.f32.gmra.mxu0 %v2989
        %v3057 = vpop.f32.mrf.mxu0
        %v3058 = vadd.f32 0.0, %v3057
        %3059 = vmatmul.f32.gmra.mxu0 %v2992
        %v3060 = vpop.f32.mrf.mxu0
        %v3061 = vadd.f32 0.0, %v3060
        %3062 = vmatmul.f32.gmra.mxu0 %v2995
        %v3063 = vpop.f32.mrf.mxu0
        %v3064 = vadd.f32 0.0, %v3063
        %3065 = vmatmul.f32.gmra.mxu0 %v2998
        %v3066 = vpop.f32.mrf.mxu0
        %v3067 = vadd.f32 0.0, %v3066
        %3068 = vdwg.mxu0
        %v3070 = vsel %vm1672, %v2917, 0
        %v3073 = vsel %vm1672, %v2918, 0
        %v3076 = vsel %vm1672, %v2919, 0
        %v3079 = vsel %vm1672, %v2920, 0
        %v3082 = vsel %vm1672, %v2921, 0
        %v3085 = vsel %vm1672, %v2922, 0
        %v3088 = vsel %vm1672, %v2923, 0
        %v3091 = vsel %vm1672, %v2924, 0
        %v3094 = vsel %vm1672, %v2925, 0
        %v3097 = vsel %vm1672, %v2926, 0
        %v3100 = vsel %vm1672, %v2927, 0
        %v3103 = vsel %vm1672, %v2928, 0
        %v3106 = vsel %vm1672, %v2929, 0
        %v3109 = vsel %vm1672, %v2930, 0
        %v3112 = vsel %vm1672, %v2931, 0
        %v3115 = vsel %vm1672, %v2932, 0
        %3117 = vmatpush.msra.mxu0 0.0
        %3118 = vmatpush.msra.mxu0 0.0
        %3119 = vmatpush.msra.mxu0 0.0
        %3120 = vmatpush.msra.mxu0 0.0
        %3121 = vmatpush.msra.mxu0 0.0
        %3122 = vmatpush.msra.mxu0 0.0
        %3123 = vmatpush.msra.mxu0 0.0
        %3124 = vmatpush.msra.mxu0 0.0
        %3125 = vmatpush.msra.mxu0 0.0
        %3126 = vmatpush.msra.mxu0 0.0
        %3127 = vmatpush.msra.mxu0 0.0
        %3128 = vmatpush.msra.mxu0 0.0
        %3129 = vmatpush.msra.mxu0 0.0
        %3130 = vmatpush.msra.mxu0 0.0
        %3131 = vmatpush.msra.mxu0 0.0
        %3132 = vmatpush.msra.mxu0 %v2933
        %3133 = vmatmul.f32.gmra.mxu0 %v3070
        %v3134 = vpop.f32.mrf.mxu0
        %v3135 = vadd.f32 %v3022, %v3134
        %3136 = vmatmul.f32.gmra.mxu0 %v3073
        %v3137 = vpop.f32.mrf.mxu0
        %v3138 = vadd.f32 %v3025, %v3137
        %3139 = vmatmul.f32.gmra.mxu0 %v3076
        %v3140 = vpop.f32.mrf.mxu0
        %v3141 = vadd.f32 %v3028, %v3140
        %3142 = vmatmul.f32.gmra.mxu0 %v3079
        %v3143 = vpop.f32.mrf.mxu0
        %v3144 = vadd.f32 %v3031, %v3143
        %3145 = vmatmul.f32.gmra.mxu0 %v3082
        %v3146 = vpop.f32.mrf.mxu0
        %v3147 = vadd.f32 %v3034, %v3146
        %3148 = vmatmul.f32.gmra.mxu0 %v3085
        %v3149 = vpop.f32.mrf.mxu0
        %v3150 = vadd.f32 %v3037, %v3149
        %3151 = vmatmul.f32.gmra.mxu0 %v3088
        %v3152 = vpop.f32.mrf.mxu0
        %v3153 = vadd.f32 %v3040, %v3152
        %3154 = vmatmul.f32.gmra.mxu0 %v3091
        %v3155 = vpop.f32.mrf.mxu0
        %v3156 = vadd.f32 %v3043, %v3155
        %3157 = vmatmul.f32.gmra.mxu0 %v3094
        %v3158 = vpop.f32.mrf.mxu0
        %v3159 = vadd.f32 %v3046, %v3158
        %3160 = vmatmul.f32.gmra.mxu0 %v3097
        %v3161 = vpop.f32.mrf.mxu0
        %v3162 = vadd.f32 %v3049, %v3161
        %3163 = vmatmul.f32.gmra.mxu0 %v3100
        %v3164 = vpop.f32.mrf.mxu0
        %v3165 = vadd.f32 %v3052, %v3164
        %3166 = vmatmul.f32.gmra.mxu0 %v3103
        %v3167 = vpop.f32.mrf.mxu0
        %v3168 = vadd.f32 %v3055, %v3167
        %3169 = vmatmul.f32.gmra.mxu0 %v3106
        %v3170 = vpop.f32.mrf.mxu0
        %v3171 = vadd.f32 %v3058, %v3170
        %3172 = vmatmul.f32.gmra.mxu0 %v3109
        %v3173 = vpop.f32.mrf.mxu0
        %v3174 = vadd.f32 %v3061, %v3173
        %3175 = vmatmul.f32.gmra.mxu0 %v3112
        %v3176 = vpop.f32.mrf.mxu0
        %v3177 = vadd.f32 %v3064, %v3176
        %3178 = vmatmul.f32.gmra.mxu0 %v3115
        %v3179 = vpop.f32.mrf.mxu0
        %v3180 = vadd.f32 %v3067, %v3179
        %3181 = vdwg.mxu0
        %v3182 = vld [vmem:[%s206 + $0x30] sm:$0x1]
        %v3183 = vperm.slane %v3182, 0
        %v3184 = vadd.f32 %v3135, %v3183
        %v3185 = vadd.f32 %v3138, %v3183
        %v3186 = vadd.f32 %v3141, %v3183
        %v3187 = vadd.f32 %v3144, %v3183
        %v3188 = vadd.f32 %v3147, %v3183
        %v3189 = vadd.f32 %v3150, %v3183
        %v3190 = vadd.f32 %v3153, %v3183
        %v3191 = vadd.f32 %v3156, %v3183
        %v3192 = vadd.f32 %v3159, %v3183
        %v3193 = vadd.f32 %v3162, %v3183
        %v3194 = vadd.f32 %v3165, %v3183
        %v3195 = vadd.f32 %v3168, %v3183
        %v3196 = vadd.f32 %v3171, %v3183
        %v3197 = vadd.f32 %v3174, %v3183
        %v3198 = vadd.f32 %v3177, %v3183
        %v3199 = vadd.f32 %v3180, %v3183
        %3200 = vxpose.xlu0.b32.start [1/16] %v3184, 128
        %3201 = vxpose.xlu0.b32.cont [2/16] %v3185, 128
        %3202 = vxpose.xlu0.b32.cont [3/16] %v3186, 128
        %3203 = vxpose.xlu0.b32.cont [4/16] %v3187, 128
        %3204 = vxpose.xlu0.b32.cont [5/16] %v3188, 128
        %3205 = vxpose.xlu0.b32.cont [6/16] %v3189, 128
        %3206 = vxpose.xlu0.b32.cont [7/16] %v3190, 128
        %3207 = vxpose.xlu0.b32.cont [8/16] %v3191, 128
        %3208 = vxpose.xlu0.b32.cont [9/16] 0.0, 128
        %3209 = vxpose.xlu0.b32.cont [10/16] 0.0, 128
        %3210 = vxpose.xlu0.b32.cont [11/16] 0.0, 128
        %3211 = vxpose.xlu0.b32.cont [12/16] 0.0, 128
        %3212 = vxpose.xlu0.b32.cont [13/16] 0.0, 128
        %3213 = vxpose.xlu0.b32.cont [14/16] 0.0, 128
        %3214 = vxpose.xlu0.b32.cont [15/16] 0.0, 128
        %3215 = vxpose.xlu0.b32.end [16/16] 0.0, 128
        %v3216 = vpop.trf.xlu0
        %v3217 = vpop.trf.xlu0
        %v3218 = vpop.trf.xlu0
        %v3219 = vpop.trf.xlu0
        %v3220 = vpop.trf.xlu0
        %v3221 = vpop.trf.xlu0
        %v3222 = vpop.trf.xlu0
        %v3223 = vpop.trf.xlu0
        %v3224 = vpop.trf.xlu0
        %v3225 = vpop.trf.xlu0
        %v3226 = vpop.trf.xlu0
        %v3227 = vpop.trf.xlu0
        %v3228 = vpop.trf.xlu0
        %v3229 = vpop.trf.xlu0
        %v3230 = vpop.trf.xlu0
        %v3231 = vpop.trf.xlu0
        %3232 = vxpose.xlu0.b32.start [1/16] %v3192, 128
        %3233 = vxpose.xlu0.b32.cont [2/16] %v3193, 128
        %3234 = vxpose.xlu0.b32.cont [3/16] %v3194, 128
        %3235 = vxpose.xlu0.b32.cont [4/16] %v3195, 128
        %3236 = vxpose.xlu0.b32.cont [5/16] %v3196, 128
        %3237 = vxpose.xlu0.b32.cont [6/16] %v3197, 128
        %3238 = vxpose.xlu0.b32.cont [7/16] %v3198, 128
        %3239 = vxpose.xlu0.b32.cont [8/16] %v3199, 128
        %3240 = vxpose.xlu0.b32.cont [9/16] 0.0, 128
        %3241 = vxpose.xlu0.b32.cont [10/16] 0.0, 128
        %3242 = vxpose.xlu0.b32.cont [11/16] 0.0, 128
        %3243 = vxpose.xlu0.b32.cont [12/16] 0.0, 128
        %3244 = vxpose.xlu0.b32.cont [13/16] 0.0, 128
        %3245 = vxpose.xlu0.b32.cont [14/16] 0.0, 128
        %3246 = vxpose.xlu0.b32.cont [15/16] 0.0, 128
        %3247 = vxpose.xlu0.b32.end [16/16] 0.0, 128
        %v3248 = vpop.trf.xlu0
        %v3249 = vpop.trf.xlu0
        %v3250 = vpop.trf.xlu0
        %v3251 = vpop.trf.xlu0
        %v3252 = vpop.trf.xlu0
        %v3253 = vpop.trf.xlu0
        %v3254 = vpop.trf.xlu0
        %v3255 = vpop.trf.xlu0
        %v3256 = vpop.trf.xlu0
        %v3257 = vpop.trf.xlu0
        %v3258 = vpop.trf.xlu0
        %v3259 = vpop.trf.xlu0
        %v3260 = vpop.trf.xlu0
        %v3261 = vpop.trf.xlu0
        %v3262 = vpop.trf.xlu0
        %v3263 = vpop.trf.xlu0
        %v3264 = vld [vmem:[%s206 + $0x38] sm:$0x1]
        %v3265 = vld [vmem:[%s206 + $0x40] sm:$0x1]
        %v3266 = vld [vmem:[%s206 + $0x48] sm:$0xff]
        %v3267 = vld [vmem:[%s206 + $0x50] sm:$0xff]
        %v3268 = vld [vmem:[%s206 + $0x58] sm:$0xff]
        %v3269 = vld [vmem:[%s206 + $0x60] sm:$0xff]
        %v3270 = vld [vmem:[%s206 + $0x68] sm:$0xff]
        %v3271 = vld [vmem:[%s206 + $0x70] sm:$0xff]
        %v3272 = vld [vmem:[%s206 + $0x78] sm:$0xff]
        %v3273 = vld [vmem:[%s206 + $0x80] sm:$0xff]
        %v3274 = vld [vmem:[%s206 + $0x88] sm:$0x1]
        %v3275 = vld [vmem:[%s206 + $0x90] sm:$0xff]
        %v3276 = vld [vmem:[%s206 + $0x98] sm:$0xff]
        %v3277 = vld [vmem:[%s206 + $0xa0] sm:$0x1]
        %vm3278 = vcmask 523264
        %v3279 = vsel %vm3278, %v3216, 0.0
        %3280 = vadd.xlane.f32.xlu0 %v3279
        %v3281 = vpop.xlane.xlu0 %3280
        %v3282 = vsel %vm3278, %v3217, 0.0
        %3283 = vadd.xlane.f32.xlu0 %v3282
        %v3284 = vpop.xlane.xlu0 %3283
        %v3285 = vsel %vm3278, %v3218, 0.0
        %3286 = vadd.xlane.f32.xlu0 %v3285
        %v3287 = vpop.xlane.xlu0 %3286
        %v3288 = vsel %vm3278, %v3219, 0.0
        %3289 = vadd.xlane.f32.xlu0 %v3288
        %v3290 = vpop.xlane.xlu0 %3289
        %v3291 = vsel %vm3278, %v3248, 0.0
        %3292 = vadd.xlane.f32.xlu0 %v3291
        %v3293 = vpop.xlane.xlu0 %3292
        %v3294 = vsel %vm3278, %v3249, 0.0
        %3295 = vadd.xlane.f32.xlu0 %v3294
        %v3296 = vpop.xlane.xlu0 %3295
        %v3297 = vsel %vm3278, %v3250, 0.0
        %3298 = vadd.xlane.f32.xlu0 %v3297
        %v3299 = vpop.xlane.xlu0 %3298
        %v3300 = vsel %vm3278, %v3251, 0.0
        %3301 = vadd.xlane.f32.xlu0 %v3300
        %v3302 = vpop.xlane.xlu0 %3301
        %v3303 = vrcp.pop 64.0
        %v3304 = vmul.f32 64.0, %v3303
        %v3305 = vsub.f32 1.0, %v3304
        %v3306 = vmul.f32 %v3303, %v3305
        %v3307 = vadd.f32 %v3303, %v3306
        %vm3308 = vweird.f32 %v3303
        %v3309 = vsel %vm3308, %v3303, %v3307
        %v3310 = vmul.f32 %v3281, %v3309
        %v3311 = vmul.f32 %v3284, %v3309
        %v3312 = vmul.f32 %v3287, %v3309
        %v3313 = vmul.f32 %v3290, %v3309
        %v3314 = vmul.f32 %v3293, %v3309
        %v3315 = vmul.f32 %v3296, %v3309
        %v3316 = vmul.f32 %v3299, %v3309
        %v3317 = vmul.f32 %v3302, %v3309
        %v3318 = vsub.f32 %v3216, %v3310
        %v3319 = vsub.f32 %v3217, %v3311
        %v3320 = vsub.f32 %v3218, %v3312
        %v3321 = vsub.f32 %v3219, %v3313
        %v3322 = vsub.f32 %v3248, %v3314
        %v3323 = vsub.f32 %v3249, %v3315
        %v3324 = vsub.f32 %v3250, %v3316
        %v3325 = vsub.f32 %v3251, %v3317
        %v3326 = vmul.f32 %v3318, %v3318
        %v3327 = vmul.f32 %v3319, %v3319
        %v3328 = vmul.f32 %v3320, %v3320
        %v3329 = vmul.f32 %v3321, %v3321
        %v3330 = vmul.f32 %v3322, %v3322
        %v3331 = vmul.f32 %v3323, %v3323
        %v3332 = vmul.f32 %v3324, %v3324
        %v3333 = vmul.f32 %v3325, %v3325
        %v3334 = vsel %vm3278, %v3326, 0.0
        %3335 = vadd.xlane.f32.xlu0 %v3334
        %v3336 = vpop.xlane.xlu0 %3335
        %v3337 = vsel %vm3278, %v3327, 0.0
        %3338 = vadd.xlane.f32.xlu0 %v3337
        %v3339 = vpop.xlane.xlu0 %3338
        %v3340 = vsel %vm3278, %v3328, 0.0
        %3341 = vadd.xlane.f32.xlu0 %v3340
        %v3342 = vpop.xlane.xlu0 %3341
        %v3343 = vsel %vm3278, %v3329, 0.0
        %3344 = vadd.xlane.f32.xlu0 %v3343
        %v3345 = vpop.xlane.xlu0 %3344
        %v3346 = vsel %vm3278, %v3330, 0.0
        %3347 = vadd.xlane.f32.xlu0 %v3346
        %v3348 = vpop.xlane.xlu0 %3347
        %v3349 = vsel %vm3278, %v3331, 0.0
        %3350 = vadd.xlane.f32.xlu0 %v3349
        %v3351 = vpop.xlane.xlu0 %3350
        %v3352 = vsel %vm3278, %v3332, 0.0
        %3353 = vadd.xlane.f32.xlu0 %v3352
        %v3354 = vpop.xlane.xlu0 %3353
        %v3355 = vsel %vm3278, %v3333, 0.0
        %3356 = vadd.xlane.f32.xlu0 %v3355
        %v3357 = vpop.xlane.xlu0 %3356
        %v3358 = vmul.f32 %v3336, %v3309
        %v3359 = vmul.f32 %v3339, %v3309
        %v3360 = vmul.f32 %v3342, %v3309
        %v3361 = vmul.f32 %v3345, %v3309
        %v3362 = vmul.f32 %v3348, %v3309
        %v3363 = vmul.f32 %v3351, %v3309
        %v3364 = vmul.f32 %v3354, %v3309
        %v3365 = vmul.f32 %v3357, %v3309
        %v3366 = vadd.f32 %v3358, 1e-05
        %v3367 = vadd.f32 %v3359, 1e-05
        %v3368 = vadd.f32 %v3360, 1e-05
        %v3369 = vadd.f32 %v3361, 1e-05
        %v3370 = vadd.f32 %v3362, 1e-05
        %v3371 = vadd.f32 %v3363, 1e-05
        %v3372 = vadd.f32 %v3364, 1e-05
        %v3373 = vadd.f32 %v3365, 1e-05
        %v3374 = vrsqrt.pop %v3366
        %v3375 = vmul.f32 %v3374, %v3366
        %v3376 = vmul.f32 %v3375, %v3374
        %v3377 = vmul.f32 0.5, %v3376
        %v3378 = vsub.f32 1.5, %v3377
        %v3379 = vmul.f32 %v3374, %v3378
        %vm3380 = vweird.f32 %v3366
        %vm3381 = vweird.f32 %v3374
        %vm3382 = vmor %vm3380, %vm3381
        %v3383 = vsel %vm3382, %v3374, %v3379
        %v3384 = vrsqrt.pop %v3367
        %v3385 = vmul.f32 %v3384, %v3367
        %v3386 = vmul.f32 %v3385, %v3384
        %v3387 = vmul.f32 0.5, %v3386
        %v3388 = vsub.f32 1.5, %v3387
        %v3389 = vmul.f32 %v3384, %v3388
        %vm3390 = vweird.f32 %v3367
        %vm3391 = vweird.f32 %v3384
        %vm3392 = vmor %vm3390, %vm3391
        %v3393 = vsel %vm3392, %v3384, %v3389
        %v3394 = vrsqrt.pop %v3368
        %v3395 = vmul.f32 %v3394, %v3368
        %v3396 = vmul.f32 %v3395, %v3394
        %v3397 = vmul.f32 0.5, %v3396
        %v3398 = vsub.f32 1.5, %v3397
        %v3399 = vmul.f32 %v3394, %v3398
        %vm3400 = vweird.f32 %v3368
        %vm3401 = vweird.f32 %v3394
        %vm3402 = vmor %vm3400, %vm3401
        %v3403 = vsel %vm3402, %v3394, %v3399
        %v3404 = vrsqrt.pop %v3369
        %v3405 = vmul.f32 %v3404, %v3369
        %v3406 = vmul.f32 %v3405, %v3404
        %v3407 = vmul.f32 0.5, %v3406
        %v3408 = vsub.f32 1.5, %v3407
        %v3409 = vmul.f32 %v3404, %v3408
        %vm3410 = vweird.f32 %v3369
        %vm3411 = vweird.f32 %v3404
        %vm3412 = vmor %vm3410, %vm3411
        %v3413 = vsel %vm3412, %v3404, %v3409
        %v3414 = vrsqrt.pop %v3370
        %v3415 = vmul.f32 %v3414, %v3370
        %v3416 = vmul.f32 %v3415, %v3414
        %v3417 = vmul.f32 0.5, %v3416
        %v3418 = vsub.f32 1.5, %v3417
        %v3419 = vmul.f32 %v3414, %v3418
        %vm3420 = vweird.f32 %v3370
        %vm3421 = vweird.f32 %v3414
        %vm3422 = vmor %vm3420, %vm3421
        %v3423 = vsel %vm3422, %v3414, %v3419
        %v3424 = vrsqrt.pop %v3371
        %v3425 = vmul.f32 %v3424, %v3371
        %v3426 = vmul.f32 %v3425, %v3424
        %v3427 = vmul.f32 0.5, %v3426
        %v3428 = vsub.f32 1.5, %v3427
        %v3429 = vmul.f32 %v3424, %v3428
        %vm3430 = vweird.f32 %v3371
        %vm3431 = vweird.f32 %v3424
        %vm3432 = vmor %vm3430, %vm3431
        %v3433 = vsel %vm3432, %v3424, %v3429
        %v3434 = vrsqrt.pop %v3372
        %v3435 = vmul.f32 %v3434, %v3372
        %v3436 = vmul.f32 %v3435, %v3434
        %v3437 = vmul.f32 0.5, %v3436
        %v3438 = vsub.f32 1.5, %v3437
        %v3439 = vmul.f32 %v3434, %v3438
        %vm3440 = vweird.f32 %v3372
        %vm3441 = vweird.f32 %v3434
        %vm3442 = vmor %vm3440, %vm3441
        %v3443 = vsel %vm3442, %v3434, %v3439
        %v3444 = vrsqrt.pop %v3373
        %v3445 = vmul.f32 %v3444, %v3373
        %v3446 = vmul.f32 %v3445, %v3444
        %v3447 = vmul.f32 0.5, %v3446
        %v3448 = vsub.f32 1.5, %v3447
        %v3449 = vmul.f32 %v3444, %v3448
        %vm3450 = vweird.f32 %v3373
        %vm3451 = vweird.f32 %v3444
        %vm3452 = vmor %vm3450, %vm3451
        %v3453 = vsel %vm3452, %v3444, %v3449
        %v3454 = vmul.f32 %v3318, %v3383
        %v3455 = vmul.f32 %v3319, %v3393
        %v3456 = vmul.f32 %v3320, %v3403
        %v3457 = vmul.f32 %v3321, %v3413
        %v3458 = vmul.f32 %v3322, %v3423
        %v3459 = vmul.f32 %v3323, %v3433
        %v3460 = vmul.f32 %v3324, %v3443
        %v3461 = vmul.f32 %v3325, %v3453
        %v3462 = vperm.slane %v3264, 0
        %v3463 = vmul.f32 %v3454, %v3462
        %v3464 = vmul.f32 %v3455, %v3462
        %v3465 = vmul.f32 %v3456, %v3462
        %v3466 = vmul.f32 %v3457, %v3462
        %v3467 = vmul.f32 %v3458, %v3462
        %v3468 = vmul.f32 %v3459, %v3462
        %v3469 = vmul.f32 %v3460, %v3462
        %v3470 = vmul.f32 %v3461, %v3462
        %v3471 = vperm.slane %v3265, 0
        %v3472 = vadd.f32 %v3463, %v3471
        %v3473 = vadd.f32 %v3464, %v3471
        %v3474 = vadd.f32 %v3465, %v3471
        %v3475 = vadd.f32 %v3466, %v3471
        %v3476 = vadd.f32 %v3467, %v3471
        %v3477 = vadd.f32 %v3468, %v3471
        %v3478 = vadd.f32 %v3469, %v3471
        %v3479 = vadd.f32 %v3470, %v3471
        %v3480 = vperm.slane %v3274, 0
        %v3482 = vsel %vm3278, %v3472, 0
        %v3485 = vsel %vm3278, %v3473, 0
        %v3488 = vsel %vm3278, %v3474, 0
        %v3491 = vsel %vm3278, %v3475, 0
        %v3494 = vsel %vm3278, %v3476, 0
        %v3497 = vsel %vm3278, %v3477, 0
        %v3500 = vsel %vm3278, %v3478, 0
        %v3503 = vsel %vm3278, %v3479, 0
        %3505 = vmatpush.msra.mxu0 0.0
        %3506 = vmatpush.msra.mxu0 0.0
        %3507 = vmatpush.msra.mxu0 0.0
        %3508 = vmatpush.msra.mxu0 0.0
        %3509 = vmatpush.msra.mxu0 0.0
        %3510 = vmatpush.msra.mxu0 0.0
        %3511 = vmatpush.msra.mxu0 0.0
        %3512 = vmatpush.msra.mxu0 0.0
        %3513 = vmatpush.msra.mxu0 %v3273
        %3514 = vmatpush.msra.mxu0 %v3272
        %3515 = vmatpush.msra.mxu0 %v3271
        %3516 = vmatpush.msra.mxu0 %v3270
        %3517 = vmatpush.msra.mxu0 %v3269
        %3518 = vmatpush.msra.mxu0 %v3268
        %3519 = vmatpush.msra.mxu0 %v3267
        %3520 = vmatpush.msra.mxu0 %v3266
        %3521 = vmatmul.f32.gmra.mxu0 %v3482
        %v3522 = vpop.f32.mrf.mxu0
        %v3523 = vadd.f32 %v3480, %v3522
        %3524 = vmatmul.f32.gmra.mxu0 %v3485
        %v3525 = vpop.f32.mrf.mxu0
        %v3526 = vadd.f32 %v3480, %v3525
        %3527 = vmatmul.f32.gmra.mxu0 %v3488
        %v3528 = vpop.f32.mrf.mxu0
        %v3529 = vadd.f32 %v3480, %v3528
        %3530 = vmatmul.f32.gmra.mxu0 %v3491
        %v3531 = vpop.f32.mrf.mxu0
        %v3532 = vadd.f32 %v3480, %v3531
        %3533 = vmatmul.f32.gmra.mxu0 %v3494
        %v3534 = vpop.f32.mrf.mxu0
        %v3535 = vadd.f32 %v3480, %v3534
        %3536 = vmatmul.f32.gmra.mxu0 %v3497
        %v3537 = vpop.f32.mrf.mxu0
        %v3538 = vadd.f32 %v3480, %v3537
        %3539 = vmatmul.f32.gmra.mxu0 %v3500
        %v3540 = vpop.f32.mrf.mxu0
        %v3541 = vadd.f32 %v3480, %v3540
        %3542 = vmatmul.f32.gmra.mxu0 %v3503
        %v3543 = vpop.f32.mrf.mxu0
        %v3544 = vadd.f32 %v3480, %v3543
        %3545 = vdwg.mxu0
        %v3546 = vmax.f32 %v3523, 0.0
        %v3547 = vmax.f32 %v3526, 0.0
        %v3548 = vmax.f32 %v3529, 0.0
        %v3549 = vmax.f32 %v3532, 0.0
        %v3550 = vmax.f32 %v3535, 0.0
        %v3551 = vmax.f32 %v3538, 0.0
        %v3552 = vmax.f32 %v3541, 0.0
        %v3553 = vmax.f32 %v3544, 0.0
        %vm3554 = vcmask 130048
        %v3556 = vsel %vm3554, %v3546, 0
        %v3559 = vsel %vm3554, %v3547, 0
        %v3562 = vsel %vm3554, %v3548, 0
        %v3565 = vsel %vm3554, %v3549, 0
        %v3568 = vsel %vm3554, %v3550, 0
        %v3571 = vsel %vm3554, %v3551, 0
        %v3574 = vsel %vm3554, %v3552, 0
        %v3577 = vsel %vm3554, %v3553, 0
        %3579 = vmatpush.msra.mxu0 0.0
        %3580 = vmatpush.msra.mxu0 0.0
        %3581 = vmatpush.msra.mxu0 0.0
        %3582 = vmatpush.msra.mxu0 0.0
        %3583 = vmatpush.msra.mxu0 0.0
        %3584 = vmatpush.msra.mxu0 0.0
        %3585 = vmatpush.msra.mxu0 0.0
        %3586 = vmatpush.msra.mxu0 0.0
        %3587 = vmatpush.msra.mxu0 0.0
        %3588 = vmatpush.msra.mxu0 0.0
        %3589 = vmatpush.msra.mxu0 0.0
        %3590 = vmatpush.msra.mxu0 0.0
        %3591 = vmatpush.msra.mxu0 0.0
        %3592 = vmatpush.msra.mxu0 0.0
        %3593 = vmatpush.msra.mxu0 %v3276
        %3594 = vmatpush.msra.mxu0 %v3275
        %3595 = vmatmul.f32.gmra.mxu0 %v3556
        %v3596 = vpop.f32.mrf.mxu0
        %v3597 = vadd.f32 0.0, %v3596
        %3598 = vmatmul.f32.gmra.mxu0 %v3559
        %v3599 = vpop.f32.mrf.mxu0
        %v3600 = vadd.f32 0.0, %v3599
        %3601 = vmatmul.f32.gmra.mxu0 %v3562
        %v3602 = vpop.f32.mrf.mxu0
        %v3603 = vadd.f32 0.0, %v3602
        %3604 = vmatmul.f32.gmra.mxu0 %v3565
        %v3605 = vpop.f32.mrf.mxu0
        %v3606 = vadd.f32 0.0, %v3605
        %3607 = vmatmul.f32.gmra.mxu0 %v3568
        %v3608 = vpop.f32.mrf.mxu0
        %v3609 = vadd.f32 0.0, %v3608
        %3610 = vmatmul.f32.gmra.mxu0 %v3571
        %v3611 = vpop.f32.mrf.mxu0
        %v3612 = vadd.f32 0.0, %v3611
        %3613 = vmatmul.f32.gmra.mxu0 %v3574
        %v3614 = vpop.f32.mrf.mxu0
        %v3615 = vadd.f32 0.0, %v3614
        %3616 = vmatmul.f32.gmra.mxu0 %v3577
        %v3617 = vpop.f32.mrf.mxu0
        %v3618 = vadd.f32 0.0, %v3617
        %3619 = vdwg.mxu0
        %v3620 = vadd.f32 %v3216, %v3597
        %v3621 = vadd.f32 %v3217, %v3600
        %v3622 = vadd.f32 %v3218, %v3603
        %v3623 = vadd.f32 %v3219, %v3606
        %v3624 = vadd.f32 %v3248, %v3609
        %v3625 = vadd.f32 %v3249, %v3612
        %v3626 = vadd.f32 %v3250, %v3615
        %v3627 = vadd.f32 %v3251, %v3618
        %v3628 = vperm.slane %v3277, 0
        %v3629 = vadd.f32 %v3620, %v3628
        %v3630 = vadd.f32 %v3621, %v3628
        %v3631 = vadd.f32 %v3622, %v3628
        %v3632 = vadd.f32 %v3623, %v3628
        %v3633 = vadd.f32 %v3624, %v3628
        %v3634 = vadd.f32 %v3625, %v3628
        %v3635 = vadd.f32 %v3626, %v3628
        %v3636 = vadd.f32 %v3627, %v3628
        %v3637 = vld [vmem:[%s206 + $0xa8] sm:$0x1]
        %v3638 = vld [vmem:[%s206 + $0xb0] sm:$0x1]
        %v3639 = vld [vmem:[%s206 + $0xb8] sm:$0xff]
        %v3640 = vld [vmem:[%s206 + $0xc0] sm:$0xff]
        %v3641 = vld [vmem:[%s206 + $0xc8] sm:$0xff]
        %v3642 = vld [vmem:[%s206 + $0xd0] sm:$0xff]
        %v3643 = vld [vmem:[%s206 + $0xd8] sm:$0xff]
        %v3644 = vld [vmem:[%s206 + $0xe0] sm:$0xff]
        %v3645 = vld [vmem:[%s206 + $0xe8] sm:$0xff]
        %v3646 = vld [vmem:[%s206 + $0xf0] sm:$0xff]
        %v3647 = vld [vmem:[%s206 + $0xf8] sm:$0x1]
        %v3648 = vld [vmem:[%s206 + $0x100] sm:$0xff]
        %v3649 = vld [vmem:[%s206 + $0x108] sm:$0xff]
        %v3650 = vld [vmem:[%s206 + $0x110] sm:$0x1]
        %v3651 = vsel %vm3278, %v3629, 0.0
        %3652 = vadd.xlane.f32.xlu0 %v3651
        %v3653 = vpop.xlane.xlu0 %3652
        %v3654 = vsel %vm3278, %v3630, 0.0
        %3655 = vadd.xlane.f32.xlu0 %v3654
        %v3656 = vpop.xlane.xlu0 %3655
        %v3657 = vsel %vm3278, %v3631, 0.0
        %3658 = vadd.xlane.f32.xlu0 %v3657
        %v3659 = vpop.xlane.xlu0 %3658
        %v3660 = vsel %vm3278, %v3632, 0.0
        %3661 = vadd.xlane.f32.xlu0 %v3660
        %v3662 = vpop.xlane.xlu0 %3661
        %v3663 = vsel %vm3278, %v3633, 0.0
        %3664 = vadd.xlane.f32.xlu0 %v3663
        %v3665 = vpop.xlane.xlu0 %3664
        %v3666 = vsel %vm3278, %v3634, 0.0
        %3667 = vadd.xlane.f32.xlu0 %v3666
        %v3668 = vpop.xlane.xlu0 %3667
        %v3669 = vsel %vm3278, %v3635, 0.0
        %3670 = vadd.xlane.f32.xlu0 %v3669
        %v3671 = vpop.xlane.xlu0 %3670
        %v3672 = vsel %vm3278, %v3636, 0.0
        %3673 = vadd.xlane.f32.xlu0 %v3672
        %v3674 = vpop.xlane.xlu0 %3673
        %v3675 = vmul.f32 %v3653, %v3309
        %v3676 = vmul.f32 %v3656, %v3309
        %v3677 = vmul.f32 %v3659, %v3309
        %v3678 = vmul.f32 %v3662, %v3309
        %v3679 = vmul.f32 %v3665, %v3309
        %v3680 = vmul.f32 %v3668, %v3309
        %v3681 = vmul.f32 %v3671, %v3309
        %v3682 = vmul.f32 %v3674, %v3309
        %v3683 = vsub.f32 %v3629, %v3675
        %v3684 = vsub.f32 %v3630, %v3676
        %v3685 = vsub.f32 %v3631, %v3677
        %v3686 = vsub.f32 %v3632, %v3678
        %v3687 = vsub.f32 %v3633, %v3679
        %v3688 = vsub.f32 %v3634, %v3680
        %v3689 = vsub.f32 %v3635, %v3681
        %v3690 = vsub.f32 %v3636, %v3682
        %v3691 = vmul.f32 %v3683, %v3683
        %v3692 = vmul.f32 %v3684, %v3684
        %v3693 = vmul.f32 %v3685, %v3685
        %v3694 = vmul.f32 %v3686, %v3686
        %v3695 = vmul.f32 %v3687, %v3687
        %v3696 = vmul.f32 %v3688, %v3688
        %v3697 = vmul.f32 %v3689, %v3689
        %v3698 = vmul.f32 %v3690, %v3690
        %v3699 = vsel %vm3278, %v3691, 0.0
        %3700 = vadd.xlane.f32.xlu0 %v3699
        %v3701 = vpop.xlane.xlu0 %3700
        %v3702 = vsel %vm3278, %v3692, 0.0
        %3703 = vadd.xlane.f32.xlu0 %v3702
        %v3704 = vpop.xlane.xlu0 %3703
        %v3705 = vsel %vm3278, %v3693, 0.0
        %3706 = vadd.xlane.f32.xlu0 %v3705
        %v3707 = vpop.xlane.xlu0 %3706
        %v3708 = vsel %vm3278, %v3694, 0.0
        %3709 = vadd.xlane.f32.xlu0 %v3708
        %v3710 = vpop.xlane.xlu0 %3709
        %v3711 = vsel %vm3278, %v3695, 0.0
        %3712 = vadd.xlane.f32.xlu0 %v3711
        %v3713 = vpop.xlane.xlu0 %3712
        %v3714 = vsel %vm3278, %v3696, 0.0
        %3715 = vadd.xlane.f32.xlu0 %v3714
        %v3716 = vpop.xlane.xlu0 %3715
        %v3717 = vsel %vm3278, %v3697, 0.0
        %3718 = vadd.xlane.f32.xlu0 %v3717
        %v3719 = vpop.xlane.xlu0 %3718
        %v3720 = vsel %vm3278, %v3698, 0.0
        %3721 = vadd.xlane.f32.xlu0 %v3720
        %v3722 = vpop.xlane.xlu0 %3721
        %v3723 = vmul.f32 %v3701, %v3309
        %v3724 = vmul.f32 %v3704, %v3309
        %v3725 = vmul.f32 %v3707, %v3309
        %v3726 = vmul.f32 %v3710, %v3309
        %v3727 = vmul.f32 %v3713, %v3309
        %v3728 = vmul.f32 %v3716, %v3309
        %v3729 = vmul.f32 %v3719, %v3309
        %v3730 = vmul.f32 %v3722, %v3309
        %v3731 = vadd.f32 %v3723, 1e-05
        %v3732 = vadd.f32 %v3724, 1e-05
        %v3733 = vadd.f32 %v3725, 1e-05
        %v3734 = vadd.f32 %v3726, 1e-05
        %v3735 = vadd.f32 %v3727, 1e-05
        %v3736 = vadd.f32 %v3728, 1e-05
        %v3737 = vadd.f32 %v3729, 1e-05
        %v3738 = vadd.f32 %v3730, 1e-05
        %v3739 = vrsqrt.pop %v3731
        %v3740 = vmul.f32 %v3739, %v3731
        %v3741 = vmul.f32 %v3740, %v3739
        %v3742 = vmul.f32 0.5, %v3741
        %v3743 = vsub.f32 1.5, %v3742
        %v3744 = vmul.f32 %v3739, %v3743
        %vm3745 = vweird.f32 %v3731
        %vm3746 = vweird.f32 %v3739
        %vm3747 = vmor %vm3745, %vm3746
        %v3748 = vsel %vm3747, %v3739, %v3744
        %v3749 = vrsqrt.pop %v3732
        %v3750 = vmul.f32 %v3749, %v3732
        %v3751 = vmul.f32 %v3750, %v3749
        %v3752 = vmul.f32 0.5, %v3751
        %v3753 = vsub.f32 1.5, %v3752
        %v3754 = vmul.f32 %v3749, %v3753
        %vm3755 = vweird.f32 %v3732
        %vm3756 = vweird.f32 %v3749
        %vm3757 = vmor %vm3755, %vm3756
        %v3758 = vsel %vm3757, %v3749, %v3754
        %v3759 = vrsqrt.pop %v3733
        %v3760 = vmul.f32 %v3759, %v3733
        %v3761 = vmul.f32 %v3760, %v3759
        %v3762 = vmul.f32 0.5, %v3761
        %v3763 = vsub.f32 1.5, %v3762
        %v3764 = vmul.f32 %v3759, %v3763
        %vm3765 = vweird.f32 %v3733
        %vm3766 = vweird.f32 %v3759
        %vm3767 = vmor %vm3765, %vm3766
        %v3768 = vsel %vm3767, %v3759, %v3764
        %v3769 = vrsqrt.pop %v3734
        %v3770 = vmul.f32 %v3769, %v3734
        %v3771 = vmul.f32 %v3770, %v3769
        %v3772 = vmul.f32 0.5, %v3771
        %v3773 = vsub.f32 1.5, %v3772
        %v3774 = vmul.f32 %v3769, %v3773
        %vm3775 = vweird.f32 %v3734
        %vm3776 = vweird.f32 %v3769
        %vm3777 = vmor %vm3775, %vm3776
        %v3778 = vsel %vm3777, %v3769, %v3774
        %v3779 = vrsqrt.pop %v3735
        %v3780 = vmul.f32 %v3779, %v3735
        %v3781 = vmul.f32 %v3780, %v3779
        %v3782 = vmul.f32 0.5, %v3781
        %v3783 = vsub.f32 1.5, %v3782
        %v3784 = vmul.f32 %v3779, %v3783
        %vm3785 = vweird.f32 %v3735
        %vm3786 = vweird.f32 %v3779
        %vm3787 = vmor %vm3785, %vm3786
        %v3788 = vsel %vm3787, %v3779, %v3784
        %v3789 = vrsqrt.pop %v3736
        %v3790 = vmul.f32 %v3789, %v3736
        %v3791 = vmul.f32 %v3790, %v3789
        %v3792 = vmul.f32 0.5, %v3791
        %v3793 = vsub.f32 1.5, %v3792
        %v3794 = vmul.f32 %v3789, %v3793
        %vm3795 = vweird.f32 %v3736
        %vm3796 = vweird.f32 %v3789
        %vm3797 = vmor %vm3795, %vm3796
        %v3798 = vsel %vm3797, %v3789, %v3794
        %v3799 = vrsqrt.pop %v3737
        %v3800 = vmul.f32 %v3799, %v3737
        %v3801 = vmul.f32 %v3800, %v3799
        %v3802 = vmul.f32 0.5, %v3801
        %v3803 = vsub.f32 1.5, %v3802
        %v3804 = vmul.f32 %v3799, %v3803
        %vm3805 = vweird.f32 %v3737
        %vm3806 = vweird.f32 %v3799
        %vm3807 = vmor %vm3805, %vm3806
        %v3808 = vsel %vm3807, %v3799, %v3804
        %v3809 = vrsqrt.pop %v3738
        %v3810 = vmul.f32 %v3809, %v3738
        %v3811 = vmul.f32 %v3810, %v3809
        %v3812 = vmul.f32 0.5, %v3811
        %v3813 = vsub.f32 1.5, %v3812
        %v3814 = vmul.f32 %v3809, %v3813
        %vm3815 = vweird.f32 %v3738
        %vm3816 = vweird.f32 %v3809
        %vm3817 = vmor %vm3815, %vm3816
        %v3818 = vsel %vm3817, %v3809, %v3814
        %v3819 = vmul.f32 %v3683, %v3748
        %v3820 = vmul.f32 %v3684, %v3758
        %v3821 = vmul.f32 %v3685, %v3768
        %v3822 = vmul.f32 %v3686, %v3778
        %v3823 = vmul.f32 %v3687, %v3788
        %v3824 = vmul.f32 %v3688, %v3798
        %v3825 = vmul.f32 %v3689, %v3808
        %v3826 = vmul.f32 %v3690, %v3818
        %v3827 = vperm.slane %v3637, 0
        %v3828 = vmul.f32 %v3819, %v3827
        %v3829 = vmul.f32 %v3820, %v3827
        %v3830 = vmul.f32 %v3821, %v3827
        %v3831 = vmul.f32 %v3822, %v3827
        %v3832 = vmul.f32 %v3823, %v3827
        %v3833 = vmul.f32 %v3824, %v3827
        %v3834 = vmul.f32 %v3825, %v3827
        %v3835 = vmul.f32 %v3826, %v3827
        %v3836 = vperm.slane %v3638, 0
        %v3837 = vadd.f32 %v3828, %v3836
        %v3838 = vadd.f32 %v3829, %v3836
        %v3839 = vadd.f32 %v3830, %v3836
        %v3840 = vadd.f32 %v3831, %v3836
        %v3841 = vadd.f32 %v3832, %v3836
        %v3842 = vadd.f32 %v3833, %v3836
        %v3843 = vadd.f32 %v3834, %v3836
        %v3844 = vadd.f32 %v3835, %v3836
        %v3845 = vperm.slane %v3647, 0
        %v3847 = vsel %vm3278, %v3837, 0
        %v3850 = vsel %vm3278, %v3838, 0
        %v3853 = vsel %vm3278, %v3839, 0
        %v3856 = vsel %vm3278, %v3840, 0
        %v3859 = vsel %vm3278, %v3841, 0
        %v3862 = vsel %vm3278, %v3842, 0
        %v3865 = vsel %vm3278, %v3843, 0
        %v3868 = vsel %vm3278, %v3844, 0
        %3870 = vmatpush.msra.mxu0 0.0
        %3871 = vmatpush.msra.mxu0 0.0
        %3872 = vmatpush.msra.mxu0 0.0
        %3873 = vmatpush.msra.mxu0 0.0
        %3874 = vmatpush.msra.mxu0 0.0
        %3875 = vmatpush.msra.mxu0 0.0
        %3876 = vmatpush.msra.mxu0 0.0
        %3877 = vmatpush.msra.mxu0 0.0
        %3878 = vmatpush.msra.mxu0 %v3646
        %3879 = vmatpush.msra.mxu0 %v3645
        %3880 = vmatpush.msra.mxu0 %v3644
        %3881 = vmatpush.msra.mxu0 %v3643
        %3882 = vmatpush.msra.mxu0 %v3642
        %3883 = vmatpush.msra.mxu0 %v3641
        %3884 = vmatpush.msra.mxu0 %v3640
        %3885 = vmatpush.msra.mxu0 %v3639
        %3886 = vmatmul.f32.gmra.mxu0 %v3847
        %v3887 = vpop.f32.mrf.mxu0
        %v3888 = vadd.f32 %v3845, %v3887
        %3889 = vmatmul.f32.gmra.mxu0 %v3850
        %v3890 = vpop.f32.mrf.mxu0
        %v3891 = vadd.f32 %v3845, %v3890
        %3892 = vmatmul.f32.gmra.mxu0 %v3853
        %v3893 = vpop.f32.mrf.mxu0
        %v3894 = vadd.f32 %v3845, %v3893
        %3895 = vmatmul.f32.gmra.mxu0 %v3856
        %v3896 = vpop.f32.mrf.mxu0
        %v3897 = vadd.f32 %v3845, %v3896
        %3898 = vmatmul.f32.gmra.mxu0 %v3859
        %v3899 = vpop.f32.mrf.mxu0
        %v3900 = vadd.f32 %v3845, %v3899
        %3901 = vmatmul.f32.gmra.mxu0 %v3862
        %v3902 = vpop.f32.mrf.mxu0
        %v3903 = vadd.f32 %v3845, %v3902
        %3904 = vmatmul.f32.gmra.mxu0 %v3865
        %v3905 = vpop.f32.mrf.mxu0
        %v3906 = vadd.f32 %v3845, %v3905
        %3907 = vmatmul.f32.gmra.mxu0 %v3868
        %v3908 = vpop.f32.mrf.mxu0
        %v3909 = vadd.f32 %v3845, %v3908
        %3910 = vdwg.mxu0
        %v3911 = vmax.f32 %v3888, 0.0
        %v3912 = vmax.f32 %v3891, 0.0
        %v3913 = vmax.f32 %v3894, 0.0
        %v3914 = vmax.f32 %v3897, 0.0
        %v3915 = vmax.f32 %v3900, 0.0
        %v3916 = vmax.f32 %v3903, 0.0
        %v3917 = vmax.f32 %v3906, 0.0
        %v3918 = vmax.f32 %v3909, 0.0
        %v3920 = vsel %vm3554, %v3911, 0
        %v3923 = vsel %vm3554, %v3912, 0
        %v3926 = vsel %vm3554, %v3913, 0
        %v3929 = vsel %vm3554, %v3914, 0
        %v3932 = vsel %vm3554, %v3915, 0
        %v3935 = vsel %vm3554, %v3916, 0
        %v3938 = vsel %vm3554, %v3917, 0
        %v3941 = vsel %vm3554, %v3918, 0
        %3943 = vmatpush.msra.mxu0 0.0
        %3944 = vmatpush.msra.mxu0 0.0
        %3945 = vmatpush.msra.mxu0 0.0
        %3946 = vmatpush.msra.mxu0 0.0
        %3947 = vmatpush.msra.mxu0 0.0
        %3948 = vmatpush.msra.mxu0 0.0
        %3949 = vmatpush.msra.mxu0 0.0
        %3950 = vmatpush.msra.mxu0 0.0
        %3951 = vmatpush.msra.mxu0 0.0
        %3952 = vmatpush.msra.mxu0 0.0
        %3953 = vmatpush.msra.mxu0 0.0
        %3954 = vmatpush.msra.mxu0 0.0
        %3955 = vmatpush.msra.mxu0 0.0
        %3956 = vmatpush.msra.mxu0 0.0
        %3957 = vmatpush.msra.mxu0 %v3649
        %3958 = vmatpush.msra.mxu0 %v3648
        %3959 = vmatmul.f32.gmra.mxu0 %v3920
        %v3960 = vpop.f32.mrf.mxu0
        %v3961 = vadd.f32 0.0, %v3960
        %3962 = vmatmul.f32.gmra.mxu0 %v3923
        %v3963 = vpop.f32.mrf.mxu0
        %v3964 = vadd.f32 0.0, %v3963
        %3965 = vmatmul.f32.gmra.mxu0 %v3926
        %v3966 = vpop.f32.mrf.mxu0
        %v3967 = vadd.f32 0.0, %v3966
        %3968 = vmatmul.f32.gmra.mxu0 %v3929
        %v3969 = vpop.f32.mrf.mxu0
        %v3970 = vadd.f32 0.0, %v3969
        %3971 = vmatmul.f32.gmra.mxu0 %v3932
        %v3972 = vpop.f32.mrf.mxu0
        %v3973 = vadd.f32 0.0, %v3972
        %3974 = vmatmul.f32.gmra.mxu0 %v3935
        %v3975 = vpop.f32.mrf.mxu0
        %v3976 = vadd.f32 0.0, %v3975
        %3977 = vmatmul.f32.gmra.mxu0 %v3938
        %v3978 = vpop.f32.mrf.mxu0
        %v3979 = vadd.f32 0.0, %v3978
        %3980 = vmatmul.f32.gmra.mxu0 %v3941
        %v3981 = vpop.f32.mrf.mxu0
        %v3982 = vadd.f32 0.0, %v3981
        %3983 = vdwg.mxu0
        %v3984 = vadd.f32 %v3629, %v3961
        %v3985 = vadd.f32 %v3630, %v3964
        %v3986 = vadd.f32 %v3631, %v3967
        %v3987 = vadd.f32 %v3632, %v3970
        %v3988 = vadd.f32 %v3633, %v3973
        %v3989 = vadd.f32 %v3634, %v3976
        %v3990 = vadd.f32 %v3635, %v3979
        %v3991 = vadd.f32 %v3636, %v3982
        %v3992 = vperm.slane %v3650, 0
        %v3993 = vadd.f32 %v3984, %v3992
        %v3994 = vadd.f32 %v3985, %v3992
        %v3995 = vadd.f32 %v3986, %v3992
        %v3996 = vadd.f32 %v3987, %v3992
        %v3997 = vadd.f32 %v3988, %v3992
        %v3998 = vadd.f32 %v3989, %v3992
        %v3999 = vadd.f32 %v3990, %v3992
        %v4000 = vadd.f32 %v3991, %v3992
        %v4001 = vsel %vm3278, %v3993, -inf
        %4002 = vmax.xlane.f32.xlu0 %v4001
        %v4003 = vpop.xlane.xlu0 %4002
        %v4004 = vsel %vm3278, %v3994, -inf
        %4005 = vmax.xlane.f32.xlu0 %v4004
        %v4006 = vpop.xlane.xlu0 %4005
        %v4007 = vsel %vm3278, %v3995, -inf
        %4008 = vmax.xlane.f32.xlu0 %v4007
        %v4009 = vpop.xlane.xlu0 %4008
        %v4010 = vsel %vm3278, %v3996, -inf
        %4011 = vmax.xlane.f32.xlu0 %v4010
        %v4012 = vpop.xlane.xlu0 %4011
        %v4013 = vsel %vm3278, %v3997, -inf
        %4014 = vmax.xlane.f32.xlu0 %v4013
        %v4015 = vpop.xlane.xlu0 %4014
        %v4016 = vsel %vm3278, %v3998, -inf
        %4017 = vmax.xlane.f32.xlu0 %v4016
        %v4018 = vpop.xlane.xlu0 %4017
        %v4019 = vsel %vm3278, %v3999, -inf
        %4020 = vmax.xlane.f32.xlu0 %v4019
        %v4021 = vpop.xlane.xlu0 %4020
        %v4022 = vsel %vm3278, %v4000, -inf
        %4023 = vmax.xlane.f32.xlu0 %v4022
        %v4024 = vpop.xlane.xlu0 %4023
        %v4025 = vld [vmem:[%s206 + $0x118] sm:$0x1]
        %v4026 = vld [vmem:[%s206 + $0x120] sm:$0x1]
        %v4027 = vld [vmem:[%s206 + $0x128] sm:$0xff]
        %v4028 = vld [vmem:[%s206 + $0x130] sm:$0xff]
        %v4029 = vld [vmem:[%s206 + $0x138] sm:$0xff]
        %v4030 = vld [vmem:[%s206 + $0x140] sm:$0xff]
        %v4031 = vld [vmem:[%s206 + $0x148] sm:$0x1]
        %v4032 = vld [vmem:[%s206 + $0x150] sm:$0xff]
        %v4033 = vld [vmem:[%s206 + $0x158] sm:$0xff]
        %v4034 = vld [vmem:[%s206 + $0x160] sm:$0x1]
        %v4043 = vlaneseq
        %v4044 = vand.u32 %v4043, 127
        %v4045 = vperm.slane %v4003, %v4044
        %v4046 = vadd.s32 %v4044, 4294967288
        %v4047 = vperm.slane %v4006, %v4046
        %vm4048 = vcmask 130112
        %v4049 = vsel %vm4048, %v4047, %v4045
        %v4050 = vadd.s32 %v4044, 4294967280
        %v4051 = vperm.slane %v4009, %v4050
        %vm4052 = vcmask 195712
        %v4053 = vsel %vm4052, %v4051, %v4049
        %v4054 = vadd.s32 %v4044, 4294967272
        %v4055 = vperm.slane %v4012, %v4054
        %vm4056 = vcmask 261312
        %v4057 = vsel %vm4056, %v4055, %v4053
        %v4058 = vperm.slane %v4015, %v4044
        %v4059 = vperm.slane %v4018, %v4046
        %v4060 = vsel %vm4048, %v4059, %v4058
        %v4061 = vperm.slane %v4021, %v4050
        %v4062 = vsel %vm4052, %v4061, %v4060
        %v4063 = vperm.slane %v4024, %v4054
        %v4064 = vsel %vm4056, %v4063, %v4062
        %vm4065 = vcmask 1041409
        %v4066 = vsel %vm4065, %v4064, %v4057
        %vm4068 = vcmask 254976
        %v4069 = vsel %vm4068, %v4066, 0.0
        %4070 = vadd.xlane.f32.xlu0 %v4069
        %v4071 = vpop.xlane.xlu0 %4070
        %v4072 = vrcp.pop 32.0
        %v4073 = vmul.f32 32.0, %v4072
        %v4074 = vsub.f32 1.0, %v4073
        %v4075 = vmul.f32 %v4072, %v4074
        %v4076 = vadd.f32 %v4072, %v4075
        %vm4077 = vweird.f32 %v4072
        %v4078 = vsel %vm4077, %v4072, %v4076
        %v4079 = vmul.f32 %v4071, %v4078
        %v4081 = vperm.slane %v4079, 0
        %v4082 = vperm.slane %v4079, 1
        %v4085 = vsub.f32 %v4003, %v4081
        %v4086 = vsub.f32 %v4006, %v4081
        %v4087 = vsub.f32 %v4009, %v4081
        %v4088 = vsub.f32 %v4012, %v4081
        %v4089 = vsub.f32 %v4015, %v4082
        %v4090 = vsub.f32 %v4018, %v4082
        %v4091 = vsub.f32 %v4021, %v4082
        %v4092 = vsub.f32 %v4024, %v4082
        %v4093 = vmul.f32 %v4085, %v4085
        %v4094 = vmul.f32 %v4086, %v4086
        %v4095 = vmul.f32 %v4087, %v4087
        %v4096 = vmul.f32 %v4088, %v4088
        %v4097 = vmul.f32 %v4089, %v4089
        %v4098 = vmul.f32 %v4090, %v4090
        %v4099 = vmul.f32 %v4091, %v4091
        %v4100 = vmul.f32 %v4092, %v4092
        %4109 = vset.pattern.permute.xlu0 0
        %4110 = vperm.xlu0 %4109, %v4093
        %v4111 = vpop.permute.xlu0 %4110
        %4112 = vset.pattern.permute.xlu0 0
        %4113 = vperm.xlu0 %4112, %v4094
        %v4114 = vpop.permute.xlu0 %4113
        %4115 = vset.pattern.permute.xlu0 0
        %4116 = vperm.xlu0 %4115, %v4095
        %v4117 = vpop.permute.xlu0 %4116
        %4118 = vset.pattern.permute.xlu0 0
        %4119 = vperm.xlu0 %4118, %v4096
        %v4120 = vpop.permute.xlu0 %4119
        %4121 = vset.pattern.permute.xlu0 0
        %4122 = vperm.xlu0 %4121, %v4097
        %v4123 = vpop.permute.xlu0 %4122
        %4124 = vset.pattern.permute.xlu0 0
        %4125 = vperm.xlu0 %4124, %v4098
        %v4126 = vpop.permute.xlu0 %4125
        %4127 = vset.pattern.permute.xlu0 0
        %4128 = vperm.xlu0 %4127, %v4099
        %v4129 = vpop.permute.xlu0 %4128
        %4130 = vset.pattern.permute.xlu0 0
        %4131 = vperm.xlu0 %4130, %v4100
        %v4132 = vpop.permute.xlu0 %4131
        %v4133 = vperm.slane %v4111, %v4044
        %v4134 = vperm.slane %v4114, %v4046
        %v4135 = vsel %vm4048, %v4134, %v4133
        %v4136 = vperm.slane %v4117, %v4050
        %v4137 = vsel %vm4052, %v4136, %v4135
        %v4138 = vperm.slane %v4120, %v4054
        %v4139 = vsel %vm4056, %v4138, %v4137
        %v4140 = vperm.slane %v4123, %v4044
        %v4141 = vperm.slane %v4126, %v4046
        %v4142 = vsel %vm4048, %v4141, %v4140
        %v4143 = vperm.slane %v4129, %v4050
        %v4144 = vsel %vm4052, %v4143, %v4142
        %v4145 = vperm.slane %v4132, %v4054
        %v4146 = vsel %vm4056, %v4145, %v4144
        %v4147 = vsel %vm4065, %v4146, %v4139
        %v4149 = vsel %vm4068, %v4147, 0.0
        %4150 = vadd.xlane.f32.xlu0 %v4149
        %v4151 = vpop.xlane.xlu0 %4150
        %v4152 = vmul.f32 %v4151, %v4078
        %v4153 = vadd.f32 %v4152, 1e-05
        %v4154 = vrsqrt.pop %v4153
        %v4155 = vmul.f32 %v4154, %v4153
        %v4156 = vmul.f32 %v4155, %v4154
        %v4157 = vmul.f32 0.5, %v4156
        %v4158 = vsub.f32 1.5, %v4157
        %v4159 = vmul.f32 %v4154, %v4158
        %vm4160 = vweird.f32 %v4153
        %vm4161 = vweird.f32 %v4154
        %vm4162 = vmor %vm4160, %vm4161
        %v4163 = vsel %vm4162, %v4154, %v4159
        %v4165 = vperm.slane %v4163, 0
        %v4166 = vperm.slane %v4163, 1
        %v4169 = vmul.f32 %v4085, %v4165
        %v4170 = vmul.f32 %v4086, %v4165
        %v4171 = vmul.f32 %v4087, %v4165
        %v4172 = vmul.f32 %v4088, %v4165
        %v4173 = vmul.f32 %v4089, %v4166
        %v4174 = vmul.f32 %v4090, %v4166
        %v4175 = vmul.f32 %v4091, %v4166
        %v4176 = vmul.f32 %v4092, %v4166
        %v4177 = vperm.slane %v4025, 0
        %v4179 = vlaneseq
        %v4180 = vshrl.u32 %v4179, 7
        %4182 = vset.pattern.permute.xlu0 %v4180
        %4183 = vperm.xlu0 %4182, %v4177
        %v4184 = vpop.permute.xlu0 %4183
        %v4185 = vlaneseq
        %v4186 = vshrl.u32 %v4185, 7
        %v4187 = vadd.s32 %v4186, 8
        %4188 = vset.pattern.permute.xlu0 %v4187
        %4189 = vperm.xlu0 %4188, %v4177
        %v4190 = vpop.permute.xlu0 %4189
        %v4191 = vlaneseq
        %v4192 = vshrl.u32 %v4191, 7
        %v4193 = vadd.s32 %v4192, 16
        %4194 = vset.pattern.permute.xlu0 %v4193
        %4195 = vperm.xlu0 %4194, %v4177
        %v4196 = vpop.permute.xlu0 %4195
        %v4197 = vlaneseq
        %v4198 = vshrl.u32 %v4197, 7
        %v4199 = vadd.s32 %v4198, 24
        %4200 = vset.pattern.permute.xlu0 %v4199
        %4201 = vperm.xlu0 %4200, %v4177
        %v4202 = vpop.permute.xlu0 %4201
        %v4207 = vmul.f32 %v4169, %v4184
        %v4208 = vmul.f32 %v4170, %v4190
        %v4209 = vmul.f32 %v4171, %v4196
        %v4210 = vmul.f32 %v4172, %v4202
        %v4211 = vmul.f32 %v4173, %v4184
        %v4212 = vmul.f32 %v4174, %v4190
        %v4213 = vmul.f32 %v4175, %v4196
        %v4214 = vmul.f32 %v4176, %v4202
        %v4215 = vperm.slane %v4026, 0
        %v4217 = vlaneseq
        %v4218 = vshrl.u32 %v4217, 7
        %4220 = vset.pattern.permute.xlu0 %v4218
        %4221 = vperm.xlu0 %4220, %v4215
        %v4222 = vpop.permute.xlu0 %4221
        %v4223 = vlaneseq
        %v4224 = vshrl.u32 %v4223, 7
        %v4225 = vadd.s32 %v4224, 8
        %4226 = vset.pattern.permute.xlu0 %v4225
        %4227 = vperm.xlu0 %4226, %v4215
        %v4228 = vpop.permute.xlu0 %4227
        %v4229 = vlaneseq
        %v4230 = vshrl.u32 %v4229, 7
        %v4231 = vadd.s32 %v4230, 16
        %4232 = vset.pattern.permute.xlu0 %v4231
        %4233 = vperm.xlu0 %4232, %v4215
        %v4234 = vpop.permute.xlu0 %4233
        %v4235 = vlaneseq
        %v4236 = vshrl.u32 %v4235, 7
        %v4237 = vadd.s32 %v4236, 24
        %4238 = vset.pattern.permute.xlu0 %v4237
        %4239 = vperm.xlu0 %4238, %v4215
        %v4240 = vpop.permute.xlu0 %4239
        %v4245 = vadd.f32 %v4207, %v4222
        %v4246 = vadd.f32 %v4208, %v4228
        %v4247 = vadd.f32 %v4209, %v4234
        %v4248 = vadd.f32 %v4210, %v4240
        %v4249 = vadd.f32 %v4211, %v4222
        %v4250 = vadd.f32 %v4212, %v4228
        %v4251 = vadd.f32 %v4213, %v4234
        %v4252 = vadd.f32 %v4214, %v4240
        %v4253 = vperm.slane %v4031, 0
        %4262 = vset.pattern.permute.xlu0 0
        %4263 = vperm.xlu0 %4262, %v4245
        %v4264 = vpop.permute.xlu0 %4263
        %4265 = vset.pattern.permute.xlu0 0
        %4266 = vperm.xlu0 %4265, %v4246
        %v4267 = vpop.permute.xlu0 %4266
        %4268 = vset.pattern.permute.xlu0 0
        %4269 = vperm.xlu0 %4268, %v4247
        %v4270 = vpop.permute.xlu0 %4269
        %4271 = vset.pattern.permute.xlu0 0
        %4272 = vperm.xlu0 %4271, %v4248
        %v4273 = vpop.permute.xlu0 %4272
        %4274 = vset.pattern.permute.xlu0 0
        %4275 = vperm.xlu0 %4274, %v4249
        %v4276 = vpop.permute.xlu0 %4275
        %4277 = vset.pattern.permute.xlu0 0
        %4278 = vperm.xlu0 %4277, %v4250
        %v4279 = vpop.permute.xlu0 %4278
        %4280 = vset.pattern.permute.xlu0 0
        %4281 = vperm.xlu0 %4280, %v4251
        %v4282 = vpop.permute.xlu0 %4281
        %4283 = vset.pattern.permute.xlu0 0
        %4284 = vperm.xlu0 %4283, %v4252
        %v4285 = vpop.permute.xlu0 %4284
        %v4286 = vperm.slane %v4264, %v4044
        %v4287 = vperm.slane %v4267, %v4046
        %v4288 = vsel %vm4048, %v4287, %v4286
        %v4289 = vperm.slane %v4270, %v4050
        %v4290 = vsel %vm4052, %v4289, %v4288
        %v4291 = vperm.slane %v4273, %v4054
        %v4292 = vsel %vm4056, %v4291, %v4290
        %v4293 = vperm.slane %v4276, %v4044
        %v4294 = vperm.slane %v4279, %v4046
        %v4295 = vsel %vm4048, %v4294, %v4293
        %v4296 = vperm.slane %v4282, %v4050
        %v4297 = vsel %vm4052, %v4296, %v4295
        %v4298 = vperm.slane %v4285, %v4054
        %v4299 = vsel %vm4056, %v4298, %v4297
        %v4300 = vsel %vm4065, %v4299, %v4292
        %vm4301 = vcmask 261120
        %v4302 = vsel %vm4301, %v4300, 0
        %4304 = vmatpush.msra.mxu0 0.0
        %4305 = vmatpush.msra.mxu0 0.0
        %4306 = vmatpush.msra.mxu0 0.0
        %4307 = vmatpush.msra.mxu0 0.0
        %4308 = vmatpush.msra.mxu0 0.0
        %4309 = vmatpush.msra.mxu0 0.0
        %4310 = vmatpush.msra.mxu0 0.0
        %4311 = vmatpush.msra.mxu0 0.0
        %4312 = vmatpush.msra.mxu0 0.0
        %4313 = vmatpush.msra.mxu0 0.0
        %4314 = vmatpush.msra.mxu0 0.0
        %4315 = vmatpush.msra.mxu0 0.0
        %4316 = vmatpush.msra.mxu0 %v4030
        %4317 = vmatpush.msra.mxu0 %v4029
        %4318 = vmatpush.msra.mxu0 %v4028
        %4319 = vmatpush.msra.mxu0 %v4027
        %4320 = vmatmul.f32.gmra.mxu0 %v4302
        %v4321 = vpop.f32.mrf.mxu0
        %v4322 = vadd.f32 %v4253, %v4321
        %4323 = vdwg.mxu0
        %v4324 = vmax.f32 %v4322, 0.0
        %v4326 = vsel %vm3554, %v4324, 0
        %4328 = vmatpush.msra.mxu0 0.0
        %4329 = vmatpush.msra.mxu0 0.0
        %4330 = vmatpush.msra.mxu0 0.0
        %4331 = vmatpush.msra.mxu0 0.0
        %4332 = vmatpush.msra.mxu0 0.0
        %4333 = vmatpush.msra.mxu0 0.0
        %4334 = vmatpush.msra.mxu0 0.0
        %4335 = vmatpush.msra.mxu0 0.0
        %4336 = vmatpush.msra.mxu0 0.0
        %4337 = vmatpush.msra.mxu0 0.0
        %4338 = vmatpush.msra.mxu0 0.0
        %4339 = vmatpush.msra.mxu0 0.0
        %4340 = vmatpush.msra.mxu0 0.0
        %4341 = vmatpush.msra.mxu0 0.0
        %4342 = vmatpush.msra.mxu0 %v4033
        %4343 = vmatpush.msra.mxu0 %v4032
        %4344 = vmatmul.f32.gmra.mxu0 %v4326
        %v4345 = vpop.f32.mrf.mxu0
        %v4346 = vadd.f32 0.0, %v4345
        %4347 = vdwg.mxu0
        %v4349 = vperm.slane %v4346, 0
        %v4350 = vlaneseq
        %v4351 = vshrl.u32 %v4350, 7
        %4353 = vset.pattern.permute.xlu0 %v4351
        %4354 = vperm.xlu0 %4353, %v4349
        %v4355 = vpop.permute.xlu0 %4354
        %v4356 = vlaneseq
        %v4357 = vshrl.u32 %v4356, 7
        %v4358 = vadd.s32 %v4357, 8
        %4359 = vset.pattern.permute.xlu0 %v4358
        %4360 = vperm.xlu0 %4359, %v4349
        %v4361 = vpop.permute.xlu0 %4360
        %v4362 = vlaneseq
        %v4363 = vshrl.u32 %v4362, 7
        %v4364 = vadd.s32 %v4363, 16
        %4365 = vset.pattern.permute.xlu0 %v4364
        %4366 = vperm.xlu0 %4365, %v4349
        %v4367 = vpop.permute.xlu0 %4366
        %v4368 = vlaneseq
        %v4369 = vshrl.u32 %v4368, 7
        %v4370 = vadd.s32 %v4369, 24
        %4371 = vset.pattern.permute.xlu0 %v4370
        %4372 = vperm.xlu0 %4371, %v4349
        %v4373 = vpop.permute.xlu0 %4372
        %v4374 = vperm.slane %v4346, 1
        %v4375 = vlaneseq
        %v4376 = vshrl.u32 %v4375, 7
        %4378 = vset.pattern.permute.xlu0 %v4376
        %4379 = vperm.xlu0 %4378, %v4374
        %v4380 = vpop.permute.xlu0 %4379
        %v4381 = vlaneseq
        %v4382 = vshrl.u32 %v4381, 7
        %v4383 = vadd.s32 %v4382, 8
        %4384 = vset.pattern.permute.xlu0 %v4383
        %4385 = vperm.xlu0 %4384, %v4374
        %v4386 = vpop.permute.xlu0 %4385
        %v4387 = vlaneseq
        %v4388 = vshrl.u32 %v4387, 7
        %v4389 = vadd.s32 %v4388, 16
        %4390 = vset.pattern.permute.xlu0 %v4389
        %4391 = vperm.xlu0 %4390, %v4374
        %v4392 = vpop.permute.xlu0 %4391
        %v4393 = vlaneseq
        %v4394 = vshrl.u32 %v4393, 7
        %v4395 = vadd.s32 %v4394, 24
        %4396 = vset.pattern.permute.xlu0 %v4395
        %4397 = vperm.xlu0 %4396, %v4374
        %v4398 = vpop.permute.xlu0 %4397
        %v4407 = vadd.f32 %v4003, %v4355
        %v4408 = vadd.f32 %v4006, %v4361
        %v4409 = vadd.f32 %v4009, %v4367
        %v4410 = vadd.f32 %v4012, %v4373
        %v4411 = vadd.f32 %v4015, %v4380
        %v4412 = vadd.f32 %v4018, %v4386
        %v4413 = vadd.f32 %v4021, %v4392
        %v4414 = vadd.f32 %v4024, %v4398
        %v4415 = vperm.slane %v4034, 0
        %v4417 = vlaneseq
        %v4418 = vshrl.u32 %v4417, 7
        %4420 = vset.pattern.permute.xlu0 %v4418
        %4421 = vperm.xlu0 %4420, %v4415
        %v4422 = vpop.permute.xlu0 %4421
        %v4423 = vlaneseq
        %v4424 = vshrl.u32 %v4423, 7
        %v4425 = vadd.s32 %v4424, 8
        %4426 = vset.pattern.permute.xlu0 %v4425
        %4427 = vperm.xlu0 %4426, %v4415
        %v4428 = vpop.permute.xlu0 %4427
        %v4429 = vlaneseq
        %v4430 = vshrl.u32 %v4429, 7
        %v4431 = vadd.s32 %v4430, 16
        %4432 = vset.pattern.permute.xlu0 %v4431
        %4433 = vperm.xlu0 %4432, %v4415
        %v4434 = vpop.permute.xlu0 %4433
        %v4435 = vlaneseq
        %v4436 = vshrl.u32 %v4435, 7
        %v4437 = vadd.s32 %v4436, 24
        %4438 = vset.pattern.permute.xlu0 %v4437
        %4439 = vperm.xlu0 %4438, %v4415
        %v4440 = vpop.permute.xlu0 %4439
        %v4445 = vadd.f32 %v4407, %v4422
        %v4446 = vadd.f32 %v4408, %v4428
        %v4447 = vadd.f32 %v4409, %v4434
        %v4448 = vadd.f32 %v4410, %v4440
        %v4449 = vadd.f32 %v4411, %v4422
        %v4450 = vadd.f32 %v4412, %v4428
        %v4451 = vadd.f32 %v4413, %v4434
        %v4452 = vadd.f32 %v4414, %v4440
        %v4453 = vld [vmem:[%s206 + $0x168] sm:$0x1]
        %v4454 = vld [vmem:[%s206 + $0x170] sm:$0x1]
        %v4455 = vld [vmem:[%s206 + $0x178] sm:$0xff]
        %v4456 = vld [vmem:[%s206 + $0x180] sm:$0xff]
        %v4457 = vld [vmem:[%s206 + $0x188] sm:$0xff]
        %v4458 = vld [vmem:[%s206 + $0x190] sm:$0xff]
        %v4459 = vld [vmem:[%s206 + $0x198] sm:$0x1]
        %v4460 = vld [vmem:[%s206 + $0x1a0] sm:$0xff]
        %v4461 = vld [vmem:[%s206 + $0x1a8] sm:$0xff]
        %v4462 = vld [vmem:[%s206 + $0x1b0] sm:$0x1]
        %4471 = vset.pattern.permute.xlu0 0
        %4472 = vperm.xlu0 %4471, %v4445
        %v4473 = vpop.permute.xlu0 %4472
        %4474 = vset.pattern.permute.xlu0 0
        %4475 = vperm.xlu0 %4474, %v4446
        %v4476 = vpop.permute.xlu0 %4475
        %4477 = vset.pattern.permute.xlu0 0
        %4478 = vperm.xlu0 %4477, %v4447
        %v4479 = vpop.permute.xlu0 %4478
        %4480 = vset.pattern.permute.xlu0 0
        %4481 = vperm.xlu0 %4480, %v4448
        %v4482 = vpop.permute.xlu0 %4481
        %4483 = vset.pattern.permute.xlu0 0
        %4484 = vperm.xlu0 %4483, %v4449
        %v4485 = vpop.permute.xlu0 %4484
        %4486 = vset.pattern.permute.xlu0 0
        %4487 = vperm.xlu0 %4486, %v4450
        %v4488 = vpop.permute.xlu0 %4487
        %4489 = vset.pattern.permute.xlu0 0
        %4490 = vperm.xlu0 %4489, %v4451
        %v4491 = vpop.permute.xlu0 %4490
        %4492 = vset.pattern.permute.xlu0 0
        %4493 = vperm.xlu0 %4492, %v4452
        %v4494 = vpop.permute.xlu0 %4493
        %v4495 = vperm.slane %v4473, %v4044
        %v4496 = vperm.slane %v4476, %v4046
        %v4497 = vsel %vm4048, %v4496, %v4495
        %v4498 = vperm.slane %v4479, %v4050
        %v4499 = vsel %vm4052, %v4498, %v4497
        %v4500 = vperm.slane %v4482, %v4054
        %v4501 = vsel %vm4056, %v4500, %v4499
        %v4502 = vperm.slane %v4485, %v4044
        %v4503 = vperm.slane %v4488, %v4046
        %v4504 = vsel %vm4048, %v4503, %v4502
        %v4505 = vperm.slane %v4491, %v4050
        %v4506 = vsel %vm4052, %v4505, %v4504
        %v4507 = vperm.slane %v4494, %v4054
        %v4508 = vsel %vm4056, %v4507, %v4506
        %v4509 = vsel %vm4065, %v4508, %v4501
        %v4511 = vsel %vm4068, %v4509, 0.0
        %4512 = vadd.xlane.f32.xlu0 %v4511
        %v4513 = vpop.xlane.xlu0 %4512
        %v4514 = vmul.f32 %v4513, %v4078
        %v4516 = vperm.slane %v4514, 0
        %v4517 = vperm.slane %v4514, 1
        %v4520 = vsub.f32 %v4445, %v4516
        %v4521 = vsub.f32 %v4446, %v4516
        %v4522 = vsub.f32 %v4447, %v4516
        %v4523 = vsub.f32 %v4448, %v4516
        %v4524 = vsub.f32 %v4449, %v4517
        %v4525 = vsub.f32 %v4450, %v4517
        %v4526 = vsub.f32 %v4451, %v4517
        %v4527 = vsub.f32 %v4452, %v4517
        %v4528 = vmul.f32 %v4520, %v4520
        %v4529 = vmul.f32 %v4521, %v4521
        %v4530 = vmul.f32 %v4522, %v4522
        %v4531 = vmul.f32 %v4523, %v4523
        %v4532 = vmul.f32 %v4524, %v4524
        %v4533 = vmul.f32 %v4525, %v4525
        %v4534 = vmul.f32 %v4526, %v4526
        %v4535 = vmul.f32 %v4527, %v4527
        %4544 = vset.pattern.permute.xlu0 0
        %4545 = vperm.xlu0 %4544, %v4528
        %v4546 = vpop.permute.xlu0 %4545
        %4547 = vset.pattern.permute.xlu0 0
        %4548 = vperm.xlu0 %4547, %v4529
        %v4549 = vpop.permute.xlu0 %4548
        %4550 = vset.pattern.permute.xlu0 0
        %4551 = vperm.xlu0 %4550, %v4530
        %v4552 = vpop.permute.xlu0 %4551
        %4553 = vset.pattern.permute.xlu0 0
        %4554 = vperm.xlu0 %4553, %v4531
        %v4555 = vpop.permute.xlu0 %4554
        %4556 = vset.pattern.permute.xlu0 0
        %4557 = vperm.xlu0 %4556, %v4532
        %v4558 = vpop.permute.xlu0 %4557
        %4559 = vset.pattern.permute.xlu0 0
        %4560 = vperm.xlu0 %4559, %v4533
        %v4561 = vpop.permute.xlu0 %4560
        %4562 = vset.pattern.permute.xlu0 0
        %4563 = vperm.xlu0 %4562, %v4534
        %v4564 = vpop.permute.xlu0 %4563
        %4565 = vset.pattern.permute.xlu0 0
        %4566 = vperm.xlu0 %4565, %v4535
        %v4567 = vpop.permute.xlu0 %4566
        %v4568 = vperm.slane %v4546, %v4044
        %v4569 = vperm.slane %v4549, %v4046
        %v4570 = vsel %vm4048, %v4569, %v4568
        %v4571 = vperm.slane %v4552, %v4050
        %v4572 = vsel %vm4052, %v4571, %v4570
        %v4573 = vperm.slane %v4555, %v4054
        %v4574 = vsel %vm4056, %v4573, %v4572
        %v4575 = vperm.slane %v4558, %v4044
        %v4576 = vperm.slane %v4561, %v4046
        %v4577 = vsel %vm4048, %v4576, %v4575
        %v4578 = vperm.slane %v4564, %v4050
        %v4579 = vsel %vm4052, %v4578, %v4577
        %v4580 = vperm.slane %v4567, %v4054
        %v4581 = vsel %vm4056, %v4580, %v4579
        %v4582 = vsel %vm4065, %v4581, %v4574
        %v4584 = vsel %vm4068, %v4582, 0.0
        %4585 = vadd.xlane.f32.xlu0 %v4584
        %v4586 = vpop.xlane.xlu0 %4585
        %v4587 = vmul.f32 %v4586, %v4078
        %v4588 = vadd.f32 %v4587, 1e-05
        %v4589 = vrsqrt.pop %v4588
        %v4590 = vmul.f32 %v4589, %v4588
        %v4591 = vmul.f32 %v4590, %v4589
        %v4592 = vmul.f32 0.5, %v4591
        %v4593 = vsub.f32 1.5, %v4592
        %v4594 = vmul.f32 %v4589, %v4593
        %vm4595 = vweird.f32 %v4588
        %vm4596 = vweird.f32 %v4589
        %vm4597 = vmor %vm4595, %vm4596
        %v4598 = vsel %vm4597, %v4589, %v4594
        %v4600 = vperm.slane %v4598, 0
        %v4601 = vperm.slane %v4598, 1
        %v4604 = vmul.f32 %v4520, %v4600
        %v4605 = vmul.f32 %v4521, %v4600
        %v4606 = vmul.f32 %v4522, %v4600
        %v4607 = vmul.f32 %v4523, %v4600
        %v4608 = vmul.f32 %v4524, %v4601
        %v4609 = vmul.f32 %v4525, %v4601
        %v4610 = vmul.f32 %v4526, %v4601
        %v4611 = vmul.f32 %v4527, %v4601
        %v4612 = vperm.slane %v4453, 0
        %v4614 = vlaneseq
        %v4615 = vshrl.u32 %v4614, 7
        %4617 = vset.pattern.permute.xlu0 %v4615
        %4618 = vperm.xlu0 %4617, %v4612
        %v4619 = vpop.permute.xlu0 %4618
        %v4620 = vlaneseq
        %v4621 = vshrl.u32 %v4620, 7
        %v4622 = vadd.s32 %v4621, 8
        %4623 = vset.pattern.permute.xlu0 %v4622
        %4624 = vperm.xlu0 %4623, %v4612
        %v4625 = vpop.permute.xlu0 %4624
        %v4626 = vlaneseq
        %v4627 = vshrl.u32 %v4626, 7
        %v4628 = vadd.s32 %v4627, 16
        %4629 = vset.pattern.permute.xlu0 %v4628
        %4630 = vperm.xlu0 %4629, %v4612
        %v4631 = vpop.permute.xlu0 %4630
        %v4632 = vlaneseq
        %v4633 = vshrl.u32 %v4632, 7
        %v4634 = vadd.s32 %v4633, 24
        %4635 = vset.pattern.permute.xlu0 %v4634
        %4636 = vperm.xlu0 %4635, %v4612
        %v4637 = vpop.permute.xlu0 %4636
        %v4642 = vmul.f32 %v4604, %v4619
        %v4643 = vmul.f32 %v4605, %v4625
        %v4644 = vmul.f32 %v4606, %v4631
        %v4645 = vmul.f32 %v4607, %v4637
        %v4646 = vmul.f32 %v4608, %v4619
        %v4647 = vmul.f32 %v4609, %v4625
        %v4648 = vmul.f32 %v4610, %v4631
        %v4649 = vmul.f32 %v4611, %v4637
        %v4650 = vperm.slane %v4454, 0
        %v4652 = vlaneseq
        %v4653 = vshrl.u32 %v4652, 7
        %4655 = vset.pattern.permute.xlu0 %v4653
        %4656 = vperm.xlu0 %4655, %v4650
        %v4657 = vpop.permute.xlu0 %4656
        %v4658 = vlaneseq
        %v4659 = vshrl.u32 %v4658, 7
        %v4660 = vadd.s32 %v4659, 8
        %4661 = vset.pattern.permute.xlu0 %v4660
        %4662 = vperm.xlu0 %4661, %v4650
        %v4663 = vpop.permute.xlu0 %4662
        %v4664 = vlaneseq
        %v4665 = vshrl.u32 %v4664, 7
        %v4666 = vadd.s32 %v4665, 16
        %4667 = vset.pattern.permute.xlu0 %v4666
        %4668 = vperm.xlu0 %4667, %v4650
        %v4669 = vpop.permute.xlu0 %4668
        %v4670 = vlaneseq
        %v4671 = vshrl.u32 %v4670, 7
        %v4672 = vadd.s32 %v4671, 24
        %4673 = vset.pattern.permute.xlu0 %v4672
        %4674 = vperm.xlu0 %4673, %v4650
        %v4675 = vpop.permute.xlu0 %4674
        %v4680 = vadd.f32 %v4642, %v4657
        %v4681 = vadd.f32 %v4643, %v4663
        %v4682 = vadd.f32 %v4644, %v4669
        %v4683 = vadd.f32 %v4645, %v4675
        %v4684 = vadd.f32 %v4646, %v4657
        %v4685 = vadd.f32 %v4647, %v4663
        %v4686 = vadd.f32 %v4648, %v4669
        %v4687 = vadd.f32 %v4649, %v4675
        %v4688 = vperm.slane %v4459, 0
        %4697 = vset.pattern.permute.xlu0 0
        %4698 = vperm.xlu0 %4697, %v4680
        %v4699 = vpop.permute.xlu0 %4698
        %4700 = vset.pattern.permute.xlu0 0
        %4701 = vperm.xlu0 %4700, %v4681
        %v4702 = vpop.permute.xlu0 %4701
        %4703 = vset.pattern.permute.xlu0 0
        %4704 = vperm.xlu0 %4703, %v4682
        %v4705 = vpop.permute.xlu0 %4704
        %4706 = vset.pattern.permute.xlu0 0
        %4707 = vperm.xlu0 %4706, %v4683
        %v4708 = vpop.permute.xlu0 %4707
        %4709 = vset.pattern.permute.xlu0 0
        %4710 = vperm.xlu0 %4709, %v4684
        %v4711 = vpop.permute.xlu0 %4710
        %4712 = vset.pattern.permute.xlu0 0
        %4713 = vperm.xlu0 %4712, %v4685
        %v4714 = vpop.permute.xlu0 %4713
        %4715 = vset.pattern.permute.xlu0 0
        %4716 = vperm.xlu0 %4715, %v4686
        %v4717 = vpop.permute.xlu0 %4716
        %4718 = vset.pattern.permute.xlu0 0
        %4719 = vperm.xlu0 %4718, %v4687
        %v4720 = vpop.permute.xlu0 %4719
        %v4721 = vperm.slane %v4699, %v4044
        %v4722 = vperm.slane %v4702, %v4046
        %v4723 = vsel %vm4048, %v4722, %v4721
        %v4724 = vperm.slane %v4705, %v4050
        %v4725 = vsel %vm4052, %v4724, %v4723
        %v4726 = vperm.slane %v4708, %v4054
        %v4727 = vsel %vm4056, %v4726, %v4725
        %v4728 = vperm.slane %v4711, %v4044
        %v4729 = vperm.slane %v4714, %v4046
        %v4730 = vsel %vm4048, %v4729, %v4728
        %v4731 = vperm.slane %v4717, %v4050
        %v4732 = vsel %vm4052, %v4731, %v4730
        %v4733 = vperm.slane %v4720, %v4054
        %v4734 = vsel %vm4056, %v4733, %v4732
        %v4735 = vsel %vm4065, %v4734, %v4727
        %v4736 = vsel %vm4301, %v4735, 0
        %4738 = vmatpush.msra.mxu0 0.0
        %4739 = vmatpush.msra.mxu0 0.0
        %4740 = vmatpush.msra.mxu0 0.0
        %4741 = vmatpush.msra.mxu0 0.0
        %4742 = vmatpush.msra.mxu0 0.0
        %4743 = vmatpush.msra.mxu0 0.0
        %4744 = vmatpush.msra.mxu0 0.0
        %4745 = vmatpush.msra.mxu0 0.0
        %4746 = vmatpush.msra.mxu0 0.0
        %4747 = vmatpush.msra.mxu0 0.0
        %4748 = vmatpush.msra.mxu0 0.0
        %4749 = vmatpush.msra.mxu0 0.0
        %4750 = vmatpush.msra.mxu0 %v4458
        %4751 = vmatpush.msra.mxu0 %v4457
        %4752 = vmatpush.msra.mxu0 %v4456
        %4753 = vmatpush.msra.mxu0 %v4455
        %4754 = vmatmul.f32.gmra.mxu0 %v4736
        %v4755 = vpop.f32.mrf.mxu0
        %v4756 = vadd.f32 %v4688, %v4755
        %4757 = vdwg.mxu0
        %v4758 = vmax.f32 %v4756, 0.0
        %v4760 = vsel %vm3554, %v4758, 0
        %4762 = vmatpush.msra.mxu0 0.0
        %4763 = vmatpush.msra.mxu0 0.0
        %4764 = vmatpush.msra.mxu0 0.0
        %4765 = vmatpush.msra.mxu0 0.0
        %4766 = vmatpush.msra.mxu0 0.0
        %4767 = vmatpush.msra.mxu0 0.0
        %4768 = vmatpush.msra.mxu0 0.0
        %4769 = vmatpush.msra.mxu0 0.0
        %4770 = vmatpush.msra.mxu0 0.0
        %4771 = vmatpush.msra.mxu0 0.0
        %4772 = vmatpush.msra.mxu0 0.0
        %4773 = vmatpush.msra.mxu0 0.0
        %4774 = vmatpush.msra.mxu0 0.0
        %4775 = vmatpush.msra.mxu0 0.0
        %4776 = vmatpush.msra.mxu0 %v4461
        %4777 = vmatpush.msra.mxu0 %v4460
        %4778 = vmatmul.f32.gmra.mxu0 %v4760
        %v4779 = vpop.f32.mrf.mxu0
        %v4780 = vadd.f32 0.0, %v4779
        %4781 = vdwg.mxu0
        %v4783 = vperm.slane %v4780, 0
        %v4784 = vlaneseq
        %v4785 = vshrl.u32 %v4784, 7
        %4787 = vset.pattern.permute.xlu0 %v4785
        %4788 = vperm.xlu0 %4787, %v4783
        %v4789 = vpop.permute.xlu0 %4788
        %v4790 = vlaneseq
        %v4791 = vshrl.u32 %v4790, 7
        %v4792 = vadd.s32 %v4791, 8
        %4793 = vset.pattern.permute.xlu0 %v4792
        %4794 = vperm.xlu0 %4793, %v4783
        %v4795 = vpop.permute.xlu0 %4794
        %v4796 = vlaneseq
        %v4797 = vshrl.u32 %v4796, 7
        %v4798 = vadd.s32 %v4797, 16
        %4799 = vset.pattern.permute.xlu0 %v4798
        %4800 = vperm.xlu0 %4799, %v4783
        %v4801 = vpop.permute.xlu0 %4800
        %v4802 = vlaneseq
        %v4803 = vshrl.u32 %v4802, 7
        %v4804 = vadd.s32 %v4803, 24
        %4805 = vset.pattern.permute.xlu0 %v4804
        %4806 = vperm.xlu0 %4805, %v4783
        %v4807 = vpop.permute.xlu0 %4806
        %v4808 = vperm.slane %v4780, 1
        %v4809 = vlaneseq
        %v4810 = vshrl.u32 %v4809, 7
        %4812 = vset.pattern.permute.xlu0 %v4810
        %4813 = vperm.xlu0 %4812, %v4808
        %v4814 = vpop.permute.xlu0 %4813
        %v4815 = vlaneseq
        %v4816 = vshrl.u32 %v4815, 7
        %v4817 = vadd.s32 %v4816, 8
        %4818 = vset.pattern.permute.xlu0 %v4817
        %4819 = vperm.xlu0 %4818, %v4808
        %v4820 = vpop.permute.xlu0 %4819
        %v4821 = vlaneseq
        %v4822 = vshrl.u32 %v4821, 7
        %v4823 = vadd.s32 %v4822, 16
        %4824 = vset.pattern.permute.xlu0 %v4823
        %4825 = vperm.xlu0 %4824, %v4808
        %v4826 = vpop.permute.xlu0 %4825
        %v4827 = vlaneseq
        %v4828 = vshrl.u32 %v4827, 7
        %v4829 = vadd.s32 %v4828, 24
        %4830 = vset.pattern.permute.xlu0 %v4829
        %4831 = vperm.xlu0 %4830, %v4808
        %v4832 = vpop.permute.xlu0 %4831
        %v4841 = vadd.f32 %v4445, %v4789
        %v4842 = vadd.f32 %v4446, %v4795
        %v4843 = vadd.f32 %v4447, %v4801
        %v4844 = vadd.f32 %v4448, %v4807
        %v4845 = vadd.f32 %v4449, %v4814
        %v4846 = vadd.f32 %v4450, %v4820
        %v4847 = vadd.f32 %v4451, %v4826
        %v4848 = vadd.f32 %v4452, %v4832
        %v4849 = vperm.slane %v4462, 0
        %v4851 = vlaneseq
        %v4852 = vshrl.u32 %v4851, 7
        %4854 = vset.pattern.permute.xlu0 %v4852
        %4855 = vperm.xlu0 %4854, %v4849
        %v4856 = vpop.permute.xlu0 %4855
        %v4857 = vlaneseq
        %v4858 = vshrl.u32 %v4857, 7
        %v4859 = vadd.s32 %v4858, 8
        %4860 = vset.pattern.permute.xlu0 %v4859
        %4861 = vperm.xlu0 %4860, %v4849
        %v4862 = vpop.permute.xlu0 %4861
        %v4863 = vlaneseq
        %v4864 = vshrl.u32 %v4863, 7
        %v4865 = vadd.s32 %v4864, 16
        %4866 = vset.pattern.permute.xlu0 %v4865
        %4867 = vperm.xlu0 %4866, %v4849
        %v4868 = vpop.permute.xlu0 %4867
        %v4869 = vlaneseq
        %v4870 = vshrl.u32 %v4869, 7
        %v4871 = vadd.s32 %v4870, 24
        %4872 = vset.pattern.permute.xlu0 %v4871
        %4873 = vperm.xlu0 %4872, %v4849
        %v4874 = vpop.permute.xlu0 %4873
        %v4879 = vadd.f32 %v4841, %v4856
        %v4880 = vadd.f32 %v4842, %v4862
        %v4881 = vadd.f32 %v4843, %v4868
        %v4882 = vadd.f32 %v4844, %v4874
        %v4883 = vadd.f32 %v4845, %v4856
        %v4884 = vadd.f32 %v4846, %v4862
        %v4885 = vadd.f32 %v4847, %v4868
        %v4886 = vadd.f32 %v4848, %v4874
        %v4887 = vld [vmem:[%s206 + $0x1b8] sm:$0x1]
        %v4888 = vperm.slane %v4887, 0
        %v4890 = vlaneseq
        %v4891 = vshrl.u32 %v4890, 7
        %4893 = vset.pattern.permute.xlu0 %v4891
        %4894 = vperm.xlu0 %4893, %v4888
        %v4895 = vpop.permute.xlu0 %4894
        %v4896 = vlaneseq
        %v4897 = vshrl.u32 %v4896, 7
        %v4898 = vadd.s32 %v4897, 8
        %4899 = vset.pattern.permute.xlu0 %v4898
        %4900 = vperm.xlu0 %4899, %v4888
        %v4901 = vpop.permute.xlu0 %4900
        %v4902 = vlaneseq
        %v4903 = vshrl.u32 %v4902, 7
        %v4904 = vadd.s32 %v4903, 16
        %4905 = vset.pattern.permute.xlu0 %v4904
        %4906 = vperm.xlu0 %4905, %v4888
        %v4907 = vpop.permute.xlu0 %4906
        %v4908 = vlaneseq
        %v4909 = vshrl.u32 %v4908, 7
        %v4910 = vadd.s32 %v4909, 24
        %4911 = vset.pattern.permute.xlu0 %v4910
        %4912 = vperm.xlu0 %4911, %v4888
        %v4913 = vpop.permute.xlu0 %4912
        %v4918 = vmul.f32 %v4879, %v4895
        %v4919 = vmul.f32 %v4880, %v4901
        %v4920 = vmul.f32 %v4881, %v4907
        %v4921 = vmul.f32 %v4882, %v4913
        %v4922 = vmul.f32 %v4883, %v4895
        %v4923 = vmul.f32 %v4884, %v4901
        %v4924 = vmul.f32 %v4885, %v4907
        %v4925 = vmul.f32 %v4886, %v4913
        %4934 = vset.pattern.permute.xlu0 0
        %4935 = vperm.xlu0 %4934, %v4918
        %v4936 = vpop.permute.xlu0 %4935
        %4937 = vset.pattern.permute.xlu0 0
        %4938 = vperm.xlu0 %4937, %v4919
        %v4939 = vpop.permute.xlu0 %4938
        %4940 = vset.pattern.permute.xlu0 0
        %4941 = vperm.xlu0 %4940, %v4920
        %v4942 = vpop.permute.xlu0 %4941
        %4943 = vset.pattern.permute.xlu0 0
        %4944 = vperm.xlu0 %4943, %v4921
        %v4945 = vpop.permute.xlu0 %4944
        %4946 = vset.pattern.permute.xlu0 0
        %4947 = vperm.xlu0 %4946, %v4922
        %v4948 = vpop.permute.xlu0 %4947
        %4949 = vset.pattern.permute.xlu0 0
        %4950 = vperm.xlu0 %4949, %v4923
        %v4951 = vpop.permute.xlu0 %4950
        %4952 = vset.pattern.permute.xlu0 0
        %4953 = vperm.xlu0 %4952, %v4924
        %v4954 = vpop.permute.xlu0 %4953
        %4955 = vset.pattern.permute.xlu0 0
        %4956 = vperm.xlu0 %4955, %v4925
        %v4957 = vpop.permute.xlu0 %4956
        %v4958 = vperm.slane %v4936, %v4044
        %v4959 = vperm.slane %v4939, %v4046
        %v4960 = vsel %vm4048, %v4959, %v4958
        %v4961 = vperm.slane %v4942, %v4050
        %v4962 = vsel %vm4052, %v4961, %v4960
        %v4963 = vperm.slane %v4945, %v4054
        %v4964 = vsel %vm4056, %v4963, %v4962
        %v4965 = vperm.slane %v4948, %v4044
        %v4966 = vperm.slane %v4951, %v4046
        %v4967 = vsel %vm4048, %v4966, %v4965
        %v4968 = vperm.slane %v4954, %v4050
        %v4969 = vsel %vm4052, %v4968, %v4967
        %v4970 = vperm.slane %v4957, %v4054
        %v4971 = vsel %vm4056, %v4970, %v4969
        %v4972 = vsel %vm4065, %v4971, %v4964
        %v4974 = vsel %vm4068, %v4972, 0.0
        %4975 = vadd.xlane.f32.xlu0 %v4974
        %v4976 = vpop.xlane.xlu0 %4975
        %v4977 = vld [vmem:[%s206 + $0x1c0] sm:$0x1]
        %v4978 = vperm.slane %v4977, 0
        %v4979 = vadd.f32 %v4976, %v4978
        %vm4980 = vcmask 1024
        %4981 = vst.msk [vmem:[%s234] sm:$0x3] %vm4980, %v4979
        %p4982 = scmp.lt.s32.totalorder %s19, 1
        %s4983 = scalar_select %p4982, %s19, 1
        %s4984 = smul.addr %s4983, 2
        %s4985 = scalar_lea.vmem %s4, %s4984
        // Predicated region
        $region45: #{fwd.1} parent=35 // pred_check
          %p4986 = pneg %p126
        $region46: #{fwd.1} parent=35 // pred_check_branch
          %4988 = sbr.rel (%p4986) target = $region48
        $region47: #{fwd.1} parent=35 // pred_region
          _
        $region48: #{fwd.1} parent=35 // pred_fallthru
          _
      $region36: #{fwd.1} parent=5 // pred_fallthru
        _
      %p4989 = scmp.le.s32.totalorder 2, %s14
      // Predicated region
      $region49: #{fwd.1} parent=5 // pred_check
        %p4990 = pneg %p4989
      $region50: #{fwd.1} parent=5 // pred_check_branch
        %4992 = sbr.rel (%p4990) target = $region52
      $region51: #{fwd.1} parent=5 // pred_region
        %s4993 = ssub.s32 %s14, 2
        // Predicated region
        $region53: #{fwd.1} parent=51 // pred_check
          %p4994 = pneg %p132
        $region54: #{fwd.1} parent=51 // pred_check_branch
          %4996 = sbr.rel (%p4994) target = $region56
        $region55: #{fwd.1} parent=51 // pred_region
          %p4997 = scmp.lt.s32.totalorder %s20, 1
          %s4998 = scalar_select %p4997, %s20, 1
          %s4999 = smul.addr %s4998, 2
          %s5000 = scalar_lea.vmem %s4, %s4999
        $region56: #{fwd.1} parent=51 // pred_fallthru
          _
      $region52: #{fwd.1} parent=5 // pred_fallthru
        _
    $region6: #{fwd.1} parent=1 // loop_footer
      %s18 = sadd.s32 1, %s14
    $region7: #{fwd.1} parent=1 // loop_footer_branch
      %13 = sbr.rel target = $region3
    $region8: #{fwd.1} parent=1 // loop_exit
      _
    %5001 = vsyncpa [#allocation3], 1
    %s5002 = scalar_lea.sflag [#allocation3], 1
    %5003 = vsyncpa %s5002, 1
    %5004 = vsyncpa [#allocation5], 1
    %s5005 = scalar_lea.sflag [#allocation5], 1
    %5006 = vsyncpa %s5005, 1

</llo_original>
